<compile_context>
chip_gen: v5e
topology: v5e:2x2
jax: 0.10.0
libtpu: 0.0.40
codegen_flags: <defaults>
</compile_context>

<pallas_src>
import jax
import jax.numpy as jnp
from jax.experimental import pallas as pl
from jax.experimental.pallas import tpu as pltpu

NODE_IN, EDGE_IN = 2, 1
HID = 10            # node_out / edge_out of gconv1
NODE_OUT = 2        # node_out of n2n3 / e2n3
_LANE = 128


def actor_kernel(a_ref, b_ref, v_ref, e_ref, w1_ref, w3_ref, out_ref):
    """One block of BB graphs; batch lives on the 128-lane axis.

    a_ref : (N, N, BB)   a_ref[n, k, b] = A[b, n, k]
    b_ref : (N, M, BB)   b_ref[n, m, b] = Binc[b, n, m]
    v_ref : (2, N, BB)   v_ref[f, n, b] = V[b, n, f]
    e_ref : (M, BB)      e_ref[m, b]    = E[b, m, 0]
    w1_ref: SMEM (10, HID)          rows = [w_n2n1(2); b_n2n1; w_e2n1; b_e2n1;
                                            w_n2e1(2); b_n2e1; w_e2e1; b_e2e1]
    w3_ref: SMEM (2*HID+2, NODE_OUT) rows = [w_n2n3(10); b_n2n3; w_e2n3(10); b_e2n3]
    out_ref: (NODE_OUT, N, BB)   out_ref[c, n, b] = out[b, n, c]
    """
    N = a_ref.shape[0]
    M = b_ref.shape[1]

    vx = v_ref[0]                              # (N, BB)
    vy = v_ref[1]                              # (N, BB)
    ev = e_ref[...]                            # (M, BB)
    a_rows = [a_ref[n] for n in range(N)]      # each (N, BB): A[b, n, :]
    b_rows = [b_ref[n] for n in range(N)]      # each (M, BB): Binc[b, n, :]

    # ---- gconv1 node path: V1[h] : (N, BB) = relu(A @ (V W + b) + B @ (E W + b)) ----
    V1 = []
    for h in range(HID):
        gn_node = vx * w1_ref[0, h] + vy * w1_ref[1, h] + w1_ref[2, h]   # (N, BB)
        gn_edge = ev * w1_ref[3, h] + w1_ref[4, h]                       # (M, BB)
        rows = []
        for n in range(N):
            rows.append(jnp.sum(a_rows[n] * gn_node, axis=0, keepdims=True)
                        + jnp.sum(b_rows[n] * gn_edge, axis=0, keepdims=True))
        V1.append(jnp.maximum(jnp.concatenate(rows, axis=0), 0.0))

    # ---- gconv1 edge path: E1[h] : (M, BB) = relu(B^T @ (V W + b) + (E W + b)) ----
    E1 = []
    for h in range(HID):
        ge_node = vx * w1_ref[5, h] + vy * w1_ref[6, h] + w1_ref[7, h]   # (N, BB)
        ge_edge = ev * w1_ref[8, h] + w1_ref[9, h]                       # (M, BB)
        acc = ge_edge
        for n in range(N):
            acc = acc + b_rows[n] * ge_node[n:n + 1, :]
        E1.append(jnp.maximum(acc, 0.0))

    # ---- output head: out = A @ (V1 W3n + b3n) + B @ (E1 W3e + b3e) ----
    for c in range(NODE_OUT):
        fn = V1[0] * w3_ref[0, c]
        fe = E1[0] * w3_ref[HID + 1, c]
        for h in range(1, HID):
            fn = fn + V1[h] * w3_ref[h, c]
            fe = fe + E1[h] * w3_ref[HID + 1 + h, c]
        fn = fn + w3_ref[HID, c]              # + b_n2n3[c]
        fe = fe + w3_ref[2 * HID + 1, c]      # + b_e2n3[c]
        rows = []
        for n in range(N):
            rows.append(jnp.sum(a_rows[n] * fn, axis=0, keepdims=True)
                        + jnp.sum(b_rows[n] * fe, axis=0, keepdims=True))
        out_ref[c] = jnp.concatenate(rows, axis=0)


def actor_forward(A, Binc, V, E, params, *, block_batch=512):
    f32 = jnp.float32
    (w_n2n1, b_n2n1, w_e2n1, b_e2n1,
     w_n2e1, b_n2e1, w_e2e1, b_e2e1,
     w_n2n3, b_n2n3, w_e2n3, b_e2n3) = params

    Bsz, N, _ = A.shape
    M = Binc.shape[2]

    # Pad batch to a multiple of 128 lanes; pick the largest lane-aligned block
    # that divides the padded batch (grid=1 for small batches; multiple
    # "parallel" steps on multi-core chips for large ones).
    Bpad = ((Bsz + _LANE - 1) // _LANE) * _LANE
    bb_cap = max(_LANE, (min(block_batch, Bpad) // _LANE) * _LANE)
    BB = _LANE
    for cand in range(_LANE, bb_cap + 1, _LANE):
        if Bpad % cand == 0:
            BB = cand

    if Bpad != Bsz:
        pad = Bpad - Bsz
        A = jnp.pad(A, ((0, pad), (0, 0), (0, 0)))
        Binc = jnp.pad(Binc, ((0, pad), (0, 0), (0, 0)))
        V = jnp.pad(V, ((0, pad), (0, 0), (0, 0)))
        E = jnp.pad(E, ((0, pad), (0, 0), (0, 0)))

    # Batch-in-lanes layouts (only layout plumbing happens in the wrapper).
    A_r = jnp.transpose(A, (1, 2, 0)).astype(f32)          # (N, N, Bpad)
    B_r = jnp.transpose(Binc, (1, 2, 0)).astype(f32)       # (N, M, Bpad)
    V_r = jnp.transpose(V, (2, 1, 0)).astype(f32)          # (NODE_IN, N, Bpad)
    E_r = jnp.transpose(E[..., 0], (1, 0)).astype(f32)     # (M, Bpad)

    # Tiny weight tables -> SMEM scalars (biases folded in as extra rows).
    W1 = jnp.concatenate([w_n2n1, b_n2n1, w_e2n1, b_e2n1,
                          w_n2e1, b_n2e1, w_e2e1, b_e2e1], axis=0).astype(f32)
    W3 = jnp.concatenate([w_n2n3, b_n2n3, w_e2n3, b_e2n3], axis=0).astype(f32)

    smem = pl.BlockSpec(memory_space=pltpu.MemorySpace.SMEM)
    in_specs = [
        pl.BlockSpec((N, N, BB), lambda b: (0, 0, b)),
        pl.BlockSpec((N, M, BB), lambda b: (0, 0, b)),
        pl.BlockSpec((NODE_IN, N, BB), lambda b: (0, 0, b)),
        pl.BlockSpec((M, BB), lambda b: (0, b)),
        smem, smem,
    ]
    out_spec = pl.BlockSpec((NODE_OUT, N, BB), lambda b: (0, 0, b))

    out = pl.pallas_call(
        actor_kernel,
        out_shape=jax.ShapeDtypeStruct((NODE_OUT, N, Bpad), f32),
        grid_spec=pltpu.PrefetchScalarGridSpec(
            num_scalar_prefetch=0,
            grid=(Bpad // BB,),
            in_specs=in_specs,
            out_specs=out_spec,
        ),
        compiler_params=pltpu.CompilerParams(
            dimension_semantics=("parallel",),
        ),
    )(A_r, B_r, V_r, E_r, W1, W3)

    # (NODE_OUT, N, Bpad) -> (Bsz, N, NODE_OUT)
    return jnp.transpose(out, (2, 1, 0))[:Bsz]


def init_params(key):
    """Deterministic synthetic weights (shapes implied by the module __init__)."""
    ks = jax.random.split(key, 8)
    def lin(k, fan_in, fan_out):
        scale = 1.0 / jnp.sqrt(jnp.float32(fan_in))
        w = jax.random.uniform(k, (fan_in, fan_out), jnp.float32, -scale, scale)
        b = jnp.linspace(-0.1, 0.1, fan_out, dtype=jnp.float32).reshape(1, fan_out)
        return w, b
    w_n2n1, b_n2n1 = lin(ks[0], NODE_IN, HID)    # gconv1 NodeToNode
    w_e2n1, b_e2n1 = lin(ks[1], EDGE_IN, HID)    # gconv1 EdgeToNode
    w_n2e1, b_n2e1 = lin(ks[2], NODE_IN, HID)    # gconv1 NodeToEdge
    w_e2e1, b_e2e1 = lin(ks[3], EDGE_IN, HID)    # gconv1 EdgeToEdge
    w_n2n3, b_n2n3 = lin(ks[4], HID, NODE_OUT)   # n2n3
    w_e2n3, b_e2n3 = lin(ks[5], HID, NODE_OUT)   # e2n3
    return [w_n2n1, b_n2n1, w_e2n1, b_e2n1,
            w_n2e1, b_n2e1, w_e2e1, b_e2e1,
            w_n2n3, b_n2n3, w_e2n3, b_e2n3]


def actor_reference(A, Binc, V, E, params):
    """Pure-JAX reference of the same forward pass (for verification)."""
    (w_n2n1, b_n2n1, w_e2n1, b_e2n1,
     w_n2e1, b_n2e1, w_e2e1, b_e2e1,
     w_n2n3, b_n2n3, w_e2n3, b_e2n3) = params
    n2n = jnp.einsum('bnm,bmh->bnh', A, V @ w_n2n1 + b_n2n1)
    e2n = jnp.einsum('bnm,bmh->bnh', Binc, E @ w_e2n1 + b_e2n1)
    V1 = jax.nn.relu(n2n + e2n)
    n2e = jnp.einsum('bmn,bmh->bnh', Binc, V @ w_n2e1 + b_n2e1)
    e2e = E @ w_e2e1 + b_e2e1
    E1 = jax.nn.relu(n2e + e2e)
    out_n = jnp.einsum('bnm,bmh->bnh', A, V1 @ w_n2n3 + b_n2n3)
    out_e = jnp.einsum('bnm,bmh->bnh', Binc, E1 @ w_e2n3 + b_e2n3)
    return out_n + out_e


if __name__ == "__main__":
    key = jax.random.PRNGKey(0)
    k_a, k_b, k_v, k_e, k_p = jax.random.split(key, 5)

    Bsz, N, M = 96, 8, 16   # batch, nodes, edges (batch lane-padded to 128)
    A = jax.random.uniform(k_a, (Bsz, N, N), jnp.float32)
    Binc = jax.random.uniform(k_b, (Bsz, N, M), jnp.float32)
    V = jax.random.normal(k_v, (Bsz, N, NODE_IN), jnp.float32)
    E = jax.random.normal(k_e, (Bsz, M, EDGE_IN), jnp.float32)
    params = init_params(k_p)

    out = actor_forward(A, Binc, V, E, params)
    out = jax.block_until_ready(out)

    ref = actor_reference(A, Binc, V, E, params)
    assert out.shape == (Bsz, N, NODE_OUT)
    assert jnp.allclose(out, ref, atol=1e-4, rtol=1e-4), "mismatch vs reference"

    print("KERNEL_OK")
</pallas_src>

<mosaic_0001>
module attributes {stable_mosaic.version = 11 : i64} {
  func.func @actor_kernel(%arg0: i32, %arg1: memref<8x8x128xf32, #tpu.memory_space<vmem>>, %arg2: memref<8x16x128xf32, #tpu.memory_space<vmem>>, %arg3: memref<2x8x128xf32, #tpu.memory_space<vmem>>, %arg4: memref<16x128xf32, #tpu.memory_space<vmem>>, %arg5: memref<10x10xf32, #tpu.memory_space<smem>>, %arg6: memref<22x2xf32, #tpu.memory_space<smem>>, %arg7: memref<2x8x128xf32, #tpu.memory_space<vmem>>) attributes {dimension_semantics = [#tpu.dimension_semantics<parallel>], iteration_bounds = array<i64: 1>, scalar_prefetch = 0 : i64, scratch_operands = 0 : i64, tpu.core_type = #tpu.core_type<tc>, window_params = [{transform_indices = @transform_0, window_bounds = array<i64: 8, 8, 128>}, {transform_indices = @transform_1, window_bounds = array<i64: 8, 16, 128>}, {transform_indices = @transform_2, window_bounds = array<i64: 2, 8, 128>}, {transform_indices = @transform_3, window_bounds = array<i64: 16, 128>}, {transform_indices = @transform_4, window_bounds = array<i64: 10, 10>}, {transform_indices = @transform_5, window_bounds = array<i64: 22, 2>}, {transform_indices = @transform_6, window_bounds = array<i64: 2, 8, 128>}]} {
    %c0 = arith.constant 0 : index
    %c0_0 = arith.constant 0 : index
    %c0_1 = arith.constant 0 : index
    %0 = vector.load %arg3[%c0, %c0_0, %c0_1] : memref<2x8x128xf32, #tpu.memory_space<vmem>>, vector<1x8x128xf32>
    %1 = vector.shape_cast %0 : vector<1x8x128xf32> to vector<8x128xf32>
    %c1 = arith.constant 1 : index
    %c0_2 = arith.constant 0 : index
    %c0_3 = arith.constant 0 : index
    %2 = vector.load %arg3[%c1, %c0_2, %c0_3] : memref<2x8x128xf32, #tpu.memory_space<vmem>>, vector<1x8x128xf32>
    %3 = vector.shape_cast %2 : vector<1x8x128xf32> to vector<8x128xf32>
    %c0_4 = arith.constant 0 : index
    %c0_5 = arith.constant 0 : index
    %4 = vector.load %arg4[%c0_4, %c0_5] : memref<16x128xf32, #tpu.memory_space<vmem>>, vector<16x128xf32>
    %c0_6 = arith.constant 0 : index
    %c0_7 = arith.constant 0 : index
    %c0_8 = arith.constant 0 : index
    %5 = vector.load %arg1[%c0_6, %c0_7, %c0_8] : memref<8x8x128xf32, #tpu.memory_space<vmem>>, vector<1x8x128xf32>
    %6 = vector.shape_cast %5 : vector<1x8x128xf32> to vector<8x128xf32>
    %c1_9 = arith.constant 1 : index
    %c0_10 = arith.constant 0 : index
    %c0_11 = arith.constant 0 : index
    %7 = vector.load %arg1[%c1_9, %c0_10, %c0_11] : memref<8x8x128xf32, #tpu.memory_space<vmem>>, vector<1x8x128xf32>
    %8 = vector.shape_cast %7 : vector<1x8x128xf32> to vector<8x128xf32>
    %c2 = arith.constant 2 : index
    %c0_12 = arith.constant 0 : index
    %c0_13 = arith.constant 0 : index
    %9 = vector.load %arg1[%c2, %c0_12, %c0_13] : memref<8x8x128xf32, #tpu.memory_space<vmem>>, vector<1x8x128xf32>
    %10 = vector.shape_cast %9 : vector<1x8x128xf32> to vector<8x128xf32>
    %c3 = arith.constant 3 : index
    %c0_14 = arith.constant 0 : index
    %c0_15 = arith.constant 0 : index
    %11 = vector.load %arg1[%c3, %c0_14, %c0_15] : memref<8x8x128xf32, #tpu.memory_space<vmem>>, vector<1x8x128xf32>
    %12 = vector.shape_cast %11 : vector<1x8x128xf32> to vector<8x128xf32>
    %c4 = arith.constant 4 : index
    %c0_16 = arith.constant 0 : index
    %c0_17 = arith.constant 0 : index
    %13 = vector.load %arg1[%c4, %c0_16, %c0_17] : memref<8x8x128xf32, #tpu.memory_space<vmem>>, vector<1x8x128xf32>
    %14 = vector.shape_cast %13 : vector<1x8x128xf32> to vector<8x128xf32>
    %c5 = arith.constant 5 : index
    %c0_18 = arith.constant 0 : index
    %c0_19 = arith.constant 0 : index
    %15 = vector.load %arg1[%c5, %c0_18, %c0_19] : memref<8x8x128xf32, #tpu.memory_space<vmem>>, vector<1x8x128xf32>
    %16 = vector.shape_cast %15 : vector<1x8x128xf32> to vector<8x128xf32>
    %c6 = arith.constant 6 : index
    %c0_20 = arith.constant 0 : index
    %c0_21 = arith.constant 0 : index
    %17 = vector.load %arg1[%c6, %c0_20, %c0_21] : memref<8x8x128xf32, #tpu.memory_space<vmem>>, vector<1x8x128xf32>
    %18 = vector.shape_cast %17 : vector<1x8x128xf32> to vector<8x128xf32>
    %c7 = arith.constant 7 : index
    %c0_22 = arith.constant 0 : index
    %c0_23 = arith.constant 0 : index
    %19 = vector.load %arg1[%c7, %c0_22, %c0_23] : memref<8x8x128xf32, #tpu.memory_space<vmem>>, vector<1x8x128xf32>
    %20 = vector.shape_cast %19 : vector<1x8x128xf32> to vector<8x128xf32>
    %c0_24 = arith.constant 0 : index
    %c0_25 = arith.constant 0 : index
    %c0_26 = arith.constant 0 : index
    %21 = vector.load %arg2[%c0_24, %c0_25, %c0_26] : memref<8x16x128xf32, #tpu.memory_space<vmem>>, vector<1x16x128xf32>
    %22 = vector.shape_cast %21 : vector<1x16x128xf32> to vector<16x128xf32>
    %c1_27 = arith.constant 1 : index
    %c0_28 = arith.constant 0 : index
    %c0_29 = arith.constant 0 : index
    %23 = vector.load %arg2[%c1_27, %c0_28, %c0_29] : memref<8x16x128xf32, #tpu.memory_space<vmem>>, vector<1x16x128xf32>
    %24 = vector.shape_cast %23 : vector<1x16x128xf32> to vector<16x128xf32>
    %c2_30 = arith.constant 2 : index
    %c0_31 = arith.constant 0 : index
    %c0_32 = arith.constant 0 : index
    %25 = vector.load %arg2[%c2_30, %c0_31, %c0_32] : memref<8x16x128xf32, #tpu.memory_space<vmem>>, vector<1x16x128xf32>
    %26 = vector.shape_cast %25 : vector<1x16x128xf32> to vector<16x128xf32>
    %c3_33 = arith.constant 3 : index
    %c0_34 = arith.constant 0 : index
    %c0_35 = arith.constant 0 : index
    %27 = vector.load %arg2[%c3_33, %c0_34, %c0_35] : memref<8x16x128xf32, #tpu.memory_space<vmem>>, vector<1x16x128xf32>
    %28 = vector.shape_cast %27 : vector<1x16x128xf32> to vector<16x128xf32>
    %c4_36 = arith.constant 4 : index
    %c0_37 = arith.constant 0 : index
    %c0_38 = arith.constant 0 : index
    %29 = vector.load %arg2[%c4_36, %c0_37, %c0_38] : memref<8x16x128xf32, #tpu.memory_space<vmem>>, vector<1x16x128xf32>
    %30 = vector.shape_cast %29 : vector<1x16x128xf32> to vector<16x128xf32>
    %c5_39 = arith.constant 5 : index
    %c0_40 = arith.constant 0 : index
    %c0_41 = arith.constant 0 : index
    %31 = vector.load %arg2[%c5_39, %c0_40, %c0_41] : memref<8x16x128xf32, #tpu.memory_space<vmem>>, vector<1x16x128xf32>
    %32 = vector.shape_cast %31 : vector<1x16x128xf32> to vector<16x128xf32>
    %c6_42 = arith.constant 6 : index
    %c0_43 = arith.constant 0 : index
    %c0_44 = arith.constant 0 : index
    %33 = vector.load %arg2[%c6_42, %c0_43, %c0_44] : memref<8x16x128xf32, #tpu.memory_space<vmem>>, vector<1x16x128xf32>
    %34 = vector.shape_cast %33 : vector<1x16x128xf32> to vector<16x128xf32>
    %c7_45 = arith.constant 7 : index
    %c0_46 = arith.constant 0 : index
    %c0_47 = arith.constant 0 : index
    %35 = vector.load %arg2[%c7_45, %c0_46, %c0_47] : memref<8x16x128xf32, #tpu.memory_space<vmem>>, vector<1x16x128xf32>
    %36 = vector.shape_cast %35 : vector<1x16x128xf32> to vector<16x128xf32>
    %c0_48 = arith.constant 0 : index
    %c0_49 = arith.constant 0 : index
    %37 = memref.load %arg5[%c0_48, %c0_49] : memref<10x10xf32, #tpu.memory_space<smem>>
    %38 = vector.broadcast %37 : f32 to vector<8x128xf32>
    %39 = arith.mulf %1, %38 : vector<8x128xf32>
    %c1_50 = arith.constant 1 : index
    %c0_51 = arith.constant 0 : index
    %40 = memref.load %arg5[%c1_50, %c0_51] : memref<10x10xf32, #tpu.memory_space<smem>>
    %41 = vector.broadcast %40 : f32 to vector<8x128xf32>
    %42 = arith.mulf %3, %41 : vector<8x128xf32>
    %43 = arith.addf %39, %42 : vector<8x128xf32>
    %c2_52 = arith.constant 2 : index
    %c0_53 = arith.constant 0 : index
    %44 = memref.load %arg5[%c2_52, %c0_53] : memref<10x10xf32, #tpu.memory_space<smem>>
    %45 = vector.broadcast %44 : f32 to vector<8x128xf32>
    %46 = arith.addf %43, %45 : vector<8x128xf32>
    %c3_54 = arith.constant 3 : index
    %c0_55 = arith.constant 0 : index
    %47 = memref.load %arg5[%c3_54, %c0_55] : memref<10x10xf32, #tpu.memory_space<smem>>
    %48 = vector.broadcast %47 : f32 to vector<16x128xf32>
    %49 = arith.mulf %4, %48 : vector<16x128xf32>
    %c4_56 = arith.constant 4 : index
    %c0_57 = arith.constant 0 : index
    %50 = memref.load %arg5[%c4_56, %c0_57] : memref<10x10xf32, #tpu.memory_space<smem>>
    %51 = vector.broadcast %50 : f32 to vector<16x128xf32>
    %52 = arith.addf %49, %51 : vector<16x128xf32>
    %53 = arith.mulf %6, %46 : vector<8x128xf32>
    %cst = arith.constant dense<0.000000e+00> : vector<128xf32>
    %54 = vector.multi_reduction <add>, %53, %cst [0] : vector<8x128xf32> to vector<128xf32>
    %55 = vector.shape_cast %54 : vector<128xf32> to vector<1x128xf32>
    %56 = arith.mulf %22, %52 : vector<16x128xf32>
    %cst_58 = arith.constant dense<0.000000e+00> : vector<128xf32>
    %57 = vector.multi_reduction <add>, %56, %cst_58 [0] : vector<16x128xf32> to vector<128xf32>
    %58 = vector.shape_cast %57 : vector<128xf32> to vector<1x128xf32>
    %59 = arith.addf %55, %58 : vector<1x128xf32>
    %60 = arith.mulf %8, %46 : vector<8x128xf32>
    %cst_59 = arith.constant dense<0.000000e+00> : vector<128xf32>
    %61 = vector.multi_reduction <add>, %60, %cst_59 [0] : vector<8x128xf32> to vector<128xf32>
    %62 = vector.shape_cast %61 : vector<128xf32> to vector<1x128xf32>
    %63 = arith.mulf %24, %52 : vector<16x128xf32>
    %cst_60 = arith.constant dense<0.000000e+00> : vector<128xf32>
    %64 = vector.multi_reduction <add>, %63, %cst_60 [0] : vector<16x128xf32> to vector<128xf32>
    %65 = vector.shape_cast %64 : vector<128xf32> to vector<1x128xf32>
    %66 = arith.addf %62, %65 : vector<1x128xf32>
    %67 = arith.mulf %10, %46 : vector<8x128xf32>
    %cst_61 = arith.constant dense<0.000000e+00> : vector<128xf32>
    %68 = vector.multi_reduction <add>, %67, %cst_61 [0] : vector<8x128xf32> to vector<128xf32>
    %69 = vector.shape_cast %68 : vector<128xf32> to vector<1x128xf32>
    %70 = arith.mulf %26, %52 : vector<16x128xf32>
    %cst_62 = arith.constant dense<0.000000e+00> : vector<128xf32>
    %71 = vector.multi_reduction <add>, %70, %cst_62 [0] : vector<16x128xf32> to vector<128xf32>
    %72 = vector.shape_cast %71 : vector<128xf32> to vector<1x128xf32>
    %73 = arith.addf %69, %72 : vector<1x128xf32>
    %74 = arith.mulf %12, %46 : vector<8x128xf32>
    %cst_63 = arith.constant dense<0.000000e+00> : vector<128xf32>
    %75 = vector.multi_reduction <add>, %74, %cst_63 [0] : vector<8x128xf32> to vector<128xf32>
    %76 = vector.shape_cast %75 : vector<128xf32> to vector<1x128xf32>
    %77 = arith.mulf %28, %52 : vector<16x128xf32>
    %cst_64 = arith.constant dense<0.000000e+00> : vector<128xf32>
    %78 = vector.multi_reduction <add>, %77, %cst_64 [0] : vector<16x128xf32> to vector<128xf32>
    %79 = vector.shape_cast %78 : vector<128xf32> to vector<1x128xf32>
    %80 = arith.addf %76, %79 : vector<1x128xf32>
    %81 = arith.mulf %14, %46 : vector<8x128xf32>
    %cst_65 = arith.constant dense<0.000000e+00> : vector<128xf32>
    %82 = vector.multi_reduction <add>, %81, %cst_65 [0] : vector<8x128xf32> to vector<128xf32>
    %83 = vector.shape_cast %82 : vector<128xf32> to vector<1x128xf32>
    %84 = arith.mulf %30, %52 : vector<16x128xf32>
    %cst_66 = arith.constant dense<0.000000e+00> : vector<128xf32>
    %85 = vector.multi_reduction <add>, %84, %cst_66 [0] : vector<16x128xf32> to vector<128xf32>
    %86 = vector.shape_cast %85 : vector<128xf32> to vector<1x128xf32>
    %87 = arith.addf %83, %86 : vector<1x128xf32>
    %88 = arith.mulf %16, %46 : vector<8x128xf32>
    %cst_67 = arith.constant dense<0.000000e+00> : vector<128xf32>
    %89 = vector.multi_reduction <add>, %88, %cst_67 [0] : vector<8x128xf32> to vector<128xf32>
    %90 = vector.shape_cast %89 : vector<128xf32> to vector<1x128xf32>
    %91 = arith.mulf %32, %52 : vector<16x128xf32>
    %cst_68 = arith.constant dense<0.000000e+00> : vector<128xf32>
    %92 = vector.multi_reduction <add>, %91, %cst_68 [0] : vector<16x128xf32> to vector<128xf32>
    %93 = vector.shape_cast %92 : vector<128xf32> to vector<1x128xf32>
    %94 = arith.addf %90, %93 : vector<1x128xf32>
    %95 = arith.mulf %18, %46 : vector<8x128xf32>
    %cst_69 = arith.constant dense<0.000000e+00> : vector<128xf32>
    %96 = vector.multi_reduction <add>, %95, %cst_69 [0] : vector<8x128xf32> to vector<128xf32>
    %97 = vector.shape_cast %96 : vector<128xf32> to vector<1x128xf32>
    %98 = arith.mulf %34, %52 : vector<16x128xf32>
    %cst_70 = arith.constant dense<0.000000e+00> : vector<128xf32>
    %99 = vector.multi_reduction <add>, %98, %cst_70 [0] : vector<16x128xf32> to vector<128xf32>
    %100 = vector.shape_cast %99 : vector<128xf32> to vector<1x128xf32>
    %101 = arith.addf %97, %100 : vector<1x128xf32>
    %102 = arith.mulf %20, %46 : vector<8x128xf32>
    %cst_71 = arith.constant dense<0.000000e+00> : vector<128xf32>
    %103 = vector.multi_reduction <add>, %102, %cst_71 [0] : vector<8x128xf32> to vector<128xf32>
    %104 = vector.shape_cast %103 : vector<128xf32> to vector<1x128xf32>
    %105 = arith.mulf %36, %52 : vector<16x128xf32>
    %cst_72 = arith.constant dense<0.000000e+00> : vector<128xf32>
    %106 = vector.multi_reduction <add>, %105, %cst_72 [0] : vector<16x128xf32> to vector<128xf32>
    %107 = vector.shape_cast %106 : vector<128xf32> to vector<1x128xf32>
    %108 = arith.addf %104, %107 : vector<1x128xf32>
    %109 = tpu.concatenate %59, %66, %73, %80, %87, %94, %101, %108 in 0 : vector<1x128xf32>, vector<1x128xf32>, vector<1x128xf32>, vector<1x128xf32>, vector<1x128xf32>, vector<1x128xf32>, vector<1x128xf32>, vector<1x128xf32> -> vector<8x128xf32>
    %cst_73 = arith.constant 0.000000e+00 : f32
    %110 = vector.broadcast %cst_73 : f32 to vector<8x128xf32>
    %111 = arith.maximumf %109, %110 : vector<8x128xf32>
    %c0_74 = arith.constant 0 : index
    %c1_75 = arith.constant 1 : index
    %112 = memref.load %arg5[%c0_74, %c1_75] : memref<10x10xf32, #tpu.memory_space<smem>>
    %113 = vector.broadcast %112 : f32 to vector<8x128xf32>
    %114 = arith.mulf %1, %113 : vector<8x128xf32>
    %c1_76 = arith.constant 1 : index
    %c1_77 = arith.constant 1 : index
    %115 = memref.load %arg5[%c1_76, %c1_77] : memref<10x10xf32, #tpu.memory_space<smem>>
    %116 = vector.broadcast %115 : f32 to vector<8x128xf32>
    %117 = arith.mulf %3, %116 : vector<8x128xf32>
    %118 = arith.addf %114, %117 : vector<8x128xf32>
    %c2_78 = arith.constant 2 : index
    %c1_79 = arith.constant 1 : index
    %119 = memref.load %arg5[%c2_78, %c1_79] : memref<10x10xf32, #tpu.memory_space<smem>>
    %120 = vector.broadcast %119 : f32 to vector<8x128xf32>
    %121 = arith.addf %118, %120 : vector<8x128xf32>
    %c3_80 = arith.constant 3 : index
    %c1_81 = arith.constant 1 : index
    %122 = memref.load %arg5[%c3_80, %c1_81] : memref<10x10xf32, #tpu.memory_space<smem>>
    %123 = vector.broadcast %122 : f32 to vector<16x128xf32>
    %124 = arith.mulf %4, %123 : vector<16x128xf32>
    %c4_82 = arith.constant 4 : index
    %c1_83 = arith.constant 1 : index
    %125 = memref.load %arg5[%c4_82, %c1_83] : memref<10x10xf32, #tpu.memory_space<smem>>
    %126 = vector.broadcast %125 : f32 to vector<16x128xf32>
    %127 = arith.addf %124, %126 : vector<16x128xf32>
    %128 = arith.mulf %6, %121 : vector<8x128xf32>
    %cst_84 = arith.constant dense<0.000000e+00> : vector<128xf32>
    %129 = vector.multi_reduction <add>, %128, %cst_84 [0] : vector<8x128xf32> to vector<128xf32>
    %130 = vector.shape_cast %129 : vector<128xf32> to vector<1x128xf32>
    %131 = arith.mulf %22, %127 : vector<16x128xf32>
    %cst_85 = arith.constant dense<0.000000e+00> : vector<128xf32>
    %132 = vector.multi_reduction <add>, %131, %cst_85 [0] : vector<16x128xf32> to vector<128xf32>
    %133 = vector.shape_cast %132 : vector<128xf32> to vector<1x128xf32>
    %134 = arith.addf %130, %133 : vector<1x128xf32>
    %135 = arith.mulf %8, %121 : vector<8x128xf32>
    %cst_86 = arith.constant dense<0.000000e+00> : vector<128xf32>
    %136 = vector.multi_reduction <add>, %135, %cst_86 [0] : vector<8x128xf32> to vector<128xf32>
    %137 = vector.shape_cast %136 : vector<128xf32> to vector<1x128xf32>
    %138 = arith.mulf %24, %127 : vector<16x128xf32>
    %cst_87 = arith.constant dense<0.000000e+00> : vector<128xf32>
    %139 = vector.multi_reduction <add>, %138, %cst_87 [0] : vector<16x128xf32> to vector<128xf32>
    %140 = vector.shape_cast %139 : vector<128xf32> to vector<1x128xf32>
    %141 = arith.addf %137, %140 : vector<1x128xf32>
    %142 = arith.mulf %10, %121 : vector<8x128xf32>
    %cst_88 = arith.constant dense<0.000000e+00> : vector<128xf32>
    %143 = vector.multi_reduction <add>, %142, %cst_88 [0] : vector<8x128xf32> to vector<128xf32>
    %144 = vector.shape_cast %143 : vector<128xf32> to vector<1x128xf32>
    %145 = arith.mulf %26, %127 : vector<16x128xf32>
    %cst_89 = arith.constant dense<0.000000e+00> : vector<128xf32>
    %146 = vector.multi_reduction <add>, %145, %cst_89 [0] : vector<16x128xf32> to vector<128xf32>
    %147 = vector.shape_cast %146 : vector<128xf32> to vector<1x128xf32>
    %148 = arith.addf %144, %147 : vector<1x128xf32>
    %149 = arith.mulf %12, %121 : vector<8x128xf32>
    %cst_90 = arith.constant dense<0.000000e+00> : vector<128xf32>
    %150 = vector.multi_reduction <add>, %149, %cst_90 [0] : vector<8x128xf32> to vector<128xf32>
    %151 = vector.shape_cast %150 : vector<128xf32> to vector<1x128xf32>
    %152 = arith.mulf %28, %127 : vector<16x128xf32>
    %cst_91 = arith.constant dense<0.000000e+00> : vector<128xf32>
    %153 = vector.multi_reduction <add>, %152, %cst_91 [0] : vector<16x128xf32> to vector<128xf32>
    %154 = vector.shape_cast %153 : vector<128xf32> to vector<1x128xf32>
    %155 = arith.addf %151, %154 : vector<1x128xf32>
    %156 = arith.mulf %14, %121 : vector<8x128xf32>
    %cst_92 = arith.constant dense<0.000000e+00> : vector<128xf32>
    %157 = vector.multi_reduction <add>, %156, %cst_92 [0] : vector<8x128xf32> to vector<128xf32>
    %158 = vector.shape_cast %157 : vector<128xf32> to vector<1x128xf32>
    %159 = arith.mulf %30, %127 : vector<16x128xf32>
    %cst_93 = arith.constant dense<0.000000e+00> : vector<128xf32>
    %160 = vector.multi_reduction <add>, %159, %cst_93 [0] : vector<16x128xf32> to vector<128xf32>
    %161 = vector.shape_cast %160 : vector<128xf32> to vector<1x128xf32>
    %162 = arith.addf %158, %161 : vector<1x128xf32>
    %163 = arith.mulf %16, %121 : vector<8x128xf32>
    %cst_94 = arith.constant dense<0.000000e+00> : vector<128xf32>
    %164 = vector.multi_reduction <add>, %163, %cst_94 [0] : vector<8x128xf32> to vector<128xf32>
    %165 = vector.shape_cast %164 : vector<128xf32> to vector<1x128xf32>
    %166 = arith.mulf %32, %127 : vector<16x128xf32>
    %cst_95 = arith.constant dense<0.000000e+00> : vector<128xf32>
    %167 = vector.multi_reduction <add>, %166, %cst_95 [0] : vector<16x128xf32> to vector<128xf32>
    %168 = vector.shape_cast %167 : vector<128xf32> to vector<1x128xf32>
    %169 = arith.addf %165, %168 : vector<1x128xf32>
    %170 = arith.mulf %18, %121 : vector<8x128xf32>
    %cst_96 = arith.constant dense<0.000000e+00> : vector<128xf32>
    %171 = vector.multi_reduction <add>, %170, %cst_96 [0] : vector<8x128xf32> to vector<128xf32>
    %172 = vector.shape_cast %171 : vector<128xf32> to vector<1x128xf32>
    %173 = arith.mulf %34, %127 : vector<16x128xf32>
    %cst_97 = arith.constant dense<0.000000e+00> : vector<128xf32>
    %174 = vector.multi_reduction <add>, %173, %cst_97 [0] : vector<16x128xf32> to vector<128xf32>
    %175 = vector.shape_cast %174 : vector<128xf32> to vector<1x128xf32>
    %176 = arith.addf %172, %175 : vector<1x128xf32>
    %177 = arith.mulf %20, %121 : vector<8x128xf32>
    %cst_98 = arith.constant dense<0.000000e+00> : vector<128xf32>
    %178 = vector.multi_reduction <add>, %177, %cst_98 [0] : vector<8x128xf32> to vector<128xf32>
    %179 = vector.shape_cast %178 : vector<128xf32> to vector<1x128xf32>
    %180 = arith.mulf %36, %127 : vector<16x128xf32>
    %cst_99 = arith.constant dense<0.000000e+00> : vector<128xf32>
    %181 = vector.multi_reduction <add>, %180, %cst_99 [0] : vector<16x128xf32> to vector<128xf32>
    %182 = vector.shape_cast %181 : vector<128xf32> to vector<1x128xf32>
    %183 = arith.addf %179, %182 : vector<1x128xf32>
    %184 = tpu.concatenate %134, %141, %148, %155, %162, %169, %176, %183 in 0 : vector<1x128xf32>, vector<1x128xf32>, vector<1x128xf32>, vector<1x128xf32>, vector<1x128xf32>, vector<1x128xf32>, vector<1x128xf32>, vector<1x128xf32> -> vector<8x128xf32>
    %cst_100 = arith.constant 0.000000e+00 : f32
    %185 = vector.broadcast %cst_100 : f32 to vector<8x128xf32>
    %186 = arith.maximumf %184, %185 : vector<8x128xf32>
    %c0_101 = arith.constant 0 : index
    %c2_102 = arith.constant 2 : index
    %187 = memref.load %arg5[%c0_101, %c2_102] : memref<10x10xf32, #tpu.memory_space<smem>>
    %188 = vector.broadcast %187 : f32 to vector<8x128xf32>
    %189 = arith.mulf %1, %188 : vector<8x128xf32>
    %c1_103 = arith.constant 1 : index
    %c2_104 = arith.constant 2 : index
    %190 = memref.load %arg5[%c1_103, %c2_104] : memref<10x10xf32, #tpu.memory_space<smem>>
    %191 = vector.broadcast %190 : f32 to vector<8x128xf32>
    %192 = arith.mulf %3, %191 : vector<8x128xf32>
    %193 = arith.addf %189, %192 : vector<8x128xf32>
    %c2_105 = arith.constant 2 : index
    %c2_106 = arith.constant 2 : index
    %194 = memref.load %arg5[%c2_105, %c2_106] : memref<10x10xf32, #tpu.memory_space<smem>>
    %195 = vector.broadcast %194 : f32 to vector<8x128xf32>
    %196 = arith.addf %193, %195 : vector<8x128xf32>
    %c3_107 = arith.constant 3 : index
    %c2_108 = arith.constant 2 : index
    %197 = memref.load %arg5[%c3_107, %c2_108] : memref<10x10xf32, #tpu.memory_space<smem>>
    %198 = vector.broadcast %197 : f32 to vector<16x128xf32>
    %199 = arith.mulf %4, %198 : vector<16x128xf32>
    %c4_109 = arith.constant 4 : index
    %c2_110 = arith.constant 2 : index
    %200 = memref.load %arg5[%c4_109, %c2_110] : memref<10x10xf32, #tpu.memory_space<smem>>
    %201 = vector.broadcast %200 : f32 to vector<16x128xf32>
    %202 = arith.addf %199, %201 : vector<16x128xf32>
    %203 = arith.mulf %6, %196 : vector<8x128xf32>
    %cst_111 = arith.constant dense<0.000000e+00> : vector<128xf32>
    %204 = vector.multi_reduction <add>, %203, %cst_111 [0] : vector<8x128xf32> to vector<128xf32>
    %205 = vector.shape_cast %204 : vector<128xf32> to vector<1x128xf32>
    %206 = arith.mulf %22, %202 : vector<16x128xf32>
    %cst_112 = arith.constant dense<0.000000e+00> : vector<128xf32>
    %207 = vector.multi_reduction <add>, %206, %cst_112 [0] : vector<16x128xf32> to vector<128xf32>
    %208 = vector.shape_cast %207 : vector<128xf32> to vector<1x128xf32>
    %209 = arith.addf %205, %208 : vector<1x128xf32>
    %210 = arith.mulf %8, %196 : vector<8x128xf32>
    %cst_113 = arith.constant dense<0.000000e+00> : vector<128xf32>
    %211 = vector.multi_reduction <add>, %210, %cst_113 [0] : vector<8x128xf32> to vector<128xf32>
    %212 = vector.shape_cast %211 : vector<128xf32> to vector<1x128xf32>
    %213 = arith.mulf %24, %202 : vector<16x128xf32>
    %cst_114 = arith.constant dense<0.000000e+00> : vector<128xf32>
    %214 = vector.multi_reduction <add>, %213, %cst_114 [0] : vector<16x128xf32> to vector<128xf32>
    %215 = vector.shape_cast %214 : vector<128xf32> to vector<1x128xf32>
    %216 = arith.addf %212, %215 : vector<1x128xf32>
    %217 = arith.mulf %10, %196 : vector<8x128xf32>
    %cst_115 = arith.constant dense<0.000000e+00> : vector<128xf32>
    %218 = vector.multi_reduction <add>, %217, %cst_115 [0] : vector<8x128xf32> to vector<128xf32>
    %219 = vector.shape_cast %218 : vector<128xf32> to vector<1x128xf32>
    %220 = arith.mulf %26, %202 : vector<16x128xf32>
    %cst_116 = arith.constant dense<0.000000e+00> : vector<128xf32>
    %221 = vector.multi_reduction <add>, %220, %cst_116 [0] : vector<16x128xf32> to vector<128xf32>
    %222 = vector.shape_cast %221 : vector<128xf32> to vector<1x128xf32>
    %223 = arith.addf %219, %222 : vector<1x128xf32>
    %224 = arith.mulf %12, %196 : vector<8x128xf32>
    %cst_117 = arith.constant dense<0.000000e+00> : vector<128xf32>
    %225 = vector.multi_reduction <add>, %224, %cst_117 [0] : vector<8x128xf32> to vector<128xf32>
    %226 = vector.shape_cast %225 : vector<128xf32> to vector<1x128xf32>
    %227 = arith.mulf %28, %202 : vector<16x128xf32>
    %cst_118 = arith.constant dense<0.000000e+00> : vector<128xf32>
    %228 = vector.multi_reduction <add>, %227, %cst_118 [0] : vector<16x128xf32> to vector<128xf32>
    %229 = vector.shape_cast %228 : vector<128xf32> to vector<1x128xf32>
    %230 = arith.addf %226, %229 : vector<1x128xf32>
    %231 = arith.mulf %14, %196 : vector<8x128xf32>
    %cst_119 = arith.constant dense<0.000000e+00> : vector<128xf32>
    %232 = vector.multi_reduction <add>, %231, %cst_119 [0] : vector<8x128xf32> to vector<128xf32>
    %233 = vector.shape_cast %232 : vector<128xf32> to vector<1x128xf32>
    %234 = arith.mulf %30, %202 : vector<16x128xf32>
    %cst_120 = arith.constant dense<0.000000e+00> : vector<128xf32>
    %235 = vector.multi_reduction <add>, %234, %cst_120 [0] : vector<16x128xf32> to vector<128xf32>
    %236 = vector.shape_cast %235 : vector<128xf32> to vector<1x128xf32>
    %237 = arith.addf %233, %236 : vector<1x128xf32>
    %238 = arith.mulf %16, %196 : vector<8x128xf32>
    %cst_121 = arith.constant dense<0.000000e+00> : vector<128xf32>
    %239 = vector.multi_reduction <add>, %238, %cst_121 [0] : vector<8x128xf32> to vector<128xf32>
    %240 = vector.shape_cast %239 : vector<128xf32> to vector<1x128xf32>
    %241 = arith.mulf %32, %202 : vector<16x128xf32>
    %cst_122 = arith.constant dense<0.000000e+00> : vector<128xf32>
    %242 = vector.multi_reduction <add>, %241, %cst_122 [0] : vector<16x128xf32> to vector<128xf32>
    %243 = vector.shape_cast %242 : vector<128xf32> to vector<1x128xf32>
    %244 = arith.addf %240, %243 : vector<1x128xf32>
    %245 = arith.mulf %18, %196 : vector<8x128xf32>
    %cst_123 = arith.constant dense<0.000000e+00> : vector<128xf32>
    %246 = vector.multi_reduction <add>, %245, %cst_123 [0] : vector<8x128xf32> to vector<128xf32>
    %247 = vector.shape_cast %246 : vector<128xf32> to vector<1x128xf32>
    %248 = arith.mulf %34, %202 : vector<16x128xf32>
    %cst_124 = arith.constant dense<0.000000e+00> : vector<128xf32>
    %249 = vector.multi_reduction <add>, %248, %cst_124 [0] : vector<16x128xf32> to vector<128xf32>
    %250 = vector.shape_cast %249 : vector<128xf32> to vector<1x128xf32>
    %251 = arith.addf %247, %250 : vector<1x128xf32>
    %252 = arith.mulf %20, %196 : vector<8x128xf32>
    %cst_125 = arith.constant dense<0.000000e+00> : vector<128xf32>
    %253 = vector.multi_reduction <add>, %252, %cst_125 [0] : vector<8x128xf32> to vector<128xf32>
    %254 = vector.shape_cast %253 : vector<128xf32> to vector<1x128xf32>
    %255 = arith.mulf %36, %202 : vector<16x128xf32>
    %cst_126 = arith.constant dense<0.000000e+00> : vector<128xf32>
    %256 = vector.multi_reduction <add>, %255, %cst_126 [0] : vector<16x128xf32> to vector<128xf32>
    %257 = vector.shape_cast %256 : vector<128xf32> to vector<1x128xf32>
    %258 = arith.addf %254, %257 : vector<1x128xf32>
    %259 = tpu.concatenate %209, %216, %223, %230, %237, %244, %251, %258 in 0 : vector<1x128xf32>, vector<1x128xf32>, vector<1x128xf32>, vector<1x128xf32>, vector<1x128xf32>, vector<1x128xf32>, vector<1x128xf32>, vector<1x128xf32> -> vector<8x128xf32>
    %cst_127 = arith.constant 0.000000e+00 : f32
    %260 = vector.broadcast %cst_127 : f32 to vector<8x128xf32>
    %261 = arith.maximumf %259, %260 : vector<8x128xf32>
    %c0_128 = arith.constant 0 : index
    %c3_129 = arith.constant 3 : index
    %262 = memref.load %arg5[%c0_128, %c3_129] : memref<10x10xf32, #tpu.memory_space<smem>>
    %263 = vector.broadcast %262 : f32 to vector<8x128xf32>
    %264 = arith.mulf %1, %263 : vector<8x128xf32>
    %c1_130 = arith.constant 1 : index
    %c3_131 = arith.constant 3 : index
    %265 = memref.load %arg5[%c1_130, %c3_131] : memref<10x10xf32, #tpu.memory_space<smem>>
    %266 = vector.broadcast %265 : f32 to vector<8x128xf32>
    %267 = arith.mulf %3, %266 : vector<8x128xf32>
    %268 = arith.addf %264, %267 : vector<8x128xf32>
    %c2_132 = arith.constant 2 : index
    %c3_133 = arith.constant 3 : index
    %269 = memref.load %arg5[%c2_132, %c3_133] : memref<10x10xf32, #tpu.memory_space<smem>>
    %270 = vector.broadcast %269 : f32 to vector<8x128xf32>
    %271 = arith.addf %268, %270 : vector<8x128xf32>
    %c3_134 = arith.constant 3 : index
    %c3_135 = arith.constant 3 : index
    %272 = memref.load %arg5[%c3_134, %c3_135] : memref<10x10xf32, #tpu.memory_space<smem>>
    %273 = vector.broadcast %272 : f32 to vector<16x128xf32>
    %274 = arith.mulf %4, %273 : vector<16x128xf32>
    %c4_136 = arith.constant 4 : index
    %c3_137 = arith.constant 3 : index
    %275 = memref.load %arg5[%c4_136, %c3_137] : memref<10x10xf32, #tpu.memory_space<smem>>
    %276 = vector.broadcast %275 : f32 to vector<16x128xf32>
    %277 = arith.addf %274, %276 : vector<16x128xf32>
    %278 = arith.mulf %6, %271 : vector<8x128xf32>
    %cst_138 = arith.constant dense<0.000000e+00> : vector<128xf32>
    %279 = vector.multi_reduction <add>, %278, %cst_138 [0] : vector<8x128xf32> to vector<128xf32>
    %280 = vector.shape_cast %279 : vector<128xf32> to vector<1x128xf32>
    %281 = arith.mulf %22, %277 : vector<16x128xf32>
    %cst_139 = arith.constant dense<0.000000e+00> : vector<128xf32>
    %282 = vector.multi_reduction <add>, %281, %cst_139 [0] : vector<16x128xf32> to vector<128xf32>
    %283 = vector.shape_cast %282 : vector<128xf32> to vector<1x128xf32>
    %284 = arith.addf %280, %283 : vector<1x128xf32>
    %285 = arith.mulf %8, %271 : vector<8x128xf32>
    %cst_140 = arith.constant dense<0.000000e+00> : vector<128xf32>
    %286 = vector.multi_reduction <add>, %285, %cst_140 [0] : vector<8x128xf32> to vector<128xf32>
    %287 = vector.shape_cast %286 : vector<128xf32> to vector<1x128xf32>
    %288 = arith.mulf %24, %277 : vector<16x128xf32>
    %cst_141 = arith.constant dense<0.000000e+00> : vector<128xf32>
    %289 = vector.multi_reduction <add>, %288, %cst_141 [0] : vector<16x128xf32> to vector<128xf32>
    %290 = vector.shape_cast %289 : vector<128xf32> to vector<1x128xf32>
    %291 = arith.addf %287, %290 : vector<1x128xf32>
    %292 = arith.mulf %10, %271 : vector<8x128xf32>
    %cst_142 = arith.constant dense<0.000000e+00> : vector<128xf32>
    %293 = vector.multi_reduction <add>, %292, %cst_142 [0] : vector<8x128xf32> to vector<128xf32>
    %294 = vector.shape_cast %293 : vector<128xf32> to vector<1x128xf32>
    %295 = arith.mulf %26, %277 : vector<16x128xf32>
    %cst_143 = arith.constant dense<0.000000e+00> : vector<128xf32>
    %296 = vector.multi_reduction <add>, %295, %cst_143 [0] : vector<16x128xf32> to vector<128xf32>
    %297 = vector.shape_cast %296 : vector<128xf32> to vector<1x128xf32>
    %298 = arith.addf %294, %297 : vector<1x128xf32>
    %299 = arith.mulf %12, %271 : vector<8x128xf32>
    %cst_144 = arith.constant dense<0.000000e+00> : vector<128xf32>
    %300 = vector.multi_reduction <add>, %299, %cst_144 [0] : vector<8x128xf32> to vector<128xf32>
    %301 = vector.shape_cast %300 : vector<128xf32> to vector<1x128xf32>
    %302 = arith.mulf %28, %277 : vector<16x128xf32>
    %cst_145 = arith.constant dense<0.000000e+00> : vector<128xf32>
    %303 = vector.multi_reduction <add>, %302, %cst_145 [0] : vector<16x128xf32> to vector<128xf32>
    %304 = vector.shape_cast %303 : vector<128xf32> to vector<1x128xf32>
    %305 = arith.addf %301, %304 : vector<1x128xf32>
    %306 = arith.mulf %14, %271 : vector<8x128xf32>
    %cst_146 = arith.constant dense<0.000000e+00> : vector<128xf32>
    %307 = vector.multi_reduction <add>, %306, %cst_146 [0] : vector<8x128xf32> to vector<128xf32>
    %308 = vector.shape_cast %307 : vector<128xf32> to vector<1x128xf32>
    %309 = arith.mulf %30, %277 : vector<16x128xf32>
    %cst_147 = arith.constant dense<0.000000e+00> : vector<128xf32>
    %310 = vector.multi_reduction <add>, %309, %cst_147 [0] : vector<16x128xf32> to vector<128xf32>
    %311 = vector.shape_cast %310 : vector<128xf32> to vector<1x128xf32>
    %312 = arith.addf %308, %311 : vector<1x128xf32>
    %313 = arith.mulf %16, %271 : vector<8x128xf32>
    %cst_148 = arith.constant dense<0.000000e+00> : vector<128xf32>
    %314 = vector.multi_reduction <add>, %313, %cst_148 [0] : vector<8x128xf32> to vector<128xf32>
    %315 = vector.shape_cast %314 : vector<128xf32> to vector<1x128xf32>
    %316 = arith.mulf %32, %277 : vector<16x128xf32>
    %cst_149 = arith.constant dense<0.000000e+00> : vector<128xf32>
    %317 = vector.multi_reduction <add>, %316, %cst_149 [0] : vector<16x128xf32> to vector<128xf32>
    %318 = vector.shape_cast %317 : vector<128xf32> to vector<1x128xf32>
    %319 = arith.addf %315, %318 : vector<1x128xf32>
    %320 = arith.mulf %18, %271 : vector<8x128xf32>
    %cst_150 = arith.constant dense<0.000000e+00> : vector<128xf32>
    %321 = vector.multi_reduction <add>, %320, %cst_150 [0] : vector<8x128xf32> to vector<128xf32>
    %322 = vector.shape_cast %321 : vector<128xf32> to vector<1x128xf32>
    %323 = arith.mulf %34, %277 : vector<16x128xf32>
    %cst_151 = arith.constant dense<0.000000e+00> : vector<128xf32>
    %324 = vector.multi_reduction <add>, %323, %cst_151 [0] : vector<16x128xf32> to vector<128xf32>
    %325 = vector.shape_cast %324 : vector<128xf32> to vector<1x128xf32>
    %326 = arith.addf %322, %325 : vector<1x128xf32>
    %327 = arith.mulf %20, %271 : vector<8x128xf32>
    %cst_152 = arith.constant dense<0.000000e+00> : vector<128xf32>
    %328 = vector.multi_reduction <add>, %327, %cst_152 [0] : vector<8x128xf32> to vector<128xf32>
    %329 = vector.shape_cast %328 : vector<128xf32> to vector<1x128xf32>
    %330 = arith.mulf %36, %277 : vector<16x128xf32>
    %cst_153 = arith.constant dense<0.000000e+00> : vector<128xf32>
    %331 = vector.multi_reduction <add>, %330, %cst_153 [0] : vector<16x128xf32> to vector<128xf32>
    %332 = vector.shape_cast %331 : vector<128xf32> to vector<1x128xf32>
    %333 = arith.addf %329, %332 : vector<1x128xf32>
    %334 = tpu.concatenate %284, %291, %298, %305, %312, %319, %326, %333 in 0 : vector<1x128xf32>, vector<1x128xf32>, vector<1x128xf32>, vector<1x128xf32>, vector<1x128xf32>, vector<1x128xf32>, vector<1x128xf32>, vector<1x128xf32> -> vector<8x128xf32>
    %cst_154 = arith.constant 0.000000e+00 : f32
    %335 = vector.broadcast %cst_154 : f32 to vector<8x128xf32>
    %336 = arith.maximumf %334, %335 : vector<8x128xf32>
    %c0_155 = arith.constant 0 : index
    %c4_156 = arith.constant 4 : index
    %337 = memref.load %arg5[%c0_155, %c4_156] : memref<10x10xf32, #tpu.memory_space<smem>>
    %338 = vector.broadcast %337 : f32 to vector<8x128xf32>
    %339 = arith.mulf %1, %338 : vector<8x128xf32>
    %c1_157 = arith.constant 1 : index
    %c4_158 = arith.constant 4 : index
    %340 = memref.load %arg5[%c1_157, %c4_158] : memref<10x10xf32, #tpu.memory_space<smem>>
    %341 = vector.broadcast %340 : f32 to vector<8x128xf32>
    %342 = arith.mulf %3, %341 : vector<8x128xf32>
    %343 = arith.addf %339, %342 : vector<8x128xf32>
    %c2_159 = arith.constant 2 : index
    %c4_160 = arith.constant 4 : index
    %344 = memref.load %arg5[%c2_159, %c4_160] : memref<10x10xf32, #tpu.memory_space<smem>>
    %345 = vector.broadcast %344 : f32 to vector<8x128xf32>
    %346 = arith.addf %343, %345 : vector<8x128xf32>
    %c3_161 = arith.constant 3 : index
    %c4_162 = arith.constant 4 : index
    %347 = memref.load %arg5[%c3_161, %c4_162] : memref<10x10xf32, #tpu.memory_space<smem>>
    %348 = vector.broadcast %347 : f32 to vector<16x128xf32>
    %349 = arith.mulf %4, %348 : vector<16x128xf32>
    %c4_163 = arith.constant 4 : index
    %c4_164 = arith.constant 4 : index
    %350 = memref.load %arg5[%c4_163, %c4_164] : memref<10x10xf32, #tpu.memory_space<smem>>
    %351 = vector.broadcast %350 : f32 to vector<16x128xf32>
    %352 = arith.addf %349, %351 : vector<16x128xf32>
    %353 = arith.mulf %6, %346 : vector<8x128xf32>
    %cst_165 = arith.constant dense<0.000000e+00> : vector<128xf32>
    %354 = vector.multi_reduction <add>, %353, %cst_165 [0] : vector<8x128xf32> to vector<128xf32>
    %355 = vector.shape_cast %354 : vector<128xf32> to vector<1x128xf32>
    %356 = arith.mulf %22, %352 : vector<16x128xf32>
    %cst_166 = arith.constant dense<0.000000e+00> : vector<128xf32>
    %357 = vector.multi_reduction <add>, %356, %cst_166 [0] : vector<16x128xf32> to vector<128xf32>
    %358 = vector.shape_cast %357 : vector<128xf32> to vector<1x128xf32>
    %359 = arith.addf %355, %358 : vector<1x128xf32>
    %360 = arith.mulf %8, %346 : vector<8x128xf32>
    %cst_167 = arith.constant dense<0.000000e+00> : vector<128xf32>
    %361 = vector.multi_reduction <add>, %360, %cst_167 [0] : vector<8x128xf32> to vector<128xf32>
    %362 = vector.shape_cast %361 : vector<128xf32> to vector<1x128xf32>
    %363 = arith.mulf %24, %352 : vector<16x128xf32>
    %cst_168 = arith.constant dense<0.000000e+00> : vector<128xf32>
    %364 = vector.multi_reduction <add>, %363, %cst_168 [0] : vector<16x128xf32> to vector<128xf32>
    %365 = vector.shape_cast %364 : vector<128xf32> to vector<1x128xf32>
    %366 = arith.addf %362, %365 : vector<1x128xf32>
    %367 = arith.mulf %10, %346 : vector<8x128xf32>
    %cst_169 = arith.constant dense<0.000000e+00> : vector<128xf32>
    %368 = vector.multi_reduction <add>, %367, %cst_169 [0] : vector<8x128xf32> to vector<128xf32>
    %369 = vector.shape_cast %368 : vector<128xf32> to vector<1x128xf32>
    %370 = arith.mulf %26, %352 : vector<16x128xf32>
    %cst_170 = arith.constant dense<0.000000e+00> : vector<128xf32>
    %371 = vector.multi_reduction <add>, %370, %cst_170 [0] : vector<16x128xf32> to vector<128xf32>
    %372 = vector.shape_cast %371 : vector<128xf32> to vector<1x128xf32>
    %373 = arith.addf %369, %372 : vector<1x128xf32>
    %374 = arith.mulf %12, %346 : vector<8x128xf32>
    %cst_171 = arith.constant dense<0.000000e+00> : vector<128xf32>
    %375 = vector.multi_reduction <add>, %374, %cst_171 [0] : vector<8x128xf32> to vector<128xf32>
    %376 = vector.shape_cast %375 : vector<128xf32> to vector<1x128xf32>
    %377 = arith.mulf %28, %352 : vector<16x128xf32>
    %cst_172 = arith.constant dense<0.000000e+00> : vector<128xf32>
    %378 = vector.multi_reduction <add>, %377, %cst_172 [0] : vector<16x128xf32> to vector<128xf32>
    %379 = vector.shape_cast %378 : vector<128xf32> to vector<1x128xf32>
    %380 = arith.addf %376, %379 : vector<1x128xf32>
    %381 = arith.mulf %14, %346 : vector<8x128xf32>
    %cst_173 = arith.constant dense<0.000000e+00> : vector<128xf32>
    %382 = vector.multi_reduction <add>, %381, %cst_173 [0] : vector<8x128xf32> to vector<128xf32>
    %383 = vector.shape_cast %382 : vector<128xf32> to vector<1x128xf32>
    %384 = arith.mulf %30, %352 : vector<16x128xf32>
    %cst_174 = arith.constant dense<0.000000e+00> : vector<128xf32>
    %385 = vector.multi_reduction <add>, %384, %cst_174 [0] : vector<16x128xf32> to vector<128xf32>
    %386 = vector.shape_cast %385 : vector<128xf32> to vector<1x128xf32>
    %387 = arith.addf %383, %386 : vector<1x128xf32>
    %388 = arith.mulf %16, %346 : vector<8x128xf32>
    %cst_175 = arith.constant dense<0.000000e+00> : vector<128xf32>
    %389 = vector.multi_reduction <add>, %388, %cst_175 [0] : vector<8x128xf32> to vector<128xf32>
    %390 = vector.shape_cast %389 : vector<128xf32> to vector<1x128xf32>
    %391 = arith.mulf %32, %352 : vector<16x128xf32>
    %cst_176 = arith.constant dense<0.000000e+00> : vector<128xf32>
    %392 = vector.multi_reduction <add>, %391, %cst_176 [0] : vector<16x128xf32> to vector<128xf32>
    %393 = vector.shape_cast %392 : vector<128xf32> to vector<1x128xf32>
    %394 = arith.addf %390, %393 : vector<1x128xf32>
    %395 = arith.mulf %18, %346 : vector<8x128xf32>
    %cst_177 = arith.constant dense<0.000000e+00> : vector<128xf32>
    %396 = vector.multi_reduction <add>, %395, %cst_177 [0] : vector<8x128xf32> to vector<128xf32>
    %397 = vector.shape_cast %396 : vector<128xf32> to vector<1x128xf32>
    %398 = arith.mulf %34, %352 : vector<16x128xf32>
    %cst_178 = arith.constant dense<0.000000e+00> : vector<128xf32>
    %399 = vector.multi_reduction <add>, %398, %cst_178 [0] : vector<16x128xf32> to vector<128xf32>
    %400 = vector.shape_cast %399 : vector<128xf32> to vector<1x128xf32>
    %401 = arith.addf %397, %400 : vector<1x128xf32>
    %402 = arith.mulf %20, %346 : vector<8x128xf32>
    %cst_179 = arith.constant dense<0.000000e+00> : vector<128xf32>
    %403 = vector.multi_reduction <add>, %402, %cst_179 [0] : vector<8x128xf32> to vector<128xf32>
    %404 = vector.shape_cast %403 : vector<128xf32> to vector<1x128xf32>
    %405 = arith.mulf %36, %352 : vector<16x128xf32>
    %cst_180 = arith.constant dense<0.000000e+00> : vector<128xf32>
    %406 = vector.multi_reduction <add>, %405, %cst_180 [0] : vector<16x128xf32> to vector<128xf32>
    %407 = vector.shape_cast %406 : vector<128xf32> to vector<1x128xf32>
    %408 = arith.addf %404, %407 : vector<1x128xf32>
    %409 = tpu.concatenate %359, %366, %373, %380, %387, %394, %401, %408 in 0 : vector<1x128xf32>, vector<1x128xf32>, vector<1x128xf32>, vector<1x128xf32>, vector<1x128xf32>, vector<1x128xf32>, vector<1x128xf32>, vector<1x128xf32> -> vector<8x128xf32>
    %cst_181 = arith.constant 0.000000e+00 : f32
    %410 = vector.broadcast %cst_181 : f32 to vector<8x128xf32>
    %411 = arith.maximumf %409, %410 : vector<8x128xf32>
    %c0_182 = arith.constant 0 : index
    %c5_183 = arith.constant 5 : index
    %412 = memref.load %arg5[%c0_182, %c5_183] : memref<10x10xf32, #tpu.memory_space<smem>>
    %413 = vector.broadcast %412 : f32 to vector<8x128xf32>
    %414 = arith.mulf %1, %413 : vector<8x128xf32>
    %c1_184 = arith.constant 1 : index
    %c5_185 = arith.constant 5 : index
    %415 = memref.load %arg5[%c1_184, %c5_185] : memref<10x10xf32, #tpu.memory_space<smem>>
    %416 = vector.broadcast %415 : f32 to vector<8x128xf32>
    %417 = arith.mulf %3, %416 : vector<8x128xf32>
    %418 = arith.addf %414, %417 : vector<8x128xf32>
    %c2_186 = arith.constant 2 : index
    %c5_187 = arith.constant 5 : index
    %419 = memref.load %arg5[%c2_186, %c5_187] : memref<10x10xf32, #tpu.memory_space<smem>>
    %420 = vector.broadcast %419 : f32 to vector<8x128xf32>
    %421 = arith.addf %418, %420 : vector<8x128xf32>
    %c3_188 = arith.constant 3 : index
    %c5_189 = arith.constant 5 : index
    %422 = memref.load %arg5[%c3_188, %c5_189] : memref<10x10xf32, #tpu.memory_space<smem>>
    %423 = vector.broadcast %422 : f32 to vector<16x128xf32>
    %424 = arith.mulf %4, %423 : vector<16x128xf32>
    %c4_190 = arith.constant 4 : index
    %c5_191 = arith.constant 5 : index
    %425 = memref.load %arg5[%c4_190, %c5_191] : memref<10x10xf32, #tpu.memory_space<smem>>
    %426 = vector.broadcast %425 : f32 to vector<16x128xf32>
    %427 = arith.addf %424, %426 : vector<16x128xf32>
    %428 = arith.mulf %6, %421 : vector<8x128xf32>
    %cst_192 = arith.constant dense<0.000000e+00> : vector<128xf32>
    %429 = vector.multi_reduction <add>, %428, %cst_192 [0] : vector<8x128xf32> to vector<128xf32>
    %430 = vector.shape_cast %429 : vector<128xf32> to vector<1x128xf32>
    %431 = arith.mulf %22, %427 : vector<16x128xf32>
    %cst_193 = arith.constant dense<0.000000e+00> : vector<128xf32>
    %432 = vector.multi_reduction <add>, %431, %cst_193 [0] : vector<16x128xf32> to vector<128xf32>
    %433 = vector.shape_cast %432 : vector<128xf32> to vector<1x128xf32>
    %434 = arith.addf %430, %433 : vector<1x128xf32>
    %435 = arith.mulf %8, %421 : vector<8x128xf32>
    %cst_194 = arith.constant dense<0.000000e+00> : vector<128xf32>
    %436 = vector.multi_reduction <add>, %435, %cst_194 [0] : vector<8x128xf32> to vector<128xf32>
    %437 = vector.shape_cast %436 : vector<128xf32> to vector<1x128xf32>
    %438 = arith.mulf %24, %427 : vector<16x128xf32>
    %cst_195 = arith.constant dense<0.000000e+00> : vector<128xf32>
    %439 = vector.multi_reduction <add>, %438, %cst_195 [0] : vector<16x128xf32> to vector<128xf32>
    %440 = vector.shape_cast %439 : vector<128xf32> to vector<1x128xf32>
    %441 = arith.addf %437, %440 : vector<1x128xf32>
    %442 = arith.mulf %10, %421 : vector<8x128xf32>
    %cst_196 = arith.constant dense<0.000000e+00> : vector<128xf32>
    %443 = vector.multi_reduction <add>, %442, %cst_196 [0] : vector<8x128xf32> to vector<128xf32>
    %444 = vector.shape_cast %443 : vector<128xf32> to vector<1x128xf32>
    %445 = arith.mulf %26, %427 : vector<16x128xf32>
    %cst_197 = arith.constant dense<0.000000e+00> : vector<128xf32>
    %446 = vector.multi_reduction <add>, %445, %cst_197 [0] : vector<16x128xf32> to vector<128xf32>
    %447 = vector.shape_cast %446 : vector<128xf32> to vector<1x128xf32>
    %448 = arith.addf %444, %447 : vector<1x128xf32>
    %449 = arith.mulf %12, %421 : vector<8x128xf32>
    %cst_198 = arith.constant dense<0.000000e+00> : vector<128xf32>
    %450 = vector.multi_reduction <add>, %449, %cst_198 [0] : vector<8x128xf32> to vector<128xf32>
    %451 = vector.shape_cast %450 : vector<128xf32> to vector<1x128xf32>
    %452 = arith.mulf %28, %427 : vector<16x128xf32>
    %cst_199 = arith.constant dense<0.000000e+00> : vector<128xf32>
    %453 = vector.multi_reduction <add>, %452, %cst_199 [0] : vector<16x128xf32> to vector<128xf32>
    %454 = vector.shape_cast %453 : vector<128xf32> to vector<1x128xf32>
    %455 = arith.addf %451, %454 : vector<1x128xf32>
    %456 = arith.mulf %14, %421 : vector<8x128xf32>
    %cst_200 = arith.constant dense<0.000000e+00> : vector<128xf32>
    %457 = vector.multi_reduction <add>, %456, %cst_200 [0] : vector<8x128xf32> to vector<128xf32>
    %458 = vector.shape_cast %457 : vector<128xf32> to vector<1x128xf32>
    %459 = arith.mulf %30, %427 : vector<16x128xf32>
    %cst_201 = arith.constant dense<0.000000e+00> : vector<128xf32>
    %460 = vector.multi_reduction <add>, %459, %cst_201 [0] : vector<16x128xf32> to vector<128xf32>
    %461 = vector.shape_cast %460 : vector<128xf32> to vector<1x128xf32>
    %462 = arith.addf %458, %461 : vector<1x128xf32>
    %463 = arith.mulf %16, %421 : vector<8x128xf32>
    %cst_202 = arith.constant dense<0.000000e+00> : vector<128xf32>
    %464 = vector.multi_reduction <add>, %463, %cst_202 [0] : vector<8x128xf32> to vector<128xf32>
    %465 = vector.shape_cast %464 : vector<128xf32> to vector<1x128xf32>
    %466 = arith.mulf %32, %427 : vector<16x128xf32>
    %cst_203 = arith.constant dense<0.000000e+00> : vector<128xf32>
    %467 = vector.multi_reduction <add>, %466, %cst_203 [0] : vector<16x128xf32> to vector<128xf32>
    %468 = vector.shape_cast %467 : vector<128xf32> to vector<1x128xf32>
    %469 = arith.addf %465, %468 : vector<1x128xf32>
    %470 = arith.mulf %18, %421 : vector<8x128xf32>
    %cst_204 = arith.constant dense<0.000000e+00> : vector<128xf32>
    %471 = vector.multi_reduction <add>, %470, %cst_204 [0] : vector<8x128xf32> to vector<128xf32>
    %472 = vector.shape_cast %471 : vector<128xf32> to vector<1x128xf32>
    %473 = arith.mulf %34, %427 : vector<16x128xf32>
    %cst_205 = arith.constant dense<0.000000e+00> : vector<128xf32>
    %474 = vector.multi_reduction <add>, %473, %cst_205 [0] : vector<16x128xf32> to vector<128xf32>
    %475 = vector.shape_cast %474 : vector<128xf32> to vector<1x128xf32>
    %476 = arith.addf %472, %475 : vector<1x128xf32>
    %477 = arith.mulf %20, %421 : vector<8x128xf32>
    %cst_206 = arith.constant dense<0.000000e+00> : vector<128xf32>
    %478 = vector.multi_reduction <add>, %477, %cst_206 [0] : vector<8x128xf32> to vector<128xf32>
    %479 = vector.shape_cast %478 : vector<128xf32> to vector<1x128xf32>
    %480 = arith.mulf %36, %427 : vector<16x128xf32>
    %cst_207 = arith.constant dense<0.000000e+00> : vector<128xf32>
    %481 = vector.multi_reduction <add>, %480, %cst_207 [0] : vector<16x128xf32> to vector<128xf32>
    %482 = vector.shape_cast %481 : vector<128xf32> to vector<1x128xf32>
    %483 = arith.addf %479, %482 : vector<1x128xf32>
    %484 = tpu.concatenate %434, %441, %448, %455, %462, %469, %476, %483 in 0 : vector<1x128xf32>, vector<1x128xf32>, vector<1x128xf32>, vector<1x128xf32>, vector<1x128xf32>, vector<1x128xf32>, vector<1x128xf32>, vector<1x128xf32> -> vector<8x128xf32>
    %cst_208 = arith.constant 0.000000e+00 : f32
    %485 = vector.broadcast %cst_208 : f32 to vector<8x128xf32>
    %486 = arith.maximumf %484, %485 : vector<8x128xf32>
    %c0_209 = arith.constant 0 : index
    %c6_210 = arith.constant 6 : index
    %487 = memref.load %arg5[%c0_209, %c6_210] : memref<10x10xf32, #tpu.memory_space<smem>>
    %488 = vector.broadcast %487 : f32 to vector<8x128xf32>
    %489 = arith.mulf %1, %488 : vector<8x128xf32>
    %c1_211 = arith.constant 1 : index
    %c6_212 = arith.constant 6 : index
    %490 = memref.load %arg5[%c1_211, %c6_212] : memref<10x10xf32, #tpu.memory_space<smem>>
    %491 = vector.broadcast %490 : f32 to vector<8x128xf32>
    %492 = arith.mulf %3, %491 : vector<8x128xf32>
    %493 = arith.addf %489, %492 : vector<8x128xf32>
    %c2_213 = arith.constant 2 : index
    %c6_214 = arith.constant 6 : index
    %494 = memref.load %arg5[%c2_213, %c6_214] : memref<10x10xf32, #tpu.memory_space<smem>>
    %495 = vector.broadcast %494 : f32 to vector<8x128xf32>
    %496 = arith.addf %493, %495 : vector<8x128xf32>
    %c3_215 = arith.constant 3 : index
    %c6_216 = arith.constant 6 : index
    %497 = memref.load %arg5[%c3_215, %c6_216] : memref<10x10xf32, #tpu.memory_space<smem>>
    %498 = vector.broadcast %497 : f32 to vector<16x128xf32>
    %499 = arith.mulf %4, %498 : vector<16x128xf32>
    %c4_217 = arith.constant 4 : index
    %c6_218 = arith.constant 6 : index
    %500 = memref.load %arg5[%c4_217, %c6_218] : memref<10x10xf32, #tpu.memory_space<smem>>
    %501 = vector.broadcast %500 : f32 to vector<16x128xf32>
    %502 = arith.addf %499, %501 : vector<16x128xf32>
    %503 = arith.mulf %6, %496 : vector<8x128xf32>
    %cst_219 = arith.constant dense<0.000000e+00> : vector<128xf32>
    %504 = vector.multi_reduction <add>, %503, %cst_219 [0] : vector<8x128xf32> to vector<128xf32>
    %505 = vector.shape_cast %504 : vector<128xf32> to vector<1x128xf32>
    %506 = arith.mulf %22, %502 : vector<16x128xf32>
    %cst_220 = arith.constant dense<0.000000e+00> : vector<128xf32>
    %507 = vector.multi_reduction <add>, %506, %cst_220 [0] : vector<16x128xf32> to vector<128xf32>
    %508 = vector.shape_cast %507 : vector<128xf32> to vector<1x128xf32>
    %509 = arith.addf %505, %508 : vector<1x128xf32>
    %510 = arith.mulf %8, %496 : vector<8x128xf32>
    %cst_221 = arith.constant dense<0.000000e+00> : vector<128xf32>
    %511 = vector.multi_reduction <add>, %510, %cst_221 [0] : vector<8x128xf32> to vector<128xf32>
    %512 = vector.shape_cast %511 : vector<128xf32> to vector<1x128xf32>
    %513 = arith.mulf %24, %502 : vector<16x128xf32>
    %cst_222 = arith.constant dense<0.000000e+00> : vector<128xf32>
    %514 = vector.multi_reduction <add>, %513, %cst_222 [0] : vector<16x128xf32> to vector<128xf32>
    %515 = vector.shape_cast %514 : vector<128xf32> to vector<1x128xf32>
    %516 = arith.addf %512, %515 : vector<1x128xf32>
    %517 = arith.mulf %10, %496 : vector<8x128xf32>
    %cst_223 = arith.constant dense<0.000000e+00> : vector<128xf32>
    %518 = vector.multi_reduction <add>, %517, %cst_223 [0] : vector<8x128xf32> to vector<128xf32>
    %519 = vector.shape_cast %518 : vector<128xf32> to vector<1x128xf32>
    %520 = arith.mulf %26, %502 : vector<16x128xf32>
    %cst_224 = arith.constant dense<0.000000e+00> : vector<128xf32>
    %521 = vector.multi_reduction <add>, %520, %cst_224 [0] : vector<16x128xf32> to vector<128xf32>
    %522 = vector.shape_cast %521 : vector<128xf32> to vector<1x128xf32>
    %523 = arith.addf %519, %522 : vector<1x128xf32>
    %524 = arith.mulf %12, %496 : vector<8x128xf32>
    %cst_225 = arith.constant dense<0.000000e+00> : vector<128xf32>
    %525 = vector.multi_reduction <add>, %524, %cst_225 [0] : vector<8x128xf32> to vector<128xf32>
    %526 = vector.shape_cast %525 : vector<128xf32> to vector<1x128xf32>
    %527 = arith.mulf %28, %502 : vector<16x128xf32>
    %cst_226 = arith.constant dense<0.000000e+00> : vector<128xf32>
    %528 = vector.multi_reduction <add>, %527, %cst_226 [0] : vector<16x128xf32> to vector<128xf32>
    %529 = vector.shape_cast %528 : vector<128xf32> to vector<1x128xf32>
    %530 = arith.addf %526, %529 : vector<1x128xf32>
    %531 = arith.mulf %14, %496 : vector<8x128xf32>
    %cst_227 = arith.constant dense<0.000000e+00> : vector<128xf32>
    %532 = vector.multi_reduction <add>, %531, %cst_227 [0] : vector<8x128xf32> to vector<128xf32>
    %533 = vector.shape_cast %532 : vector<128xf32> to vector<1x128xf32>
    %534 = arith.mulf %30, %502 : vector<16x128xf32>
    %cst_228 = arith.constant dense<0.000000e+00> : vector<128xf32>
    %535 = vector.multi_reduction <add>, %534, %cst_228 [0] : vector<16x128xf32> to vector<128xf32>
    %536 = vector.shape_cast %535 : vector<128xf32> to vector<1x128xf32>
    %537 = arith.addf %533, %536 : vector<1x128xf32>
    %538 = arith.mulf %16, %496 : vector<8x128xf32>
    %cst_229 = arith.constant dense<0.000000e+00> : vector<128xf32>
    %539 = vector.multi_reduction <add>, %538, %cst_229 [0] : vector<8x128xf32> to vector<128xf32>
    %540 = vector.shape_cast %539 : vector<128xf32> to vector<1x128xf32>
    %541 = arith.mulf %32, %502 : vector<16x128xf32>
    %cst_230 = arith.constant dense<0.000000e+00> : vector<128xf32>
    %542 = vector.multi_reduction <add>, %541, %cst_230 [0] : vector<16x128xf32> to vector<128xf32>
    %543 = vector.shape_cast %542 : vector<128xf32> to vector<1x128xf32>
    %544 = arith.addf %540, %543 : vector<1x128xf32>
    %545 = arith.mulf %18, %496 : vector<8x128xf32>
    %cst_231 = arith.constant dense<0.000000e+00> : vector<128xf32>
    %546 = vector.multi_reduction <add>, %545, %cst_231 [0] : vector<8x128xf32> to vector<128xf32>
    %547 = vector.shape_cast %546 : vector<128xf32> to vector<1x128xf32>
    %548 = arith.mulf %34, %502 : vector<16x128xf32>
    %cst_232 = arith.constant dense<0.000000e+00> : vector<128xf32>
    %549 = vector.multi_reduction <add>, %548, %cst_232 [0] : vector<16x128xf32> to vector<128xf32>
    %550 = vector.shape_cast %549 : vector<128xf32> to vector<1x128xf32>
    %551 = arith.addf %547, %550 : vector<1x128xf32>
    %552 = arith.mulf %20, %496 : vector<8x128xf32>
    %cst_233 = arith.constant dense<0.000000e+00> : vector<128xf32>
    %553 = vector.multi_reduction <add>, %552, %cst_233 [0] : vector<8x128xf32> to vector<128xf32>
    %554 = vector.shape_cast %553 : vector<128xf32> to vector<1x128xf32>
    %555 = arith.mulf %36, %502 : vector<16x128xf32>
    %cst_234 = arith.constant dense<0.000000e+00> : vector<128xf32>
    %556 = vector.multi_reduction <add>, %555, %cst_234 [0] : vector<16x128xf32> to vector<128xf32>
    %557 = vector.shape_cast %556 : vector<128xf32> to vector<1x128xf32>
    %558 = arith.addf %554, %557 : vector<1x128xf32>
    %559 = tpu.concatenate %509, %516, %523, %530, %537, %544, %551, %558 in 0 : vector<1x128xf32>, vector<1x128xf32>, vector<1x128xf32>, vector<1x128xf32>, vector<1x128xf32>, vector<1x128xf32>, vector<1x128xf32>, vector<1x128xf32> -> vector<8x128xf32>
    %cst_235 = arith.constant 0.000000e+00 : f32
    %560 = vector.broadcast %cst_235 : f32 to vector<8x128xf32>
    %561 = arith.maximumf %559, %560 : vector<8x128xf32>
    %c0_236 = arith.constant 0 : index
    %c7_237 = arith.constant 7 : index
    %562 = memref.load %arg5[%c0_236, %c7_237] : memref<10x10xf32, #tpu.memory_space<smem>>
    %563 = vector.broadcast %562 : f32 to vector<8x128xf32>
    %564 = arith.mulf %1, %563 : vector<8x128xf32>
    %c1_238 = arith.constant 1 : index
    %c7_239 = arith.constant 7 : index
    %565 = memref.load %arg5[%c1_238, %c7_239] : memref<10x10xf32, #tpu.memory_space<smem>>
    %566 = vector.broadcast %565 : f32 to vector<8x128xf32>
    %567 = arith.mulf %3, %566 : vector<8x128xf32>
    %568 = arith.addf %564, %567 : vector<8x128xf32>
    %c2_240 = arith.constant 2 : index
    %c7_241 = arith.constant 7 : index
    %569 = memref.load %arg5[%c2_240, %c7_241] : memref<10x10xf32, #tpu.memory_space<smem>>
    %570 = vector.broadcast %569 : f32 to vector<8x128xf32>
    %571 = arith.addf %568, %570 : vector<8x128xf32>
    %c3_242 = arith.constant 3 : index
    %c7_243 = arith.constant 7 : index
    %572 = memref.load %arg5[%c3_242, %c7_243] : memref<10x10xf32, #tpu.memory_space<smem>>
    %573 = vector.broadcast %572 : f32 to vector<16x128xf32>
    %574 = arith.mulf %4, %573 : vector<16x128xf32>
    %c4_244 = arith.constant 4 : index
    %c7_245 = arith.constant 7 : index
    %575 = memref.load %arg5[%c4_244, %c7_245] : memref<10x10xf32, #tpu.memory_space<smem>>
    %576 = vector.broadcast %575 : f32 to vector<16x128xf32>
    %577 = arith.addf %574, %576 : vector<16x128xf32>
    %578 = arith.mulf %6, %571 : vector<8x128xf32>
    %cst_246 = arith.constant dense<0.000000e+00> : vector<128xf32>
    %579 = vector.multi_reduction <add>, %578, %cst_246 [0] : vector<8x128xf32> to vector<128xf32>
    %580 = vector.shape_cast %579 : vector<128xf32> to vector<1x128xf32>
    %581 = arith.mulf %22, %577 : vector<16x128xf32>
    %cst_247 = arith.constant dense<0.000000e+00> : vector<128xf32>
    %582 = vector.multi_reduction <add>, %581, %cst_247 [0] : vector<16x128xf32> to vector<128xf32>
    %583 = vector.shape_cast %582 : vector<128xf32> to vector<1x128xf32>
    %584 = arith.addf %580, %583 : vector<1x128xf32>
    %585 = arith.mulf %8, %571 : vector<8x128xf32>
    %cst_248 = arith.constant dense<0.000000e+00> : vector<128xf32>
    %586 = vector.multi_reduction <add>, %585, %cst_248 [0] : vector<8x128xf32> to vector<128xf32>
    %587 = vector.shape_cast %586 : vector<128xf32> to vector<1x128xf32>
    %588 = arith.mulf %24, %577 : vector<16x128xf32>
    %cst_249 = arith.constant dense<0.000000e+00> : vector<128xf32>
    %589 = vector.multi_reduction <add>, %588, %cst_249 [0] : vector<16x128xf32> to vector<128xf32>
    %590 = vector.shape_cast %589 : vector<128xf32> to vector<1x128xf32>
    %591 = arith.addf %587, %590 : vector<1x128xf32>
    %592 = arith.mulf %10, %571 : vector<8x128xf32>
    %cst_250 = arith.constant dense<0.000000e+00> : vector<128xf32>
    %593 = vector.multi_reduction <add>, %592, %cst_250 [0] : vector<8x128xf32> to vector<128xf32>
    %594 = vector.shape_cast %593 : vector<128xf32> to vector<1x128xf32>
    %595 = arith.mulf %26, %577 : vector<16x128xf32>
    %cst_251 = arith.constant dense<0.000000e+00> : vector<128xf32>
    %596 = vector.multi_reduction <add>, %595, %cst_251 [0] : vector<16x128xf32> to vector<128xf32>
    %597 = vector.shape_cast %596 : vector<128xf32> to vector<1x128xf32>
    %598 = arith.addf %594, %597 : vector<1x128xf32>
    %599 = arith.mulf %12, %571 : vector<8x128xf32>
    %cst_252 = arith.constant dense<0.000000e+00> : vector<128xf32>
    %600 = vector.multi_reduction <add>, %599, %cst_252 [0] : vector<8x128xf32> to vector<128xf32>
    %601 = vector.shape_cast %600 : vector<128xf32> to vector<1x128xf32>
    %602 = arith.mulf %28, %577 : vector<16x128xf32>
    %cst_253 = arith.constant dense<0.000000e+00> : vector<128xf32>
    %603 = vector.multi_reduction <add>, %602, %cst_253 [0] : vector<16x128xf32> to vector<128xf32>
    %604 = vector.shape_cast %603 : vector<128xf32> to vector<1x128xf32>
    %605 = arith.addf %601, %604 : vector<1x128xf32>
    %606 = arith.mulf %14, %571 : vector<8x128xf32>
    %cst_254 = arith.constant dense<0.000000e+00> : vector<128xf32>
    %607 = vector.multi_reduction <add>, %606, %cst_254 [0] : vector<8x128xf32> to vector<128xf32>
    %608 = vector.shape_cast %607 : vector<128xf32> to vector<1x128xf32>
    %609 = arith.mulf %30, %577 : vector<16x128xf32>
    %cst_255 = arith.constant dense<0.000000e+00> : vector<128xf32>
    %610 = vector.multi_reduction <add>, %609, %cst_255 [0] : vector<16x128xf32> to vector<128xf32>
    %611 = vector.shape_cast %610 : vector<128xf32> to vector<1x128xf32>
    %612 = arith.addf %608, %611 : vector<1x128xf32>
    %613 = arith.mulf %16, %571 : vector<8x128xf32>
    %cst_256 = arith.constant dense<0.000000e+00> : vector<128xf32>
    %614 = vector.multi_reduction <add>, %613, %cst_256 [0] : vector<8x128xf32> to vector<128xf32>
    %615 = vector.shape_cast %614 : vector<128xf32> to vector<1x128xf32>
    %616 = arith.mulf %32, %577 : vector<16x128xf32>
    %cst_257 = arith.constant dense<0.000000e+00> : vector<128xf32>
    %617 = vector.multi_reduction <add>, %616, %cst_257 [0] : vector<16x128xf32> to vector<128xf32>
    %618 = vector.shape_cast %617 : vector<128xf32> to vector<1x128xf32>
    %619 = arith.addf %615, %618 : vector<1x128xf32>
    %620 = arith.mulf %18, %571 : vector<8x128xf32>
    %cst_258 = arith.constant dense<0.000000e+00> : vector<128xf32>
    %621 = vector.multi_reduction <add>, %620, %cst_258 [0] : vector<8x128xf32> to vector<128xf32>
    %622 = vector.shape_cast %621 : vector<128xf32> to vector<1x128xf32>
    %623 = arith.mulf %34, %577 : vector<16x128xf32>
    %cst_259 = arith.constant dense<0.000000e+00> : vector<128xf32>
    %624 = vector.multi_reduction <add>, %623, %cst_259 [0] : vector<16x128xf32> to vector<128xf32>
    %625 = vector.shape_cast %624 : vector<128xf32> to vector<1x128xf32>
    %626 = arith.addf %622, %625 : vector<1x128xf32>
    %627 = arith.mulf %20, %571 : vector<8x128xf32>
    %cst_260 = arith.constant dense<0.000000e+00> : vector<128xf32>
    %628 = vector.multi_reduction <add>, %627, %cst_260 [0] : vector<8x128xf32> to vector<128xf32>
    %629 = vector.shape_cast %628 : vector<128xf32> to vector<1x128xf32>
    %630 = arith.mulf %36, %577 : vector<16x128xf32>
    %cst_261 = arith.constant dense<0.000000e+00> : vector<128xf32>
    %631 = vector.multi_reduction <add>, %630, %cst_261 [0] : vector<16x128xf32> to vector<128xf32>
    %632 = vector.shape_cast %631 : vector<128xf32> to vector<1x128xf32>
    %633 = arith.addf %629, %632 : vector<1x128xf32>
    %634 = tpu.concatenate %584, %591, %598, %605, %612, %619, %626, %633 in 0 : vector<1x128xf32>, vector<1x128xf32>, vector<1x128xf32>, vector<1x128xf32>, vector<1x128xf32>, vector<1x128xf32>, vector<1x128xf32>, vector<1x128xf32> -> vector<8x128xf32>
    %cst_262 = arith.constant 0.000000e+00 : f32
    %635 = vector.broadcast %cst_262 : f32 to vector<8x128xf32>
    %636 = arith.maximumf %634, %635 : vector<8x128xf32>
    %c0_263 = arith.constant 0 : index
    %c8 = arith.constant 8 : index
    %637 = memref.load %arg5[%c0_263, %c8] : memref<10x10xf32, #tpu.memory_space<smem>>
    %638 = vector.broadcast %637 : f32 to vector<8x128xf32>
    %639 = arith.mulf %1, %638 : vector<8x128xf32>
    %c1_264 = arith.constant 1 : index
    %c8_265 = arith.constant 8 : index
    %640 = memref.load %arg5[%c1_264, %c8_265] : memref<10x10xf32, #tpu.memory_space<smem>>
    %641 = vector.broadcast %640 : f32 to vector<8x128xf32>
    %642 = arith.mulf %3, %641 : vector<8x128xf32>
    %643 = arith.addf %639, %642 : vector<8x128xf32>
    %c2_266 = arith.constant 2 : index
    %c8_267 = arith.constant 8 : index
    %644 = memref.load %arg5[%c2_266, %c8_267] : memref<10x10xf32, #tpu.memory_space<smem>>
    %645 = vector.broadcast %644 : f32 to vector<8x128xf32>
    %646 = arith.addf %643, %645 : vector<8x128xf32>
    %c3_268 = arith.constant 3 : index
    %c8_269 = arith.constant 8 : index
    %647 = memref.load %arg5[%c3_268, %c8_269] : memref<10x10xf32, #tpu.memory_space<smem>>
    %648 = vector.broadcast %647 : f32 to vector<16x128xf32>
    %649 = arith.mulf %4, %648 : vector<16x128xf32>
    %c4_270 = arith.constant 4 : index
    %c8_271 = arith.constant 8 : index
    %650 = memref.load %arg5[%c4_270, %c8_271] : memref<10x10xf32, #tpu.memory_space<smem>>
    %651 = vector.broadcast %650 : f32 to vector<16x128xf32>
    %652 = arith.addf %649, %651 : vector<16x128xf32>
    %653 = arith.mulf %6, %646 : vector<8x128xf32>
    %cst_272 = arith.constant dense<0.000000e+00> : vector<128xf32>
    %654 = vector.multi_reduction <add>, %653, %cst_272 [0] : vector<8x128xf32> to vector<128xf32>
    %655 = vector.shape_cast %654 : vector<128xf32> to vector<1x128xf32>
    %656 = arith.mulf %22, %652 : vector<16x128xf32>
    %cst_273 = arith.constant dense<0.000000e+00> : vector<128xf32>
    %657 = vector.multi_reduction <add>, %656, %cst_273 [0] : vector<16x128xf32> to vector<128xf32>
    %658 = vector.shape_cast %657 : vector<128xf32> to vector<1x128xf32>
    %659 = arith.addf %655, %658 : vector<1x128xf32>
    %660 = arith.mulf %8, %646 : vector<8x128xf32>
    %cst_274 = arith.constant dense<0.000000e+00> : vector<128xf32>
    %661 = vector.multi_reduction <add>, %660, %cst_274 [0] : vector<8x128xf32> to vector<128xf32>
    %662 = vector.shape_cast %661 : vector<128xf32> to vector<1x128xf32>
    %663 = arith.mulf %24, %652 : vector<16x128xf32>
    %cst_275 = arith.constant dense<0.000000e+00> : vector<128xf32>
    %664 = vector.multi_reduction <add>, %663, %cst_275 [0] : vector<16x128xf32> to vector<128xf32>
    %665 = vector.shape_cast %664 : vector<128xf32> to vector<1x128xf32>
    %666 = arith.addf %662, %665 : vector<1x128xf32>
    %667 = arith.mulf %10, %646 : vector<8x128xf32>
    %cst_276 = arith.constant dense<0.000000e+00> : vector<128xf32>
    %668 = vector.multi_reduction <add>, %667, %cst_276 [0] : vector<8x128xf32> to vector<128xf32>
    %669 = vector.shape_cast %668 : vector<128xf32> to vector<1x128xf32>
    %670 = arith.mulf %26, %652 : vector<16x128xf32>
    %cst_277 = arith.constant dense<0.000000e+00> : vector<128xf32>
    %671 = vector.multi_reduction <add>, %670, %cst_277 [0] : vector<16x128xf32> to vector<128xf32>
    %672 = vector.shape_cast %671 : vector<128xf32> to vector<1x128xf32>
    %673 = arith.addf %669, %672 : vector<1x128xf32>
    %674 = arith.mulf %12, %646 : vector<8x128xf32>
    %cst_278 = arith.constant dense<0.000000e+00> : vector<128xf32>
    %675 = vector.multi_reduction <add>, %674, %cst_278 [0] : vector<8x128xf32> to vector<128xf32>
    %676 = vector.shape_cast %675 : vector<128xf32> to vector<1x128xf32>
    %677 = arith.mulf %28, %652 : vector<16x128xf32>
    %cst_279 = arith.constant dense<0.000000e+00> : vector<128xf32>
    %678 = vector.multi_reduction <add>, %677, %cst_279 [0] : vector<16x128xf32> to vector<128xf32>
    %679 = vector.shape_cast %678 : vector<128xf32> to vector<1x128xf32>
    %680 = arith.addf %676, %679 : vector<1x128xf32>
    %681 = arith.mulf %14, %646 : vector<8x128xf32>
    %cst_280 = arith.constant dense<0.000000e+00> : vector<128xf32>
    %682 = vector.multi_reduction <add>, %681, %cst_280 [0] : vector<8x128xf32> to vector<128xf32>
    %683 = vector.shape_cast %682 : vector<128xf32> to vector<1x128xf32>
    %684 = arith.mulf %30, %652 : vector<16x128xf32>
    %cst_281 = arith.constant dense<0.000000e+00> : vector<128xf32>
    %685 = vector.multi_reduction <add>, %684, %cst_281 [0] : vector<16x128xf32> to vector<128xf32>
    %686 = vector.shape_cast %685 : vector<128xf32> to vector<1x128xf32>
    %687 = arith.addf %683, %686 : vector<1x128xf32>
    %688 = arith.mulf %16, %646 : vector<8x128xf32>
    %cst_282 = arith.constant dense<0.000000e+00> : vector<128xf32>
    %689 = vector.multi_reduction <add>, %688, %cst_282 [0] : vector<8x128xf32> to vector<128xf32>
    %690 = vector.shape_cast %689 : vector<128xf32> to vector<1x128xf32>
    %691 = arith.mulf %32, %652 : vector<16x128xf32>
    %cst_283 = arith.constant dense<0.000000e+00> : vector<128xf32>
    %692 = vector.multi_reduction <add>, %691, %cst_283 [0] : vector<16x128xf32> to vector<128xf32>
    %693 = vector.shape_cast %692 : vector<128xf32> to vector<1x128xf32>
    %694 = arith.addf %690, %693 : vector<1x128xf32>
    %695 = arith.mulf %18, %646 : vector<8x128xf32>
    %cst_284 = arith.constant dense<0.000000e+00> : vector<128xf32>
    %696 = vector.multi_reduction <add>, %695, %cst_284 [0] : vector<8x128xf32> to vector<128xf32>
    %697 = vector.shape_cast %696 : vector<128xf32> to vector<1x128xf32>
    %698 = arith.mulf %34, %652 : vector<16x128xf32>
    %cst_285 = arith.constant dense<0.000000e+00> : vector<128xf32>
    %699 = vector.multi_reduction <add>, %698, %cst_285 [0] : vector<16x128xf32> to vector<128xf32>
    %700 = vector.shape_cast %699 : vector<128xf32> to vector<1x128xf32>
    %701 = arith.addf %697, %700 : vector<1x128xf32>
    %702 = arith.mulf %20, %646 : vector<8x128xf32>
    %cst_286 = arith.constant dense<0.000000e+00> : vector<128xf32>
    %703 = vector.multi_reduction <add>, %702, %cst_286 [0] : vector<8x128xf32> to vector<128xf32>
    %704 = vector.shape_cast %703 : vector<128xf32> to vector<1x128xf32>
    %705 = arith.mulf %36, %652 : vector<16x128xf32>
    %cst_287 = arith.constant dense<0.000000e+00> : vector<128xf32>
    %706 = vector.multi_reduction <add>, %705, %cst_287 [0] : vector<16x128xf32> to vector<128xf32>
    %707 = vector.shape_cast %706 : vector<128xf32> to vector<1x128xf32>
    %708 = arith.addf %704, %707 : vector<1x128xf32>
    %709 = tpu.concatenate %659, %666, %673, %680, %687, %694, %701, %708 in 0 : vector<1x128xf32>, vector<1x128xf32>, vector<1x128xf32>, vector<1x128xf32>, vector<1x128xf32>, vector<1x128xf32>, vector<1x128xf32>, vector<1x128xf32> -> vector<8x128xf32>
    %cst_288 = arith.constant 0.000000e+00 : f32
    %710 = vector.broadcast %cst_288 : f32 to vector<8x128xf32>
    %711 = arith.maximumf %709, %710 : vector<8x128xf32>
    %c0_289 = arith.constant 0 : index
    %c9 = arith.constant 9 : index
    %712 = memref.load %arg5[%c0_289, %c9] : memref<10x10xf32, #tpu.memory_space<smem>>
    %713 = vector.broadcast %712 : f32 to vector<8x128xf32>
    %714 = arith.mulf %1, %713 : vector<8x128xf32>
    %c1_290 = arith.constant 1 : index
    %c9_291 = arith.constant 9 : index
    %715 = memref.load %arg5[%c1_290, %c9_291] : memref<10x10xf32, #tpu.memory_space<smem>>
    %716 = vector.broadcast %715 : f32 to vector<8x128xf32>
    %717 = arith.mulf %3, %716 : vector<8x128xf32>
    %718 = arith.addf %714, %717 : vector<8x128xf32>
    %c2_292 = arith.constant 2 : index
    %c9_293 = arith.constant 9 : index
    %719 = memref.load %arg5[%c2_292, %c9_293] : memref<10x10xf32, #tpu.memory_space<smem>>
    %720 = vector.broadcast %719 : f32 to vector<8x128xf32>
    %721 = arith.addf %718, %720 : vector<8x128xf32>
    %c3_294 = arith.constant 3 : index
    %c9_295 = arith.constant 9 : index
    %722 = memref.load %arg5[%c3_294, %c9_295] : memref<10x10xf32, #tpu.memory_space<smem>>
    %723 = vector.broadcast %722 : f32 to vector<16x128xf32>
    %724 = arith.mulf %4, %723 : vector<16x128xf32>
    %c4_296 = arith.constant 4 : index
    %c9_297 = arith.constant 9 : index
    %725 = memref.load %arg5[%c4_296, %c9_297] : memref<10x10xf32, #tpu.memory_space<smem>>
    %726 = vector.broadcast %725 : f32 to vector<16x128xf32>
    %727 = arith.addf %724, %726 : vector<16x128xf32>
    %728 = arith.mulf %6, %721 : vector<8x128xf32>
    %cst_298 = arith.constant dense<0.000000e+00> : vector<128xf32>
    %729 = vector.multi_reduction <add>, %728, %cst_298 [0] : vector<8x128xf32> to vector<128xf32>
    %730 = vector.shape_cast %729 : vector<128xf32> to vector<1x128xf32>
    %731 = arith.mulf %22, %727 : vector<16x128xf32>
    %cst_299 = arith.constant dense<0.000000e+00> : vector<128xf32>
    %732 = vector.multi_reduction <add>, %731, %cst_299 [0] : vector<16x128xf32> to vector<128xf32>
    %733 = vector.shape_cast %732 : vector<128xf32> to vector<1x128xf32>
    %734 = arith.addf %730, %733 : vector<1x128xf32>
    %735 = arith.mulf %8, %721 : vector<8x128xf32>
    %cst_300 = arith.constant dense<0.000000e+00> : vector<128xf32>
    %736 = vector.multi_reduction <add>, %735, %cst_300 [0] : vector<8x128xf32> to vector<128xf32>
    %737 = vector.shape_cast %736 : vector<128xf32> to vector<1x128xf32>
    %738 = arith.mulf %24, %727 : vector<16x128xf32>
    %cst_301 = arith.constant dense<0.000000e+00> : vector<128xf32>
    %739 = vector.multi_reduction <add>, %738, %cst_301 [0] : vector<16x128xf32> to vector<128xf32>
    %740 = vector.shape_cast %739 : vector<128xf32> to vector<1x128xf32>
    %741 = arith.addf %737, %740 : vector<1x128xf32>
    %742 = arith.mulf %10, %721 : vector<8x128xf32>
    %cst_302 = arith.constant dense<0.000000e+00> : vector<128xf32>
    %743 = vector.multi_reduction <add>, %742, %cst_302 [0] : vector<8x128xf32> to vector<128xf32>
    %744 = vector.shape_cast %743 : vector<128xf32> to vector<1x128xf32>
    %745 = arith.mulf %26, %727 : vector<16x128xf32>
    %cst_303 = arith.constant dense<0.000000e+00> : vector<128xf32>
    %746 = vector.multi_reduction <add>, %745, %cst_303 [0] : vector<16x128xf32> to vector<128xf32>
    %747 = vector.shape_cast %746 : vector<128xf32> to vector<1x128xf32>
    %748 = arith.addf %744, %747 : vector<1x128xf32>
    %749 = arith.mulf %12, %721 : vector<8x128xf32>
    %cst_304 = arith.constant dense<0.000000e+00> : vector<128xf32>
    %750 = vector.multi_reduction <add>, %749, %cst_304 [0] : vector<8x128xf32> to vector<128xf32>
    %751 = vector.shape_cast %750 : vector<128xf32> to vector<1x128xf32>
    %752 = arith.mulf %28, %727 : vector<16x128xf32>
    %cst_305 = arith.constant dense<0.000000e+00> : vector<128xf32>
    %753 = vector.multi_reduction <add>, %752, %cst_305 [0] : vector<16x128xf32> to vector<128xf32>
    %754 = vector.shape_cast %753 : vector<128xf32> to vector<1x128xf32>
    %755 = arith.addf %751, %754 : vector<1x128xf32>
    %756 = arith.mulf %14, %721 : vector<8x128xf32>
    %cst_306 = arith.constant dense<0.000000e+00> : vector<128xf32>
    %757 = vector.multi_reduction <add>, %756, %cst_306 [0] : vector<8x128xf32> to vector<128xf32>
    %758 = vector.shape_cast %757 : vector<128xf32> to vector<1x128xf32>
    %759 = arith.mulf %30, %727 : vector<16x128xf32>
    %cst_307 = arith.constant dense<0.000000e+00> : vector<128xf32>
    %760 = vector.multi_reduction <add>, %759, %cst_307 [0] : vector<16x128xf32> to vector<128xf32>
    %761 = vector.shape_cast %760 : vector<128xf32> to vector<1x128xf32>
    %762 = arith.addf %758, %761 : vector<1x128xf32>
    %763 = arith.mulf %16, %721 : vector<8x128xf32>
    %cst_308 = arith.constant dense<0.000000e+00> : vector<128xf32>
    %764 = vector.multi_reduction <add>, %763, %cst_308 [0] : vector<8x128xf32> to vector<128xf32>
    %765 = vector.shape_cast %764 : vector<128xf32> to vector<1x128xf32>
    %766 = arith.mulf %32, %727 : vector<16x128xf32>
    %cst_309 = arith.constant dense<0.000000e+00> : vector<128xf32>
    %767 = vector.multi_reduction <add>, %766, %cst_309 [0] : vector<16x128xf32> to vector<128xf32>
    %768 = vector.shape_cast %767 : vector<128xf32> to vector<1x128xf32>
    %769 = arith.addf %765, %768 : vector<1x128xf32>
    %770 = arith.mulf %18, %721 : vector<8x128xf32>
    %cst_310 = arith.constant dense<0.000000e+00> : vector<128xf32>
    %771 = vector.multi_reduction <add>, %770, %cst_310 [0] : vector<8x128xf32> to vector<128xf32>
    %772 = vector.shape_cast %771 : vector<128xf32> to vector<1x128xf32>
    %773 = arith.mulf %34, %727 : vector<16x128xf32>
    %cst_311 = arith.constant dense<0.000000e+00> : vector<128xf32>
    %774 = vector.multi_reduction <add>, %773, %cst_311 [0] : vector<16x128xf32> to vector<128xf32>
    %775 = vector.shape_cast %774 : vector<128xf32> to vector<1x128xf32>
    %776 = arith.addf %772, %775 : vector<1x128xf32>
    %777 = arith.mulf %20, %721 : vector<8x128xf32>
    %cst_312 = arith.constant dense<0.000000e+00> : vector<128xf32>
    %778 = vector.multi_reduction <add>, %777, %cst_312 [0] : vector<8x128xf32> to vector<128xf32>
    %779 = vector.shape_cast %778 : vector<128xf32> to vector<1x128xf32>
    %780 = arith.mulf %36, %727 : vector<16x128xf32>
    %cst_313 = arith.constant dense<0.000000e+00> : vector<128xf32>
    %781 = vector.multi_reduction <add>, %780, %cst_313 [0] : vector<16x128xf32> to vector<128xf32>
    %782 = vector.shape_cast %781 : vector<128xf32> to vector<1x128xf32>
    %783 = arith.addf %779, %782 : vector<1x128xf32>
    %784 = tpu.concatenate %734, %741, %748, %755, %762, %769, %776, %783 in 0 : vector<1x128xf32>, vector<1x128xf32>, vector<1x128xf32>, vector<1x128xf32>, vector<1x128xf32>, vector<1x128xf32>, vector<1x128xf32>, vector<1x128xf32> -> vector<8x128xf32>
    %cst_314 = arith.constant 0.000000e+00 : f32
    %785 = vector.broadcast %cst_314 : f32 to vector<8x128xf32>
    %786 = arith.maximumf %784, %785 : vector<8x128xf32>
    %c5_315 = arith.constant 5 : index
    %c0_316 = arith.constant 0 : index
    %787 = memref.load %arg5[%c5_315, %c0_316] : memref<10x10xf32, #tpu.memory_space<smem>>
    %788 = vector.broadcast %787 : f32 to vector<8x128xf32>
    %789 = arith.mulf %1, %788 : vector<8x128xf32>
    %c6_317 = arith.constant 6 : index
    %c0_318 = arith.constant 0 : index
    %790 = memref.load %arg5[%c6_317, %c0_318] : memref<10x10xf32, #tpu.memory_space<smem>>
    %791 = vector.broadcast %790 : f32 to vector<8x128xf32>
    %792 = arith.mulf %3, %791 : vector<8x128xf32>
    %793 = arith.addf %789, %792 : vector<8x128xf32>
    %c7_319 = arith.constant 7 : index
    %c0_320 = arith.constant 0 : index
    %794 = memref.load %arg5[%c7_319, %c0_320] : memref<10x10xf32, #tpu.memory_space<smem>>
    %795 = vector.broadcast %794 : f32 to vector<8x128xf32>
    %796 = arith.addf %793, %795 : vector<8x128xf32>
    %c8_321 = arith.constant 8 : index
    %c0_322 = arith.constant 0 : index
    %797 = memref.load %arg5[%c8_321, %c0_322] : memref<10x10xf32, #tpu.memory_space<smem>>
    %798 = vector.broadcast %797 : f32 to vector<16x128xf32>
    %799 = arith.mulf %4, %798 : vector<16x128xf32>
    %c9_323 = arith.constant 9 : index
    %c0_324 = arith.constant 0 : index
    %800 = memref.load %arg5[%c9_323, %c0_324] : memref<10x10xf32, #tpu.memory_space<smem>>
    %801 = vector.broadcast %800 : f32 to vector<16x128xf32>
    %802 = arith.addf %799, %801 : vector<16x128xf32>
    %803 = vector.extract_strided_slice %796 {offsets = [0, 0], sizes = [1, 128], strides = [1, 1]} : vector<8x128xf32> to vector<1x128xf32>
    %804 = vector.broadcast %803 : vector<1x128xf32> to vector<16x128xf32>
    %805 = arith.mulf %22, %804 : vector<16x128xf32>
    %806 = arith.addf %802, %805 : vector<16x128xf32>
    %807 = vector.extract_strided_slice %796 {offsets = [1, 0], sizes = [1, 128], strides = [1, 1]} : vector<8x128xf32> to vector<1x128xf32>
    %808 = vector.broadcast %807 : vector<1x128xf32> to vector<16x128xf32>
    %809 = arith.mulf %24, %808 : vector<16x128xf32>
    %810 = arith.addf %806, %809 : vector<16x128xf32>
    %811 = vector.extract_strided_slice %796 {offsets = [2, 0], sizes = [1, 128], strides = [1, 1]} : vector<8x128xf32> to vector<1x128xf32>
    %812 = vector.broadcast %811 : vector<1x128xf32> to vector<16x128xf32>
    %813 = arith.mulf %26, %812 : vector<16x128xf32>
    %814 = arith.addf %810, %813 : vector<16x128xf32>
    %815 = vector.extract_strided_slice %796 {offsets = [3, 0], sizes = [1, 128], strides = [1, 1]} : vector<8x128xf32> to vector<1x128xf32>
    %816 = vector.broadcast %815 : vector<1x128xf32> to vector<16x128xf32>
    %817 = arith.mulf %28, %816 : vector<16x128xf32>
    %818 = arith.addf %814, %817 : vector<16x128xf32>
    %819 = vector.extract_strided_slice %796 {offsets = [4, 0], sizes = [1, 128], strides = [1, 1]} : vector<8x128xf32> to vector<1x128xf32>
    %820 = vector.broadcast %819 : vector<1x128xf32> to vector<16x128xf32>
    %821 = arith.mulf %30, %820 : vector<16x128xf32>
    %822 = arith.addf %818, %821 : vector<16x128xf32>
    %823 = vector.extract_strided_slice %796 {offsets = [5, 0], sizes = [1, 128], strides = [1, 1]} : vector<8x128xf32> to vector<1x128xf32>
    %824 = vector.broadcast %823 : vector<1x128xf32> to vector<16x128xf32>
    %825 = arith.mulf %32, %824 : vector<16x128xf32>
    %826 = arith.addf %822, %825 : vector<16x128xf32>
    %827 = vector.extract_strided_slice %796 {offsets = [6, 0], sizes = [1, 128], strides = [1, 1]} : vector<8x128xf32> to vector<1x128xf32>
    %828 = vector.broadcast %827 : vector<1x128xf32> to vector<16x128xf32>
    %829 = arith.mulf %34, %828 : vector<16x128xf32>
    %830 = arith.addf %826, %829 : vector<16x128xf32>
    %831 = vector.extract_strided_slice %796 {offsets = [7, 0], sizes = [1, 128], strides = [1, 1]} : vector<8x128xf32> to vector<1x128xf32>
    %832 = vector.broadcast %831 : vector<1x128xf32> to vector<16x128xf32>
    %833 = arith.mulf %36, %832 : vector<16x128xf32>
    %834 = arith.addf %830, %833 : vector<16x128xf32>
    %cst_325 = arith.constant 0.000000e+00 : f32
    %835 = vector.broadcast %cst_325 : f32 to vector<16x128xf32>
    %836 = arith.maximumf %834, %835 : vector<16x128xf32>
    %c5_326 = arith.constant 5 : index
    %c1_327 = arith.constant 1 : index
    %837 = memref.load %arg5[%c5_326, %c1_327] : memref<10x10xf32, #tpu.memory_space<smem>>
    %838 = vector.broadcast %837 : f32 to vector<8x128xf32>
    %839 = arith.mulf %1, %838 : vector<8x128xf32>
    %c6_328 = arith.constant 6 : index
    %c1_329 = arith.constant 1 : index
    %840 = memref.load %arg5[%c6_328, %c1_329] : memref<10x10xf32, #tpu.memory_space<smem>>
    %841 = vector.broadcast %840 : f32 to vector<8x128xf32>
    %842 = arith.mulf %3, %841 : vector<8x128xf32>
    %843 = arith.addf %839, %842 : vector<8x128xf32>
    %c7_330 = arith.constant 7 : index
    %c1_331 = arith.constant 1 : index
    %844 = memref.load %arg5[%c7_330, %c1_331] : memref<10x10xf32, #tpu.memory_space<smem>>
    %845 = vector.broadcast %844 : f32 to vector<8x128xf32>
    %846 = arith.addf %843, %845 : vector<8x128xf32>
    %c8_332 = arith.constant 8 : index
    %c1_333 = arith.constant 1 : index
    %847 = memref.load %arg5[%c8_332, %c1_333] : memref<10x10xf32, #tpu.memory_space<smem>>
    %848 = vector.broadcast %847 : f32 to vector<16x128xf32>
    %849 = arith.mulf %4, %848 : vector<16x128xf32>
    %c9_334 = arith.constant 9 : index
    %c1_335 = arith.constant 1 : index
    %850 = memref.load %arg5[%c9_334, %c1_335] : memref<10x10xf32, #tpu.memory_space<smem>>
    %851 = vector.broadcast %850 : f32 to vector<16x128xf32>
    %852 = arith.addf %849, %851 : vector<16x128xf32>
    %853 = vector.extract_strided_slice %846 {offsets = [0, 0], sizes = [1, 128], strides = [1, 1]} : vector<8x128xf32> to vector<1x128xf32>
    %854 = vector.broadcast %853 : vector<1x128xf32> to vector<16x128xf32>
    %855 = arith.mulf %22, %854 : vector<16x128xf32>
    %856 = arith.addf %852, %855 : vector<16x128xf32>
    %857 = vector.extract_strided_slice %846 {offsets = [1, 0], sizes = [1, 128], strides = [1, 1]} : vector<8x128xf32> to vector<1x128xf32>
    %858 = vector.broadcast %857 : vector<1x128xf32> to vector<16x128xf32>
    %859 = arith.mulf %24, %858 : vector<16x128xf32>
    %860 = arith.addf %856, %859 : vector<16x128xf32>
    %861 = vector.extract_strided_slice %846 {offsets = [2, 0], sizes = [1, 128], strides = [1, 1]} : vector<8x128xf32> to vector<1x128xf32>
    %862 = vector.broadcast %861 : vector<1x128xf32> to vector<16x128xf32>
    %863 = arith.mulf %26, %862 : vector<16x128xf32>
    %864 = arith.addf %860, %863 : vector<16x128xf32>
    %865 = vector.extract_strided_slice %846 {offsets = [3, 0], sizes = [1, 128], strides = [1, 1]} : vector<8x128xf32> to vector<1x128xf32>
    %866 = vector.broadcast %865 : vector<1x128xf32> to vector<16x128xf32>
    %867 = arith.mulf %28, %866 : vector<16x128xf32>
    %868 = arith.addf %864, %867 : vector<16x128xf32>
    %869 = vector.extract_strided_slice %846 {offsets = [4, 0], sizes = [1, 128], strides = [1, 1]} : vector<8x128xf32> to vector<1x128xf32>
    %870 = vector.broadcast %869 : vector<1x128xf32> to vector<16x128xf32>
    %871 = arith.mulf %30, %870 : vector<16x128xf32>
    %872 = arith.addf %868, %871 : vector<16x128xf32>
    %873 = vector.extract_strided_slice %846 {offsets = [5, 0], sizes = [1, 128], strides = [1, 1]} : vector<8x128xf32> to vector<1x128xf32>
    %874 = vector.broadcast %873 : vector<1x128xf32> to vector<16x128xf32>
    %875 = arith.mulf %32, %874 : vector<16x128xf32>
    %876 = arith.addf %872, %875 : vector<16x128xf32>
    %877 = vector.extract_strided_slice %846 {offsets = [6, 0], sizes = [1, 128], strides = [1, 1]} : vector<8x128xf32> to vector<1x128xf32>
    %878 = vector.broadcast %877 : vector<1x128xf32> to vector<16x128xf32>
    %879 = arith.mulf %34, %878 : vector<16x128xf32>
    %880 = arith.addf %876, %879 : vector<16x128xf32>
    %881 = vector.extract_strided_slice %846 {offsets = [7, 0], sizes = [1, 128], strides = [1, 1]} : vector<8x128xf32> to vector<1x128xf32>
    %882 = vector.broadcast %881 : vector<1x128xf32> to vector<16x128xf32>
    %883 = arith.mulf %36, %882 : vector<16x128xf32>
    %884 = arith.addf %880, %883 : vector<16x128xf32>
    %cst_336 = arith.constant 0.000000e+00 : f32
    %885 = vector.broadcast %cst_336 : f32 to vector<16x128xf32>
    %886 = arith.maximumf %884, %885 : vector<16x128xf32>
    %c5_337 = arith.constant 5 : index
    %c2_338 = arith.constant 2 : index
    %887 = memref.load %arg5[%c5_337, %c2_338] : memref<10x10xf32, #tpu.memory_space<smem>>
    %888 = vector.broadcast %887 : f32 to vector<8x128xf32>
    %889 = arith.mulf %1, %888 : vector<8x128xf32>
    %c6_339 = arith.constant 6 : index
    %c2_340 = arith.constant 2 : index
    %890 = memref.load %arg5[%c6_339, %c2_340] : memref<10x10xf32, #tpu.memory_space<smem>>
    %891 = vector.broadcast %890 : f32 to vector<8x128xf32>
    %892 = arith.mulf %3, %891 : vector<8x128xf32>
    %893 = arith.addf %889, %892 : vector<8x128xf32>
    %c7_341 = arith.constant 7 : index
    %c2_342 = arith.constant 2 : index
    %894 = memref.load %arg5[%c7_341, %c2_342] : memref<10x10xf32, #tpu.memory_space<smem>>
    %895 = vector.broadcast %894 : f32 to vector<8x128xf32>
    %896 = arith.addf %893, %895 : vector<8x128xf32>
    %c8_343 = arith.constant 8 : index
    %c2_344 = arith.constant 2 : index
    %897 = memref.load %arg5[%c8_343, %c2_344] : memref<10x10xf32, #tpu.memory_space<smem>>
    %898 = vector.broadcast %897 : f32 to vector<16x128xf32>
    %899 = arith.mulf %4, %898 : vector<16x128xf32>
    %c9_345 = arith.constant 9 : index
    %c2_346 = arith.constant 2 : index
    %900 = memref.load %arg5[%c9_345, %c2_346] : memref<10x10xf32, #tpu.memory_space<smem>>
    %901 = vector.broadcast %900 : f32 to vector<16x128xf32>
    %902 = arith.addf %899, %901 : vector<16x128xf32>
    %903 = vector.extract_strided_slice %896 {offsets = [0, 0], sizes = [1, 128], strides = [1, 1]} : vector<8x128xf32> to vector<1x128xf32>
    %904 = vector.broadcast %903 : vector<1x128xf32> to vector<16x128xf32>
    %905 = arith.mulf %22, %904 : vector<16x128xf32>
    %906 = arith.addf %902, %905 : vector<16x128xf32>
    %907 = vector.extract_strided_slice %896 {offsets = [1, 0], sizes = [1, 128], strides = [1, 1]} : vector<8x128xf32> to vector<1x128xf32>
    %908 = vector.broadcast %907 : vector<1x128xf32> to vector<16x128xf32>
    %909 = arith.mulf %24, %908 : vector<16x128xf32>
    %910 = arith.addf %906, %909 : vector<16x128xf32>
    %911 = vector.extract_strided_slice %896 {offsets = [2, 0], sizes = [1, 128], strides = [1, 1]} : vector<8x128xf32> to vector<1x128xf32>
    %912 = vector.broadcast %911 : vector<1x128xf32> to vector<16x128xf32>
    %913 = arith.mulf %26, %912 : vector<16x128xf32>
    %914 = arith.addf %910, %913 : vector<16x128xf32>
    %915 = vector.extract_strided_slice %896 {offsets = [3, 0], sizes = [1, 128], strides = [1, 1]} : vector<8x128xf32> to vector<1x128xf32>
    %916 = vector.broadcast %915 : vector<1x128xf32> to vector<16x128xf32>
    %917 = arith.mulf %28, %916 : vector<16x128xf32>
    %918 = arith.addf %914, %917 : vector<16x128xf32>
    %919 = vector.extract_strided_slice %896 {offsets = [4, 0], sizes = [1, 128], strides = [1, 1]} : vector<8x128xf32> to vector<1x128xf32>
    %920 = vector.broadcast %919 : vector<1x128xf32> to vector<16x128xf32>
    %921 = arith.mulf %30, %920 : vector<16x128xf32>
    %922 = arith.addf %918, %921 : vector<16x128xf32>
    %923 = vector.extract_strided_slice %896 {offsets = [5, 0], sizes = [1, 128], strides = [1, 1]} : vector<8x128xf32> to vector<1x128xf32>
    %924 = vector.broadcast %923 : vector<1x128xf32> to vector<16x128xf32>
    %925 = arith.mulf %32, %924 : vector<16x128xf32>
    %926 = arith.addf %922, %925 : vector<16x128xf32>
    %927 = vector.extract_strided_slice %896 {offsets = [6, 0], sizes = [1, 128], strides = [1, 1]} : vector<8x128xf32> to vector<1x128xf32>
    %928 = vector.broadcast %927 : vector<1x128xf32> to vector<16x128xf32>
    %929 = arith.mulf %34, %928 : vector<16x128xf32>
    %930 = arith.addf %926, %929 : vector<16x128xf32>
    %931 = vector.extract_strided_slice %896 {offsets = [7, 0], sizes = [1, 128], strides = [1, 1]} : vector<8x128xf32> to vector<1x128xf32>
    %932 = vector.broadcast %931 : vector<1x128xf32> to vector<16x128xf32>
    %933 = arith.mulf %36, %932 : vector<16x128xf32>
    %934 = arith.addf %930, %933 : vector<16x128xf32>
    %cst_347 = arith.constant 0.000000e+00 : f32
    %935 = vector.broadcast %cst_347 : f32 to vector<16x128xf32>
    %936 = arith.maximumf %934, %935 : vector<16x128xf32>
    %c5_348 = arith.constant 5 : index
    %c3_349 = arith.constant 3 : index
    %937 = memref.load %arg5[%c5_348, %c3_349] : memref<10x10xf32, #tpu.memory_space<smem>>
    %938 = vector.broadcast %937 : f32 to vector<8x128xf32>
    %939 = arith.mulf %1, %938 : vector<8x128xf32>
    %c6_350 = arith.constant 6 : index
    %c3_351 = arith.constant 3 : index
    %940 = memref.load %arg5[%c6_350, %c3_351] : memref<10x10xf32, #tpu.memory_space<smem>>
    %941 = vector.broadcast %940 : f32 to vector<8x128xf32>
    %942 = arith.mulf %3, %941 : vector<8x128xf32>
    %943 = arith.addf %939, %942 : vector<8x128xf32>
    %c7_352 = arith.constant 7 : index
    %c3_353 = arith.constant 3 : index
    %944 = memref.load %arg5[%c7_352, %c3_353] : memref<10x10xf32, #tpu.memory_space<smem>>
    %945 = vector.broadcast %944 : f32 to vector<8x128xf32>
    %946 = arith.addf %943, %945 : vector<8x128xf32>
    %c8_354 = arith.constant 8 : index
    %c3_355 = arith.constant 3 : index
    %947 = memref.load %arg5[%c8_354, %c3_355] : memref<10x10xf32, #tpu.memory_space<smem>>
    %948 = vector.broadcast %947 : f32 to vector<16x128xf32>
    %949 = arith.mulf %4, %948 : vector<16x128xf32>
    %c9_356 = arith.constant 9 : index
    %c3_357 = arith.constant 3 : index
    %950 = memref.load %arg5[%c9_356, %c3_357] : memref<10x10xf32, #tpu.memory_space<smem>>
    %951 = vector.broadcast %950 : f32 to vector<16x128xf32>
    %952 = arith.addf %949, %951 : vector<16x128xf32>
    %953 = vector.extract_strided_slice %946 {offsets = [0, 0], sizes = [1, 128], strides = [1, 1]} : vector<8x128xf32> to vector<1x128xf32>
    %954 = vector.broadcast %953 : vector<1x128xf32> to vector<16x128xf32>
    %955 = arith.mulf %22, %954 : vector<16x128xf32>
    %956 = arith.addf %952, %955 : vector<16x128xf32>
    %957 = vector.extract_strided_slice %946 {offsets = [1, 0], sizes = [1, 128], strides = [1, 1]} : vector<8x128xf32> to vector<1x128xf32>
    %958 = vector.broadcast %957 : vector<1x128xf32> to vector<16x128xf32>
    %959 = arith.mulf %24, %958 : vector<16x128xf32>
    %960 = arith.addf %956, %959 : vector<16x128xf32>
    %961 = vector.extract_strided_slice %946 {offsets = [2, 0], sizes = [1, 128], strides = [1, 1]} : vector<8x128xf32> to vector<1x128xf32>
    %962 = vector.broadcast %961 : vector<1x128xf32> to vector<16x128xf32>
    %963 = arith.mulf %26, %962 : vector<16x128xf32>
    %964 = arith.addf %960, %963 : vector<16x128xf32>
    %965 = vector.extract_strided_slice %946 {offsets = [3, 0], sizes = [1, 128], strides = [1, 1]} : vector<8x128xf32> to vector<1x128xf32>
    %966 = vector.broadcast %965 : vector<1x128xf32> to vector<16x128xf32>
    %967 = arith.mulf %28, %966 : vector<16x128xf32>
    %968 = arith.addf %964, %967 : vector<16x128xf32>
    %969 = vector.extract_strided_slice %946 {offsets = [4, 0], sizes = [1, 128], strides = [1, 1]} : vector<8x128xf32> to vector<1x128xf32>
    %970 = vector.broadcast %969 : vector<1x128xf32> to vector<16x128xf32>
    %971 = arith.mulf %30, %970 : vector<16x128xf32>
    %972 = arith.addf %968, %971 : vector<16x128xf32>
    %973 = vector.extract_strided_slice %946 {offsets = [5, 0], sizes = [1, 128], strides = [1, 1]} : vector<8x128xf32> to vector<1x128xf32>
    %974 = vector.broadcast %973 : vector<1x128xf32> to vector<16x128xf32>
    %975 = arith.mulf %32, %974 : vector<16x128xf32>
    %976 = arith.addf %972, %975 : vector<16x128xf32>
    %977 = vector.extract_strided_slice %946 {offsets = [6, 0], sizes = [1, 128], strides = [1, 1]} : vector<8x128xf32> to vector<1x128xf32>
    %978 = vector.broadcast %977 : vector<1x128xf32> to vector<16x128xf32>
    %979 = arith.mulf %34, %978 : vector<16x128xf32>
    %980 = arith.addf %976, %979 : vector<16x128xf32>
    %981 = vector.extract_strided_slice %946 {offsets = [7, 0], sizes = [1, 128], strides = [1, 1]} : vector<8x128xf32> to vector<1x128xf32>
    %982 = vector.broadcast %981 : vector<1x128xf32> to vector<16x128xf32>
    %983 = arith.mulf %36, %982 : vector<16x128xf32>
    %984 = arith.addf %980, %983 : vector<16x128xf32>
    %cst_358 = arith.constant 0.000000e+00 : f32
    %985 = vector.broadcast %cst_358 : f32 to vector<16x128xf32>
    %986 = arith.maximumf %984, %985 : vector<16x128xf32>
    %c5_359 = arith.constant 5 : index
    %c4_360 = arith.constant 4 : index
    %987 = memref.load %arg5[%c5_359, %c4_360] : memref<10x10xf32, #tpu.memory_space<smem>>
    %988 = vector.broadcast %987 : f32 to vector<8x128xf32>
    %989 = arith.mulf %1, %988 : vector<8x128xf32>
    %c6_361 = arith.constant 6 : index
    %c4_362 = arith.constant 4 : index
    %990 = memref.load %arg5[%c6_361, %c4_362] : memref<10x10xf32, #tpu.memory_space<smem>>
    %991 = vector.broadcast %990 : f32 to vector<8x128xf32>
    %992 = arith.mulf %3, %991 : vector<8x128xf32>
    %993 = arith.addf %989, %992 : vector<8x128xf32>
    %c7_363 = arith.constant 7 : index
    %c4_364 = arith.constant 4 : index
    %994 = memref.load %arg5[%c7_363, %c4_364] : memref<10x10xf32, #tpu.memory_space<smem>>
    %995 = vector.broadcast %994 : f32 to vector<8x128xf32>
    %996 = arith.addf %993, %995 : vector<8x128xf32>
    %c8_365 = arith.constant 8 : index
    %c4_366 = arith.constant 4 : index
    %997 = memref.load %arg5[%c8_365, %c4_366] : memref<10x10xf32, #tpu.memory_space<smem>>
    %998 = vector.broadcast %997 : f32 to vector<16x128xf32>
    %999 = arith.mulf %4, %998 : vector<16x128xf32>
    %c9_367 = arith.constant 9 : index
    %c4_368 = arith.constant 4 : index
    %1000 = memref.load %arg5[%c9_367, %c4_368] : memref<10x10xf32, #tpu.memory_space<smem>>
    %1001 = vector.broadcast %1000 : f32 to vector<16x128xf32>
    %1002 = arith.addf %999, %1001 : vector<16x128xf32>
    %1003 = vector.extract_strided_slice %996 {offsets = [0, 0], sizes = [1, 128], strides = [1, 1]} : vector<8x128xf32> to vector<1x128xf32>
    %1004 = vector.broadcast %1003 : vector<1x128xf32> to vector<16x128xf32>
    %1005 = arith.mulf %22, %1004 : vector<16x128xf32>
    %1006 = arith.addf %1002, %1005 : vector<16x128xf32>
    %1007 = vector.extract_strided_slice %996 {offsets = [1, 0], sizes = [1, 128], strides = [1, 1]} : vector<8x128xf32> to vector<1x128xf32>
    %1008 = vector.broadcast %1007 : vector<1x128xf32> to vector<16x128xf32>
    %1009 = arith.mulf %24, %1008 : vector<16x128xf32>
    %1010 = arith.addf %1006, %1009 : vector<16x128xf32>
    %1011 = vector.extract_strided_slice %996 {offsets = [2, 0], sizes = [1, 128], strides = [1, 1]} : vector<8x128xf32> to vector<1x128xf32>
    %1012 = vector.broadcast %1011 : vector<1x128xf32> to vector<16x128xf32>
    %1013 = arith.mulf %26, %1012 : vector<16x128xf32>
    %1014 = arith.addf %1010, %1013 : vector<16x128xf32>
    %1015 = vector.extract_strided_slice %996 {offsets = [3, 0], sizes = [1, 128], strides = [1, 1]} : vector<8x128xf32> to vector<1x128xf32>
    %1016 = vector.broadcast %1015 : vector<1x128xf32> to vector<16x128xf32>
    %1017 = arith.mulf %28, %1016 : vector<16x128xf32>
    %1018 = arith.addf %1014, %1017 : vector<16x128xf32>
    %1019 = vector.extract_strided_slice %996 {offsets = [4, 0], sizes = [1, 128], strides = [1, 1]} : vector<8x128xf32> to vector<1x128xf32>
    %1020 = vector.broadcast %1019 : vector<1x128xf32> to vector<16x128xf32>
    %1021 = arith.mulf %30, %1020 : vector<16x128xf32>
    %1022 = arith.addf %1018, %1021 : vector<16x128xf32>
    %1023 = vector.extract_strided_slice %996 {offsets = [5, 0], sizes = [1, 128], strides = [1, 1]} : vector<8x128xf32> to vector<1x128xf32>
    %1024 = vector.broadcast %1023 : vector<1x128xf32> to vector<16x128xf32>
    %1025 = arith.mulf %32, %1024 : vector<16x128xf32>
    %1026 = arith.addf %1022, %1025 : vector<16x128xf32>
    %1027 = vector.extract_strided_slice %996 {offsets = [6, 0], sizes = [1, 128], strides = [1, 1]} : vector<8x128xf32> to vector<1x128xf32>
    %1028 = vector.broadcast %1027 : vector<1x128xf32> to vector<16x128xf32>
    %1029 = arith.mulf %34, %1028 : vector<16x128xf32>
    %1030 = arith.addf %1026, %1029 : vector<16x128xf32>
    %1031 = vector.extract_strided_slice %996 {offsets = [7, 0], sizes = [1, 128], strides = [1, 1]} : vector<8x128xf32> to vector<1x128xf32>
    %1032 = vector.broadcast %1031 : vector<1x128xf32> to vector<16x128xf32>
    %1033 = arith.mulf %36, %1032 : vector<16x128xf32>
    %1034 = arith.addf %1030, %1033 : vector<16x128xf32>
    %cst_369 = arith.constant 0.000000e+00 : f32
    %1035 = vector.broadcast %cst_369 : f32 to vector<16x128xf32>
    %1036 = arith.maximumf %1034, %1035 : vector<16x128xf32>
    %c5_370 = arith.constant 5 : index
    %c5_371 = arith.constant 5 : index
    %1037 = memref.load %arg5[%c5_370, %c5_371] : memref<10x10xf32, #tpu.memory_space<smem>>
    %1038 = vector.broadcast %1037 : f32 to vector<8x128xf32>
    %1039 = arith.mulf %1, %1038 : vector<8x128xf32>
    %c6_372 = arith.constant 6 : index
    %c5_373 = arith.constant 5 : index
    %1040 = memref.load %arg5[%c6_372, %c5_373] : memref<10x10xf32, #tpu.memory_space<smem>>
    %1041 = vector.broadcast %1040 : f32 to vector<8x128xf32>
    %1042 = arith.mulf %3, %1041 : vector<8x128xf32>
    %1043 = arith.addf %1039, %1042 : vector<8x128xf32>
    %c7_374 = arith.constant 7 : index
    %c5_375 = arith.constant 5 : index
    %1044 = memref.load %arg5[%c7_374, %c5_375] : memref<10x10xf32, #tpu.memory_space<smem>>
    %1045 = vector.broadcast %1044 : f32 to vector<8x128xf32>
    %1046 = arith.addf %1043, %1045 : vector<8x128xf32>
    %c8_376 = arith.constant 8 : index
    %c5_377 = arith.constant 5 : index
    %1047 = memref.load %arg5[%c8_376, %c5_377] : memref<10x10xf32, #tpu.memory_space<smem>>
    %1048 = vector.broadcast %1047 : f32 to vector<16x128xf32>
    %1049 = arith.mulf %4, %1048 : vector<16x128xf32>
    %c9_378 = arith.constant 9 : index
    %c5_379 = arith.constant 5 : index
    %1050 = memref.load %arg5[%c9_378, %c5_379] : memref<10x10xf32, #tpu.memory_space<smem>>
    %1051 = vector.broadcast %1050 : f32 to vector<16x128xf32>
    %1052 = arith.addf %1049, %1051 : vector<16x128xf32>
    %1053 = vector.extract_strided_slice %1046 {offsets = [0, 0], sizes = [1, 128], strides = [1, 1]} : vector<8x128xf32> to vector<1x128xf32>
    %1054 = vector.broadcast %1053 : vector<1x128xf32> to vector<16x128xf32>
    %1055 = arith.mulf %22, %1054 : vector<16x128xf32>
    %1056 = arith.addf %1052, %1055 : vector<16x128xf32>
    %1057 = vector.extract_strided_slice %1046 {offsets = [1, 0], sizes = [1, 128], strides = [1, 1]} : vector<8x128xf32> to vector<1x128xf32>
    %1058 = vector.broadcast %1057 : vector<1x128xf32> to vector<16x128xf32>
    %1059 = arith.mulf %24, %1058 : vector<16x128xf32>
    %1060 = arith.addf %1056, %1059 : vector<16x128xf32>
    %1061 = vector.extract_strided_slice %1046 {offsets = [2, 0], sizes = [1, 128], strides = [1, 1]} : vector<8x128xf32> to vector<1x128xf32>
    %1062 = vector.broadcast %1061 : vector<1x128xf32> to vector<16x128xf32>
    %1063 = arith.mulf %26, %1062 : vector<16x128xf32>
    %1064 = arith.addf %1060, %1063 : vector<16x128xf32>
    %1065 = vector.extract_strided_slice %1046 {offsets = [3, 0], sizes = [1, 128], strides = [1, 1]} : vector<8x128xf32> to vector<1x128xf32>
    %1066 = vector.broadcast %1065 : vector<1x128xf32> to vector<16x128xf32>
    %1067 = arith.mulf %28, %1066 : vector<16x128xf32>
    %1068 = arith.addf %1064, %1067 : vector<16x128xf32>
    %1069 = vector.extract_strided_slice %1046 {offsets = [4, 0], sizes = [1, 128], strides = [1, 1]} : vector<8x128xf32> to vector<1x128xf32>
    %1070 = vector.broadcast %1069 : vector<1x128xf32> to vector<16x128xf32>
    %1071 = arith.mulf %30, %1070 : vector<16x128xf32>
    %1072 = arith.addf %1068, %1071 : vector<16x128xf32>
    %1073 = vector.extract_strided_slice %1046 {offsets = [5, 0], sizes = [1, 128], strides = [1, 1]} : vector<8x128xf32> to vector<1x128xf32>
    %1074 = vector.broadcast %1073 : vector<1x128xf32> to vector<16x128xf32>
    %1075 = arith.mulf %32, %1074 : vector<16x128xf32>
    %1076 = arith.addf %1072, %1075 : vector<16x128xf32>
    %1077 = vector.extract_strided_slice %1046 {offsets = [6, 0], sizes = [1, 128], strides = [1, 1]} : vector<8x128xf32> to vector<1x128xf32>
    %1078 = vector.broadcast %1077 : vector<1x128xf32> to vector<16x128xf32>
    %1079 = arith.mulf %34, %1078 : vector<16x128xf32>
    %1080 = arith.addf %1076, %1079 : vector<16x128xf32>
    %1081 = vector.extract_strided_slice %1046 {offsets = [7, 0], sizes = [1, 128], strides = [1, 1]} : vector<8x128xf32> to vector<1x128xf32>
    %1082 = vector.broadcast %1081 : vector<1x128xf32> to vector<16x128xf32>
    %1083 = arith.mulf %36, %1082 : vector<16x128xf32>
    %1084 = arith.addf %1080, %1083 : vector<16x128xf32>
    %cst_380 = arith.constant 0.000000e+00 : f32
    %1085 = vector.broadcast %cst_380 : f32 to vector<16x128xf32>
    %1086 = arith.maximumf %1084, %1085 : vector<16x128xf32>
    %c5_381 = arith.constant 5 : index
    %c6_382 = arith.constant 6 : index
    %1087 = memref.load %arg5[%c5_381, %c6_382] : memref<10x10xf32, #tpu.memory_space<smem>>
    %1088 = vector.broadcast %1087 : f32 to vector<8x128xf32>
    %1089 = arith.mulf %1, %1088 : vector<8x128xf32>
    %c6_383 = arith.constant 6 : index
    %c6_384 = arith.constant 6 : index
    %1090 = memref.load %arg5[%c6_383, %c6_384] : memref<10x10xf32, #tpu.memory_space<smem>>
    %1091 = vector.broadcast %1090 : f32 to vector<8x128xf32>
    %1092 = arith.mulf %3, %1091 : vector<8x128xf32>
    %1093 = arith.addf %1089, %1092 : vector<8x128xf32>
    %c7_385 = arith.constant 7 : index
    %c6_386 = arith.constant 6 : index
    %1094 = memref.load %arg5[%c7_385, %c6_386] : memref<10x10xf32, #tpu.memory_space<smem>>
    %1095 = vector.broadcast %1094 : f32 to vector<8x128xf32>
    %1096 = arith.addf %1093, %1095 : vector<8x128xf32>
    %c8_387 = arith.constant 8 : index
    %c6_388 = arith.constant 6 : index
    %1097 = memref.load %arg5[%c8_387, %c6_388] : memref<10x10xf32, #tpu.memory_space<smem>>
    %1098 = vector.broadcast %1097 : f32 to vector<16x128xf32>
    %1099 = arith.mulf %4, %1098 : vector<16x128xf32>
    %c9_389 = arith.constant 9 : index
    %c6_390 = arith.constant 6 : index
    %1100 = memref.load %arg5[%c9_389, %c6_390] : memref<10x10xf32, #tpu.memory_space<smem>>
    %1101 = vector.broadcast %1100 : f32 to vector<16x128xf32>
    %1102 = arith.addf %1099, %1101 : vector<16x128xf32>
    %1103 = vector.extract_strided_slice %1096 {offsets = [0, 0], sizes = [1, 128], strides = [1, 1]} : vector<8x128xf32> to vector<1x128xf32>
    %1104 = vector.broadcast %1103 : vector<1x128xf32> to vector<16x128xf32>
    %1105 = arith.mulf %22, %1104 : vector<16x128xf32>
    %1106 = arith.addf %1102, %1105 : vector<16x128xf32>
    %1107 = vector.extract_strided_slice %1096 {offsets = [1, 0], sizes = [1, 128], strides = [1, 1]} : vector<8x128xf32> to vector<1x128xf32>
    %1108 = vector.broadcast %1107 : vector<1x128xf32> to vector<16x128xf32>
    %1109 = arith.mulf %24, %1108 : vector<16x128xf32>
    %1110 = arith.addf %1106, %1109 : vector<16x128xf32>
    %1111 = vector.extract_strided_slice %1096 {offsets = [2, 0], sizes = [1, 128], strides = [1, 1]} : vector<8x128xf32> to vector<1x128xf32>
    %1112 = vector.broadcast %1111 : vector<1x128xf32> to vector<16x128xf32>
    %1113 = arith.mulf %26, %1112 : vector<16x128xf32>
    %1114 = arith.addf %1110, %1113 : vector<16x128xf32>
    %1115 = vector.extract_strided_slice %1096 {offsets = [3, 0], sizes = [1, 128], strides = [1, 1]} : vector<8x128xf32> to vector<1x128xf32>
    %1116 = vector.broadcast %1115 : vector<1x128xf32> to vector<16x128xf32>
    %1117 = arith.mulf %28, %1116 : vector<16x128xf32>
    %1118 = arith.addf %1114, %1117 : vector<16x128xf32>
    %1119 = vector.extract_strided_slice %1096 {offsets = [4, 0], sizes = [1, 128], strides = [1, 1]} : vector<8x128xf32> to vector<1x128xf32>
    %1120 = vector.broadcast %1119 : vector<1x128xf32> to vector<16x128xf32>
    %1121 = arith.mulf %30, %1120 : vector<16x128xf32>
    %1122 = arith.addf %1118, %1121 : vector<16x128xf32>
    %1123 = vector.extract_strided_slice %1096 {offsets = [5, 0], sizes = [1, 128], strides = [1, 1]} : vector<8x128xf32> to vector<1x128xf32>
    %1124 = vector.broadcast %1123 : vector<1x128xf32> to vector<16x128xf32>
    %1125 = arith.mulf %32, %1124 : vector<16x128xf32>
    %1126 = arith.addf %1122, %1125 : vector<16x128xf32>
    %1127 = vector.extract_strided_slice %1096 {offsets = [6, 0], sizes = [1, 128], strides = [1, 1]} : vector<8x128xf32> to vector<1x128xf32>
    %1128 = vector.broadcast %1127 : vector<1x128xf32> to vector<16x128xf32>
    %1129 = arith.mulf %34, %1128 : vector<16x128xf32>
    %1130 = arith.addf %1126, %1129 : vector<16x128xf32>
    %1131 = vector.extract_strided_slice %1096 {offsets = [7, 0], sizes = [1, 128], strides = [1, 1]} : vector<8x128xf32> to vector<1x128xf32>
    %1132 = vector.broadcast %1131 : vector<1x128xf32> to vector<16x128xf32>
    %1133 = arith.mulf %36, %1132 : vector<16x128xf32>
    %1134 = arith.addf %1130, %1133 : vector<16x128xf32>
    %cst_391 = arith.constant 0.000000e+00 : f32
    %1135 = vector.broadcast %cst_391 : f32 to vector<16x128xf32>
    %1136 = arith.maximumf %1134, %1135 : vector<16x128xf32>
    %c5_392 = arith.constant 5 : index
    %c7_393 = arith.constant 7 : index
    %1137 = memref.load %arg5[%c5_392, %c7_393] : memref<10x10xf32, #tpu.memory_space<smem>>
    %1138 = vector.broadcast %1137 : f32 to vector<8x128xf32>
    %1139 = arith.mulf %1, %1138 : vector<8x128xf32>
    %c6_394 = arith.constant 6 : index
    %c7_395 = arith.constant 7 : index
    %1140 = memref.load %arg5[%c6_394, %c7_395] : memref<10x10xf32, #tpu.memory_space<smem>>
    %1141 = vector.broadcast %1140 : f32 to vector<8x128xf32>
    %1142 = arith.mulf %3, %1141 : vector<8x128xf32>
    %1143 = arith.addf %1139, %1142 : vector<8x128xf32>
    %c7_396 = arith.constant 7 : index
    %c7_397 = arith.constant 7 : index
    %1144 = memref.load %arg5[%c7_396, %c7_397] : memref<10x10xf32, #tpu.memory_space<smem>>
    %1145 = vector.broadcast %1144 : f32 to vector<8x128xf32>
    %1146 = arith.addf %1143, %1145 : vector<8x128xf32>
    %c8_398 = arith.constant 8 : index
    %c7_399 = arith.constant 7 : index
    %1147 = memref.load %arg5[%c8_398, %c7_399] : memref<10x10xf32, #tpu.memory_space<smem>>
    %1148 = vector.broadcast %1147 : f32 to vector<16x128xf32>
    %1149 = arith.mulf %4, %1148 : vector<16x128xf32>
    %c9_400 = arith.constant 9 : index
    %c7_401 = arith.constant 7 : index
    %1150 = memref.load %arg5[%c9_400, %c7_401] : memref<10x10xf32, #tpu.memory_space<smem>>
    %1151 = vector.broadcast %1150 : f32 to vector<16x128xf32>
    %1152 = arith.addf %1149, %1151 : vector<16x128xf32>
    %1153 = vector.extract_strided_slice %1146 {offsets = [0, 0], sizes = [1, 128], strides = [1, 1]} : vector<8x128xf32> to vector<1x128xf32>
    %1154 = vector.broadcast %1153 : vector<1x128xf32> to vector<16x128xf32>
    %1155 = arith.mulf %22, %1154 : vector<16x128xf32>
    %1156 = arith.addf %1152, %1155 : vector<16x128xf32>
    %1157 = vector.extract_strided_slice %1146 {offsets = [1, 0], sizes = [1, 128], strides = [1, 1]} : vector<8x128xf32> to vector<1x128xf32>
    %1158 = vector.broadcast %1157 : vector<1x128xf32> to vector<16x128xf32>
    %1159 = arith.mulf %24, %1158 : vector<16x128xf32>
    %1160 = arith.addf %1156, %1159 : vector<16x128xf32>
    %1161 = vector.extract_strided_slice %1146 {offsets = [2, 0], sizes = [1, 128], strides = [1, 1]} : vector<8x128xf32> to vector<1x128xf32>
    %1162 = vector.broadcast %1161 : vector<1x128xf32> to vector<16x128xf32>
    %1163 = arith.mulf %26, %1162 : vector<16x128xf32>
    %1164 = arith.addf %1160, %1163 : vector<16x128xf32>
    %1165 = vector.extract_strided_slice %1146 {offsets = [3, 0], sizes = [1, 128], strides = [1, 1]} : vector<8x128xf32> to vector<1x128xf32>
    %1166 = vector.broadcast %1165 : vector<1x128xf32> to vector<16x128xf32>
    %1167 = arith.mulf %28, %1166 : vector<16x128xf32>
    %1168 = arith.addf %1164, %1167 : vector<16x128xf32>
    %1169 = vector.extract_strided_slice %1146 {offsets = [4, 0], sizes = [1, 128], strides = [1, 1]} : vector<8x128xf32> to vector<1x128xf32>
    %1170 = vector.broadcast %1169 : vector<1x128xf32> to vector<16x128xf32>
    %1171 = arith.mulf %30, %1170 : vector<16x128xf32>
    %1172 = arith.addf %1168, %1171 : vector<16x128xf32>
    %1173 = vector.extract_strided_slice %1146 {offsets = [5, 0], sizes = [1, 128], strides = [1, 1]} : vector<8x128xf32> to vector<1x128xf32>
    %1174 = vector.broadcast %1173 : vector<1x128xf32> to vector<16x128xf32>
    %1175 = arith.mulf %32, %1174 : vector<16x128xf32>
    %1176 = arith.addf %1172, %1175 : vector<16x128xf32>
    %1177 = vector.extract_strided_slice %1146 {offsets = [6, 0], sizes = [1, 128], strides = [1, 1]} : vector<8x128xf32> to vector<1x128xf32>
    %1178 = vector.broadcast %1177 : vector<1x128xf32> to vector<16x128xf32>
    %1179 = arith.mulf %34, %1178 : vector<16x128xf32>
    %1180 = arith.addf %1176, %1179 : vector<16x128xf32>
    %1181 = vector.extract_strided_slice %1146 {offsets = [7, 0], sizes = [1, 128], strides = [1, 1]} : vector<8x128xf32> to vector<1x128xf32>
    %1182 = vector.broadcast %1181 : vector<1x128xf32> to vector<16x128xf32>
    %1183 = arith.mulf %36, %1182 : vector<16x128xf32>
    %1184 = arith.addf %1180, %1183 : vector<16x128xf32>
    %cst_402 = arith.constant 0.000000e+00 : f32
    %1185 = vector.broadcast %cst_402 : f32 to vector<16x128xf32>
    %1186 = arith.maximumf %1184, %1185 : vector<16x128xf32>
    %c5_403 = arith.constant 5 : index
    %c8_404 = arith.constant 8 : index
    %1187 = memref.load %arg5[%c5_403, %c8_404] : memref<10x10xf32, #tpu.memory_space<smem>>
    %1188 = vector.broadcast %1187 : f32 to vector<8x128xf32>
    %1189 = arith.mulf %1, %1188 : vector<8x128xf32>
    %c6_405 = arith.constant 6 : index
    %c8_406 = arith.constant 8 : index
    %1190 = memref.load %arg5[%c6_405, %c8_406] : memref<10x10xf32, #tpu.memory_space<smem>>
    %1191 = vector.broadcast %1190 : f32 to vector<8x128xf32>
    %1192 = arith.mulf %3, %1191 : vector<8x128xf32>
    %1193 = arith.addf %1189, %1192 : vector<8x128xf32>
    %c7_407 = arith.constant 7 : index
    %c8_408 = arith.constant 8 : index
    %1194 = memref.load %arg5[%c7_407, %c8_408] : memref<10x10xf32, #tpu.memory_space<smem>>
    %1195 = vector.broadcast %1194 : f32 to vector<8x128xf32>
    %1196 = arith.addf %1193, %1195 : vector<8x128xf32>
    %c8_409 = arith.constant 8 : index
    %c8_410 = arith.constant 8 : index
    %1197 = memref.load %arg5[%c8_409, %c8_410] : memref<10x10xf32, #tpu.memory_space<smem>>
    %1198 = vector.broadcast %1197 : f32 to vector<16x128xf32>
    %1199 = arith.mulf %4, %1198 : vector<16x128xf32>
    %c9_411 = arith.constant 9 : index
    %c8_412 = arith.constant 8 : index
    %1200 = memref.load %arg5[%c9_411, %c8_412] : memref<10x10xf32, #tpu.memory_space<smem>>
    %1201 = vector.broadcast %1200 : f32 to vector<16x128xf32>
    %1202 = arith.addf %1199, %1201 : vector<16x128xf32>
    %1203 = vector.extract_strided_slice %1196 {offsets = [0, 0], sizes = [1, 128], strides = [1, 1]} : vector<8x128xf32> to vector<1x128xf32>
    %1204 = vector.broadcast %1203 : vector<1x128xf32> to vector<16x128xf32>
    %1205 = arith.mulf %22, %1204 : vector<16x128xf32>
    %1206 = arith.addf %1202, %1205 : vector<16x128xf32>
    %1207 = vector.extract_strided_slice %1196 {offsets = [1, 0], sizes = [1, 128], strides = [1, 1]} : vector<8x128xf32> to vector<1x128xf32>
    %1208 = vector.broadcast %1207 : vector<1x128xf32> to vector<16x128xf32>
    %1209 = arith.mulf %24, %1208 : vector<16x128xf32>
    %1210 = arith.addf %1206, %1209 : vector<16x128xf32>
    %1211 = vector.extract_strided_slice %1196 {offsets = [2, 0], sizes = [1, 128], strides = [1, 1]} : vector<8x128xf32> to vector<1x128xf32>
    %1212 = vector.broadcast %1211 : vector<1x128xf32> to vector<16x128xf32>
    %1213 = arith.mulf %26, %1212 : vector<16x128xf32>
    %1214 = arith.addf %1210, %1213 : vector<16x128xf32>
    %1215 = vector.extract_strided_slice %1196 {offsets = [3, 0], sizes = [1, 128], strides = [1, 1]} : vector<8x128xf32> to vector<1x128xf32>
    %1216 = vector.broadcast %1215 : vector<1x128xf32> to vector<16x128xf32>
    %1217 = arith.mulf %28, %1216 : vector<16x128xf32>
    %1218 = arith.addf %1214, %1217 : vector<16x128xf32>
    %1219 = vector.extract_strided_slice %1196 {offsets = [4, 0], sizes = [1, 128], strides = [1, 1]} : vector<8x128xf32> to vector<1x128xf32>
    %1220 = vector.broadcast %1219 : vector<1x128xf32> to vector<16x128xf32>
    %1221 = arith.mulf %30, %1220 : vector<16x128xf32>
    %1222 = arith.addf %1218, %1221 : vector<16x128xf32>
    %1223 = vector.extract_strided_slice %1196 {offsets = [5, 0], sizes = [1, 128], strides = [1, 1]} : vector<8x128xf32> to vector<1x128xf32>
    %1224 = vector.broadcast %1223 : vector<1x128xf32> to vector<16x128xf32>
    %1225 = arith.mulf %32, %1224 : vector<16x128xf32>
    %1226 = arith.addf %1222, %1225 : vector<16x128xf32>
    %1227 = vector.extract_strided_slice %1196 {offsets = [6, 0], sizes = [1, 128], strides = [1, 1]} : vector<8x128xf32> to vector<1x128xf32>
    %1228 = vector.broadcast %1227 : vector<1x128xf32> to vector<16x128xf32>
    %1229 = arith.mulf %34, %1228 : vector<16x128xf32>
    %1230 = arith.addf %1226, %1229 : vector<16x128xf32>
    %1231 = vector.extract_strided_slice %1196 {offsets = [7, 0], sizes = [1, 128], strides = [1, 1]} : vector<8x128xf32> to vector<1x128xf32>
    %1232 = vector.broadcast %1231 : vector<1x128xf32> to vector<16x128xf32>
    %1233 = arith.mulf %36, %1232 : vector<16x128xf32>
    %1234 = arith.addf %1230, %1233 : vector<16x128xf32>
    %cst_413 = arith.constant 0.000000e+00 : f32
    %1235 = vector.broadcast %cst_413 : f32 to vector<16x128xf32>
    %1236 = arith.maximumf %1234, %1235 : vector<16x128xf32>
    %c5_414 = arith.constant 5 : index
    %c9_415 = arith.constant 9 : index
    %1237 = memref.load %arg5[%c5_414, %c9_415] : memref<10x10xf32, #tpu.memory_space<smem>>
    %1238 = vector.broadcast %1237 : f32 to vector<8x128xf32>
    %1239 = arith.mulf %1, %1238 : vector<8x128xf32>
    %c6_416 = arith.constant 6 : index
    %c9_417 = arith.constant 9 : index
    %1240 = memref.load %arg5[%c6_416, %c9_417] : memref<10x10xf32, #tpu.memory_space<smem>>
    %1241 = vector.broadcast %1240 : f32 to vector<8x128xf32>
    %1242 = arith.mulf %3, %1241 : vector<8x128xf32>
    %1243 = arith.addf %1239, %1242 : vector<8x128xf32>
    %c7_418 = arith.constant 7 : index
    %c9_419 = arith.constant 9 : index
    %1244 = memref.load %arg5[%c7_418, %c9_419] : memref<10x10xf32, #tpu.memory_space<smem>>
    %1245 = vector.broadcast %1244 : f32 to vector<8x128xf32>
    %1246 = arith.addf %1243, %1245 : vector<8x128xf32>
    %c8_420 = arith.constant 8 : index
    %c9_421 = arith.constant 9 : index
    %1247 = memref.load %arg5[%c8_420, %c9_421] : memref<10x10xf32, #tpu.memory_space<smem>>
    %1248 = vector.broadcast %1247 : f32 to vector<16x128xf32>
    %1249 = arith.mulf %4, %1248 : vector<16x128xf32>
    %c9_422 = arith.constant 9 : index
    %c9_423 = arith.constant 9 : index
    %1250 = memref.load %arg5[%c9_422, %c9_423] : memref<10x10xf32, #tpu.memory_space<smem>>
    %1251 = vector.broadcast %1250 : f32 to vector<16x128xf32>
    %1252 = arith.addf %1249, %1251 : vector<16x128xf32>
    %1253 = vector.extract_strided_slice %1246 {offsets = [0, 0], sizes = [1, 128], strides = [1, 1]} : vector<8x128xf32> to vector<1x128xf32>
    %1254 = vector.broadcast %1253 : vector<1x128xf32> to vector<16x128xf32>
    %1255 = arith.mulf %22, %1254 : vector<16x128xf32>
    %1256 = arith.addf %1252, %1255 : vector<16x128xf32>
    %1257 = vector.extract_strided_slice %1246 {offsets = [1, 0], sizes = [1, 128], strides = [1, 1]} : vector<8x128xf32> to vector<1x128xf32>
    %1258 = vector.broadcast %1257 : vector<1x128xf32> to vector<16x128xf32>
    %1259 = arith.mulf %24, %1258 : vector<16x128xf32>
    %1260 = arith.addf %1256, %1259 : vector<16x128xf32>
    %1261 = vector.extract_strided_slice %1246 {offsets = [2, 0], sizes = [1, 128], strides = [1, 1]} : vector<8x128xf32> to vector<1x128xf32>
    %1262 = vector.broadcast %1261 : vector<1x128xf32> to vector<16x128xf32>
    %1263 = arith.mulf %26, %1262 : vector<16x128xf32>
    %1264 = arith.addf %1260, %1263 : vector<16x128xf32>
    %1265 = vector.extract_strided_slice %1246 {offsets = [3, 0], sizes = [1, 128], strides = [1, 1]} : vector<8x128xf32> to vector<1x128xf32>
    %1266 = vector.broadcast %1265 : vector<1x128xf32> to vector<16x128xf32>
    %1267 = arith.mulf %28, %1266 : vector<16x128xf32>
    %1268 = arith.addf %1264, %1267 : vector<16x128xf32>
    %1269 = vector.extract_strided_slice %1246 {offsets = [4, 0], sizes = [1, 128], strides = [1, 1]} : vector<8x128xf32> to vector<1x128xf32>
    %1270 = vector.broadcast %1269 : vector<1x128xf32> to vector<16x128xf32>
    %1271 = arith.mulf %30, %1270 : vector<16x128xf32>
    %1272 = arith.addf %1268, %1271 : vector<16x128xf32>
    %1273 = vector.extract_strided_slice %1246 {offsets = [5, 0], sizes = [1, 128], strides = [1, 1]} : vector<8x128xf32> to vector<1x128xf32>
    %1274 = vector.broadcast %1273 : vector<1x128xf32> to vector<16x128xf32>
    %1275 = arith.mulf %32, %1274 : vector<16x128xf32>
    %1276 = arith.addf %1272, %1275 : vector<16x128xf32>
    %1277 = vector.extract_strided_slice %1246 {offsets = [6, 0], sizes = [1, 128], strides = [1, 1]} : vector<8x128xf32> to vector<1x128xf32>
    %1278 = vector.broadcast %1277 : vector<1x128xf32> to vector<16x128xf32>
    %1279 = arith.mulf %34, %1278 : vector<16x128xf32>
    %1280 = arith.addf %1276, %1279 : vector<16x128xf32>
    %1281 = vector.extract_strided_slice %1246 {offsets = [7, 0], sizes = [1, 128], strides = [1, 1]} : vector<8x128xf32> to vector<1x128xf32>
    %1282 = vector.broadcast %1281 : vector<1x128xf32> to vector<16x128xf32>
    %1283 = arith.mulf %36, %1282 : vector<16x128xf32>
    %1284 = arith.addf %1280, %1283 : vector<16x128xf32>
    %cst_424 = arith.constant 0.000000e+00 : f32
    %1285 = vector.broadcast %cst_424 : f32 to vector<16x128xf32>
    %1286 = arith.maximumf %1284, %1285 : vector<16x128xf32>
    %c0_425 = arith.constant 0 : index
    %c0_426 = arith.constant 0 : index
    %1287 = memref.load %arg6[%c0_425, %c0_426] : memref<22x2xf32, #tpu.memory_space<smem>>
    %1288 = vector.broadcast %1287 : f32 to vector<8x128xf32>
    %1289 = arith.mulf %111, %1288 : vector<8x128xf32>
    %c11 = arith.constant 11 : index
    %c0_427 = arith.constant 0 : index
    %1290 = memref.load %arg6[%c11, %c0_427] : memref<22x2xf32, #tpu.memory_space<smem>>
    %1291 = vector.broadcast %1290 : f32 to vector<16x128xf32>
    %1292 = arith.mulf %836, %1291 : vector<16x128xf32>
    %c1_428 = arith.constant 1 : index
    %c0_429 = arith.constant 0 : index
    %1293 = memref.load %arg6[%c1_428, %c0_429] : memref<22x2xf32, #tpu.memory_space<smem>>
    %1294 = vector.broadcast %1293 : f32 to vector<8x128xf32>
    %1295 = arith.mulf %186, %1294 : vector<8x128xf32>
    %1296 = arith.addf %1289, %1295 : vector<8x128xf32>
    %c12 = arith.constant 12 : index
    %c0_430 = arith.constant 0 : index
    %1297 = memref.load %arg6[%c12, %c0_430] : memref<22x2xf32, #tpu.memory_space<smem>>
    %1298 = vector.broadcast %1297 : f32 to vector<16x128xf32>
    %1299 = arith.mulf %886, %1298 : vector<16x128xf32>
    %1300 = arith.addf %1292, %1299 : vector<16x128xf32>
    %c2_431 = arith.constant 2 : index
    %c0_432 = arith.constant 0 : index
    %1301 = memref.load %arg6[%c2_431, %c0_432] : memref<22x2xf32, #tpu.memory_space<smem>>
    %1302 = vector.broadcast %1301 : f32 to vector<8x128xf32>
    %1303 = arith.mulf %261, %1302 : vector<8x128xf32>
    %1304 = arith.addf %1296, %1303 : vector<8x128xf32>
    %c13 = arith.constant 13 : index
    %c0_433 = arith.constant 0 : index
    %1305 = memref.load %arg6[%c13, %c0_433] : memref<22x2xf32, #tpu.memory_space<smem>>
    %1306 = vector.broadcast %1305 : f32 to vector<16x128xf32>
    %1307 = arith.mulf %936, %1306 : vector<16x128xf32>
    %1308 = arith.addf %1300, %1307 : vector<16x128xf32>
    %c3_434 = arith.constant 3 : index
    %c0_435 = arith.constant 0 : index
    %1309 = memref.load %arg6[%c3_434, %c0_435] : memref<22x2xf32, #tpu.memory_space<smem>>
    %1310 = vector.broadcast %1309 : f32 to vector<8x128xf32>
    %1311 = arith.mulf %336, %1310 : vector<8x128xf32>
    %1312 = arith.addf %1304, %1311 : vector<8x128xf32>
    %c14 = arith.constant 14 : index
    %c0_436 = arith.constant 0 : index
    %1313 = memref.load %arg6[%c14, %c0_436] : memref<22x2xf32, #tpu.memory_space<smem>>
    %1314 = vector.broadcast %1313 : f32 to vector<16x128xf32>
    %1315 = arith.mulf %986, %1314 : vector<16x128xf32>
    %1316 = arith.addf %1308, %1315 : vector<16x128xf32>
    %c4_437 = arith.constant 4 : index
    %c0_438 = arith.constant 0 : index
    %1317 = memref.load %arg6[%c4_437, %c0_438] : memref<22x2xf32, #tpu.memory_space<smem>>
    %1318 = vector.broadcast %1317 : f32 to vector<8x128xf32>
    %1319 = arith.mulf %411, %1318 : vector<8x128xf32>
    %1320 = arith.addf %1312, %1319 : vector<8x128xf32>
    %c15 = arith.constant 15 : index
    %c0_439 = arith.constant 0 : index
    %1321 = memref.load %arg6[%c15, %c0_439] : memref<22x2xf32, #tpu.memory_space<smem>>
    %1322 = vector.broadcast %1321 : f32 to vector<16x128xf32>
    %1323 = arith.mulf %1036, %1322 : vector<16x128xf32>
    %1324 = arith.addf %1316, %1323 : vector<16x128xf32>
    %c5_440 = arith.constant 5 : index
    %c0_441 = arith.constant 0 : index
    %1325 = memref.load %arg6[%c5_440, %c0_441] : memref<22x2xf32, #tpu.memory_space<smem>>
    %1326 = vector.broadcast %1325 : f32 to vector<8x128xf32>
    %1327 = arith.mulf %486, %1326 : vector<8x128xf32>
    %1328 = arith.addf %1320, %1327 : vector<8x128xf32>
    %c16 = arith.constant 16 : index
    %c0_442 = arith.constant 0 : index
    %1329 = memref.load %arg6[%c16, %c0_442] : memref<22x2xf32, #tpu.memory_space<smem>>
    %1330 = vector.broadcast %1329 : f32 to vector<16x128xf32>
    %1331 = arith.mulf %1086, %1330 : vector<16x128xf32>
    %1332 = arith.addf %1324, %1331 : vector<16x128xf32>
    %c6_443 = arith.constant 6 : index
    %c0_444 = arith.constant 0 : index
    %1333 = memref.load %arg6[%c6_443, %c0_444] : memref<22x2xf32, #tpu.memory_space<smem>>
    %1334 = vector.broadcast %1333 : f32 to vector<8x128xf32>
    %1335 = arith.mulf %561, %1334 : vector<8x128xf32>
    %1336 = arith.addf %1328, %1335 : vector<8x128xf32>
    %c17 = arith.constant 17 : index
    %c0_445 = arith.constant 0 : index
    %1337 = memref.load %arg6[%c17, %c0_445] : memref<22x2xf32, #tpu.memory_space<smem>>
    %1338 = vector.broadcast %1337 : f32 to vector<16x128xf32>
    %1339 = arith.mulf %1136, %1338 : vector<16x128xf32>
    %1340 = arith.addf %1332, %1339 : vector<16x128xf32>
    %c7_446 = arith.constant 7 : index
    %c0_447 = arith.constant 0 : index
    %1341 = memref.load %arg6[%c7_446, %c0_447] : memref<22x2xf32, #tpu.memory_space<smem>>
    %1342 = vector.broadcast %1341 : f32 to vector<8x128xf32>
    %1343 = arith.mulf %636, %1342 : vector<8x128xf32>
    %1344 = arith.addf %1336, %1343 : vector<8x128xf32>
    %c18 = arith.constant 18 : index
    %c0_448 = arith.constant 0 : index
    %1345 = memref.load %arg6[%c18, %c0_448] : memref<22x2xf32, #tpu.memory_space<smem>>
    %1346 = vector.broadcast %1345 : f32 to vector<16x128xf32>
    %1347 = arith.mulf %1186, %1346 : vector<16x128xf32>
    %1348 = arith.addf %1340, %1347 : vector<16x128xf32>
    %c8_449 = arith.constant 8 : index
    %c0_450 = arith.constant 0 : index
    %1349 = memref.load %arg6[%c8_449, %c0_450] : memref<22x2xf32, #tpu.memory_space<smem>>
    %1350 = vector.broadcast %1349 : f32 to vector<8x128xf32>
    %1351 = arith.mulf %711, %1350 : vector<8x128xf32>
    %1352 = arith.addf %1344, %1351 : vector<8x128xf32>
    %c19 = arith.constant 19 : index
    %c0_451 = arith.constant 0 : index
    %1353 = memref.load %arg6[%c19, %c0_451] : memref<22x2xf32, #tpu.memory_space<smem>>
    %1354 = vector.broadcast %1353 : f32 to vector<16x128xf32>
    %1355 = arith.mulf %1236, %1354 : vector<16x128xf32>
    %1356 = arith.addf %1348, %1355 : vector<16x128xf32>
    %c9_452 = arith.constant 9 : index
    %c0_453 = arith.constant 0 : index
    %1357 = memref.load %arg6[%c9_452, %c0_453] : memref<22x2xf32, #tpu.memory_space<smem>>
    %1358 = vector.broadcast %1357 : f32 to vector<8x128xf32>
    %1359 = arith.mulf %786, %1358 : vector<8x128xf32>
    %1360 = arith.addf %1352, %1359 : vector<8x128xf32>
    %c20 = arith.constant 20 : index
    %c0_454 = arith.constant 0 : index
    %1361 = memref.load %arg6[%c20, %c0_454] : memref<22x2xf32, #tpu.memory_space<smem>>
    %1362 = vector.broadcast %1361 : f32 to vector<16x128xf32>
    %1363 = arith.mulf %1286, %1362 : vector<16x128xf32>
    %1364 = arith.addf %1356, %1363 : vector<16x128xf32>
    %c10 = arith.constant 10 : index
    %c0_455 = arith.constant 0 : index
    %1365 = memref.load %arg6[%c10, %c0_455] : memref<22x2xf32, #tpu.memory_space<smem>>
    %1366 = vector.broadcast %1365 : f32 to vector<8x128xf32>
    %1367 = arith.addf %1360, %1366 : vector<8x128xf32>
    %c21 = arith.constant 21 : index
    %c0_456 = arith.constant 0 : index
    %1368 = memref.load %arg6[%c21, %c0_456] : memref<22x2xf32, #tpu.memory_space<smem>>
    %1369 = vector.broadcast %1368 : f32 to vector<16x128xf32>
    %1370 = arith.addf %1364, %1369 : vector<16x128xf32>
    %1371 = arith.mulf %6, %1367 : vector<8x128xf32>
    %cst_457 = arith.constant dense<0.000000e+00> : vector<128xf32>
    %1372 = vector.multi_reduction <add>, %1371, %cst_457 [0] : vector<8x128xf32> to vector<128xf32>
    %1373 = vector.shape_cast %1372 : vector<128xf32> to vector<1x128xf32>
    %1374 = arith.mulf %22, %1370 : vector<16x128xf32>
    %cst_458 = arith.constant dense<0.000000e+00> : vector<128xf32>
    %1375 = vector.multi_reduction <add>, %1374, %cst_458 [0] : vector<16x128xf32> to vector<128xf32>
    %1376 = vector.shape_cast %1375 : vector<128xf32> to vector<1x128xf32>
    %1377 = arith.addf %1373, %1376 : vector<1x128xf32>
    %1378 = arith.mulf %8, %1367 : vector<8x128xf32>
    %cst_459 = arith.constant dense<0.000000e+00> : vector<128xf32>
    %1379 = vector.multi_reduction <add>, %1378, %cst_459 [0] : vector<8x128xf32> to vector<128xf32>
    %1380 = vector.shape_cast %1379 : vector<128xf32> to vector<1x128xf32>
    %1381 = arith.mulf %24, %1370 : vector<16x128xf32>
    %cst_460 = arith.constant dense<0.000000e+00> : vector<128xf32>
    %1382 = vector.multi_reduction <add>, %1381, %cst_460 [0] : vector<16x128xf32> to vector<128xf32>
    %1383 = vector.shape_cast %1382 : vector<128xf32> to vector<1x128xf32>
    %1384 = arith.addf %1380, %1383 : vector<1x128xf32>
    %1385 = arith.mulf %10, %1367 : vector<8x128xf32>
    %cst_461 = arith.constant dense<0.000000e+00> : vector<128xf32>
    %1386 = vector.multi_reduction <add>, %1385, %cst_461 [0] : vector<8x128xf32> to vector<128xf32>
    %1387 = vector.shape_cast %1386 : vector<128xf32> to vector<1x128xf32>
    %1388 = arith.mulf %26, %1370 : vector<16x128xf32>
    %cst_462 = arith.constant dense<0.000000e+00> : vector<128xf32>
    %1389 = vector.multi_reduction <add>, %1388, %cst_462 [0] : vector<16x128xf32> to vector<128xf32>
    %1390 = vector.shape_cast %1389 : vector<128xf32> to vector<1x128xf32>
    %1391 = arith.addf %1387, %1390 : vector<1x128xf32>
    %1392 = arith.mulf %12, %1367 : vector<8x128xf32>
    %cst_463 = arith.constant dense<0.000000e+00> : vector<128xf32>
    %1393 = vector.multi_reduction <add>, %1392, %cst_463 [0] : vector<8x128xf32> to vector<128xf32>
    %1394 = vector.shape_cast %1393 : vector<128xf32> to vector<1x128xf32>
    %1395 = arith.mulf %28, %1370 : vector<16x128xf32>
    %cst_464 = arith.constant dense<0.000000e+00> : vector<128xf32>
    %1396 = vector.multi_reduction <add>, %1395, %cst_464 [0] : vector<16x128xf32> to vector<128xf32>
    %1397 = vector.shape_cast %1396 : vector<128xf32> to vector<1x128xf32>
    %1398 = arith.addf %1394, %1397 : vector<1x128xf32>
    %1399 = arith.mulf %14, %1367 : vector<8x128xf32>
    %cst_465 = arith.constant dense<0.000000e+00> : vector<128xf32>
    %1400 = vector.multi_reduction <add>, %1399, %cst_465 [0] : vector<8x128xf32> to vector<128xf32>
    %1401 = vector.shape_cast %1400 : vector<128xf32> to vector<1x128xf32>
    %1402 = arith.mulf %30, %1370 : vector<16x128xf32>
    %cst_466 = arith.constant dense<0.000000e+00> : vector<128xf32>
    %1403 = vector.multi_reduction <add>, %1402, %cst_466 [0] : vector<16x128xf32> to vector<128xf32>
    %1404 = vector.shape_cast %1403 : vector<128xf32> to vector<1x128xf32>
    %1405 = arith.addf %1401, %1404 : vector<1x128xf32>
    %1406 = arith.mulf %16, %1367 : vector<8x128xf32>
    %cst_467 = arith.constant dense<0.000000e+00> : vector<128xf32>
    %1407 = vector.multi_reduction <add>, %1406, %cst_467 [0] : vector<8x128xf32> to vector<128xf32>
    %1408 = vector.shape_cast %1407 : vector<128xf32> to vector<1x128xf32>
    %1409 = arith.mulf %32, %1370 : vector<16x128xf32>
    %cst_468 = arith.constant dense<0.000000e+00> : vector<128xf32>
    %1410 = vector.multi_reduction <add>, %1409, %cst_468 [0] : vector<16x128xf32> to vector<128xf32>
    %1411 = vector.shape_cast %1410 : vector<128xf32> to vector<1x128xf32>
    %1412 = arith.addf %1408, %1411 : vector<1x128xf32>
    %1413 = arith.mulf %18, %1367 : vector<8x128xf32>
    %cst_469 = arith.constant dense<0.000000e+00> : vector<128xf32>
    %1414 = vector.multi_reduction <add>, %1413, %cst_469 [0] : vector<8x128xf32> to vector<128xf32>
    %1415 = vector.shape_cast %1414 : vector<128xf32> to vector<1x128xf32>
    %1416 = arith.mulf %34, %1370 : vector<16x128xf32>
    %cst_470 = arith.constant dense<0.000000e+00> : vector<128xf32>
    %1417 = vector.multi_reduction <add>, %1416, %cst_470 [0] : vector<16x128xf32> to vector<128xf32>
    %1418 = vector.shape_cast %1417 : vector<128xf32> to vector<1x128xf32>
    %1419 = arith.addf %1415, %1418 : vector<1x128xf32>
    %1420 = arith.mulf %20, %1367 : vector<8x128xf32>
    %cst_471 = arith.constant dense<0.000000e+00> : vector<128xf32>
    %1421 = vector.multi_reduction <add>, %1420, %cst_471 [0] : vector<8x128xf32> to vector<128xf32>
    %1422 = vector.shape_cast %1421 : vector<128xf32> to vector<1x128xf32>
    %1423 = arith.mulf %36, %1370 : vector<16x128xf32>
    %cst_472 = arith.constant dense<0.000000e+00> : vector<128xf32>
    %1424 = vector.multi_reduction <add>, %1423, %cst_472 [0] : vector<16x128xf32> to vector<128xf32>
    %1425 = vector.shape_cast %1424 : vector<128xf32> to vector<1x128xf32>
    %1426 = arith.addf %1422, %1425 : vector<1x128xf32>
    %1427 = tpu.concatenate %1377, %1384, %1391, %1398, %1405, %1412, %1419, %1426 in 0 : vector<1x128xf32>, vector<1x128xf32>, vector<1x128xf32>, vector<1x128xf32>, vector<1x128xf32>, vector<1x128xf32>, vector<1x128xf32>, vector<1x128xf32> -> vector<8x128xf32>
    %c0_473 = arith.constant 0 : index
    %c0_474 = arith.constant 0 : index
    %c0_475 = arith.constant 0 : index
    %1428 = vector.load %arg7[%c0_473, %c0_474, %c0_475] : memref<2x8x128xf32, #tpu.memory_space<vmem>>, vector<1x8x128xf32>
    %1429 = vector.shape_cast %1428 : vector<1x8x128xf32> to vector<8x128xf32>
    %1430 = vector.shape_cast %1427 : vector<8x128xf32> to vector<1x8x128xf32>
    tpu.vector_store %arg7[%c0_473, %c0_474, %c0_475], %1430 {strides = array<i32>} : memref<2x8x128xf32, #tpu.memory_space<vmem>>, vector<1x8x128xf32>,
    %c0_476 = arith.constant 0 : index
    %c1_477 = arith.constant 1 : index
    %1431 = memref.load %arg6[%c0_476, %c1_477] : memref<22x2xf32, #tpu.memory_space<smem>>
    %1432 = vector.broadcast %1431 : f32 to vector<8x128xf32>
    %1433 = arith.mulf %111, %1432 : vector<8x128xf32>
    %c11_478 = arith.constant 11 : index
    %c1_479 = arith.constant 1 : index
    %1434 = memref.load %arg6[%c11_478, %c1_479] : memref<22x2xf32, #tpu.memory_space<smem>>
    %1435 = vector.broadcast %1434 : f32 to vector<16x128xf32>
    %1436 = arith.mulf %836, %1435 : vector<16x128xf32>
    %c1_480 = arith.constant 1 : index
    %c1_481 = arith.constant 1 : index
    %1437 = memref.load %arg6[%c1_480, %c1_481] : memref<22x2xf32, #tpu.memory_space<smem>>
    %1438 = vector.broadcast %1437 : f32 to vector<8x128xf32>
    %1439 = arith.mulf %186, %1438 : vector<8x128xf32>
    %1440 = arith.addf %1433, %1439 : vector<8x128xf32>
    %c12_482 = arith.constant 12 : index
    %c1_483 = arith.constant 1 : index
    %1441 = memref.load %arg6[%c12_482, %c1_483] : memref<22x2xf32, #tpu.memory_space<smem>>
    %1442 = vector.broadcast %1441 : f32 to vector<16x128xf32>
    %1443 = arith.mulf %886, %1442 : vector<16x128xf32>
    %1444 = arith.addf %1436, %1443 : vector<16x128xf32>
    %c2_484 = arith.constant 2 : index
    %c1_485 = arith.constant 1 : index
    %1445 = memref.load %arg6[%c2_484, %c1_485] : memref<22x2xf32, #tpu.memory_space<smem>>
    %1446 = vector.broadcast %1445 : f32 to vector<8x128xf32>
    %1447 = arith.mulf %261, %1446 : vector<8x128xf32>
    %1448 = arith.addf %1440, %1447 : vector<8x128xf32>
    %c13_486 = arith.constant 13 : index
    %c1_487 = arith.constant 1 : index
    %1449 = memref.load %arg6[%c13_486, %c1_487] : memref<22x2xf32, #tpu.memory_space<smem>>
    %1450 = vector.broadcast %1449 : f32 to vector<16x128xf32>
    %1451 = arith.mulf %936, %1450 : vector<16x128xf32>
    %1452 = arith.addf %1444, %1451 : vector<16x128xf32>
    %c3_488 = arith.constant 3 : index
    %c1_489 = arith.constant 1 : index
    %1453 = memref.load %arg6[%c3_488, %c1_489] : memref<22x2xf32, #tpu.memory_space<smem>>
    %1454 = vector.broadcast %1453 : f32 to vector<8x128xf32>
    %1455 = arith.mulf %336, %1454 : vector<8x128xf32>
    %1456 = arith.addf %1448, %1455 : vector<8x128xf32>
    %c14_490 = arith.constant 14 : index
    %c1_491 = arith.constant 1 : index
    %1457 = memref.load %arg6[%c14_490, %c1_491] : memref<22x2xf32, #tpu.memory_space<smem>>
    %1458 = vector.broadcast %1457 : f32 to vector<16x128xf32>
    %1459 = arith.mulf %986, %1458 : vector<16x128xf32>
    %1460 = arith.addf %1452, %1459 : vector<16x128xf32>
    %c4_492 = arith.constant 4 : index
    %c1_493 = arith.constant 1 : index
    %1461 = memref.load %arg6[%c4_492, %c1_493] : memref<22x2xf32, #tpu.memory_space<smem>>
    %1462 = vector.broadcast %1461 : f32 to vector<8x128xf32>
    %1463 = arith.mulf %411, %1462 : vector<8x128xf32>
    %1464 = arith.addf %1456, %1463 : vector<8x128xf32>
    %c15_494 = arith.constant 15 : index
    %c1_495 = arith.constant 1 : index
    %1465 = memref.load %arg6[%c15_494, %c1_495] : memref<22x2xf32, #tpu.memory_space<smem>>
    %1466 = vector.broadcast %1465 : f32 to vector<16x128xf32>
    %1467 = arith.mulf %1036, %1466 : vector<16x128xf32>
    %1468 = arith.addf %1460, %1467 : vector<16x128xf32>
    %c5_496 = arith.constant 5 : index
    %c1_497 = arith.constant 1 : index
    %1469 = memref.load %arg6[%c5_496, %c1_497] : memref<22x2xf32, #tpu.memory_space<smem>>
    %1470 = vector.broadcast %1469 : f32 to vector<8x128xf32>
    %1471 = arith.mulf %486, %1470 : vector<8x128xf32>
    %1472 = arith.addf %1464, %1471 : vector<8x128xf32>
    %c16_498 = arith.constant 16 : index
    %c1_499 = arith.constant 1 : index
    %1473 = memref.load %arg6[%c16_498, %c1_499] : memref<22x2xf32, #tpu.memory_space<smem>>
    %1474 = vector.broadcast %1473 : f32 to vector<16x128xf32>
    %1475 = arith.mulf %1086, %1474 : vector<16x128xf32>
    %1476 = arith.addf %1468, %1475 : vector<16x128xf32>
    %c6_500 = arith.constant 6 : index
    %c1_501 = arith.constant 1 : index
    %1477 = memref.load %arg6[%c6_500, %c1_501] : memref<22x2xf32, #tpu.memory_space<smem>>
    %1478 = vector.broadcast %1477 : f32 to vector<8x128xf32>
    %1479 = arith.mulf %561, %1478 : vector<8x128xf32>
    %1480 = arith.addf %1472, %1479 : vector<8x128xf32>
    %c17_502 = arith.constant 17 : index
    %c1_503 = arith.constant 1 : index
    %1481 = memref.load %arg6[%c17_502, %c1_503] : memref<22x2xf32, #tpu.memory_space<smem>>
    %1482 = vector.broadcast %1481 : f32 to vector<16x128xf32>
    %1483 = arith.mulf %1136, %1482 : vector<16x128xf32>
    %1484 = arith.addf %1476, %1483 : vector<16x128xf32>
    %c7_504 = arith.constant 7 : index
    %c1_505 = arith.constant 1 : index
    %1485 = memref.load %arg6[%c7_504, %c1_505] : memref<22x2xf32, #tpu.memory_space<smem>>
    %1486 = vector.broadcast %1485 : f32 to vector<8x128xf32>
    %1487 = arith.mulf %636, %1486 : vector<8x128xf32>
    %1488 = arith.addf %1480, %1487 : vector<8x128xf32>
    %c18_506 = arith.constant 18 : index
    %c1_507 = arith.constant 1 : index
    %1489 = memref.load %arg6[%c18_506, %c1_507] : memref<22x2xf32, #tpu.memory_space<smem>>
    %1490 = vector.broadcast %1489 : f32 to vector<16x128xf32>
    %1491 = arith.mulf %1186, %1490 : vector<16x128xf32>
    %1492 = arith.addf %1484, %1491 : vector<16x128xf32>
    %c8_508 = arith.constant 8 : index
    %c1_509 = arith.constant 1 : index
    %1493 = memref.load %arg6[%c8_508, %c1_509] : memref<22x2xf32, #tpu.memory_space<smem>>
    %1494 = vector.broadcast %1493 : f32 to vector<8x128xf32>
    %1495 = arith.mulf %711, %1494 : vector<8x128xf32>
    %1496 = arith.addf %1488, %1495 : vector<8x128xf32>
    %c19_510 = arith.constant 19 : index
    %c1_511 = arith.constant 1 : index
    %1497 = memref.load %arg6[%c19_510, %c1_511] : memref<22x2xf32, #tpu.memory_space<smem>>
    %1498 = vector.broadcast %1497 : f32 to vector<16x128xf32>
    %1499 = arith.mulf %1236, %1498 : vector<16x128xf32>
    %1500 = arith.addf %1492, %1499 : vector<16x128xf32>
    %c9_512 = arith.constant 9 : index
    %c1_513 = arith.constant 1 : index
    %1501 = memref.load %arg6[%c9_512, %c1_513] : memref<22x2xf32, #tpu.memory_space<smem>>
    %1502 = vector.broadcast %1501 : f32 to vector<8x128xf32>
    %1503 = arith.mulf %786, %1502 : vector<8x128xf32>
    %1504 = arith.addf %1496, %1503 : vector<8x128xf32>
    %c20_514 = arith.constant 20 : index
    %c1_515 = arith.constant 1 : index
    %1505 = memref.load %arg6[%c20_514, %c1_515] : memref<22x2xf32, #tpu.memory_space<smem>>
    %1506 = vector.broadcast %1505 : f32 to vector<16x128xf32>
    %1507 = arith.mulf %1286, %1506 : vector<16x128xf32>
    %1508 = arith.addf %1500, %1507 : vector<16x128xf32>
    %c10_516 = arith.constant 10 : index
    %c1_517 = arith.constant 1 : index
    %1509 = memref.load %arg6[%c10_516, %c1_517] : memref<22x2xf32, #tpu.memory_space<smem>>
    %1510 = vector.broadcast %1509 : f32 to vector<8x128xf32>
    %1511 = arith.addf %1504, %1510 : vector<8x128xf32>
    %c21_518 = arith.constant 21 : index
    %c1_519 = arith.constant 1 : index
    %1512 = memref.load %arg6[%c21_518, %c1_519] : memref<22x2xf32, #tpu.memory_space<smem>>
    %1513 = vector.broadcast %1512 : f32 to vector<16x128xf32>
    %1514 = arith.addf %1508, %1513 : vector<16x128xf32>
    %1515 = arith.mulf %6, %1511 : vector<8x128xf32>
    %cst_520 = arith.constant dense<0.000000e+00> : vector<128xf32>
    %1516 = vector.multi_reduction <add>, %1515, %cst_520 [0] : vector<8x128xf32> to vector<128xf32>
    %1517 = vector.shape_cast %1516 : vector<128xf32> to vector<1x128xf32>
    %1518 = arith.mulf %22, %1514 : vector<16x128xf32>
    %cst_521 = arith.constant dense<0.000000e+00> : vector<128xf32>
    %1519 = vector.multi_reduction <add>, %1518, %cst_521 [0] : vector<16x128xf32> to vector<128xf32>
    %1520 = vector.shape_cast %1519 : vector<128xf32> to vector<1x128xf32>
    %1521 = arith.addf %1517, %1520 : vector<1x128xf32>
    %1522 = arith.mulf %8, %1511 : vector<8x128xf32>
    %cst_522 = arith.constant dense<0.000000e+00> : vector<128xf32>
    %1523 = vector.multi_reduction <add>, %1522, %cst_522 [0] : vector<8x128xf32> to vector<128xf32>
    %1524 = vector.shape_cast %1523 : vector<128xf32> to vector<1x128xf32>
    %1525 = arith.mulf %24, %1514 : vector<16x128xf32>
    %cst_523 = arith.constant dense<0.000000e+00> : vector<128xf32>
    %1526 = vector.multi_reduction <add>, %1525, %cst_523 [0] : vector<16x128xf32> to vector<128xf32>
    %1527 = vector.shape_cast %1526 : vector<128xf32> to vector<1x128xf32>
    %1528 = arith.addf %1524, %1527 : vector<1x128xf32>
    %1529 = arith.mulf %10, %1511 : vector<8x128xf32>
    %cst_524 = arith.constant dense<0.000000e+00> : vector<128xf32>
    %1530 = vector.multi_reduction <add>, %1529, %cst_524 [0] : vector<8x128xf32> to vector<128xf32>
    %1531 = vector.shape_cast %1530 : vector<128xf32> to vector<1x128xf32>
    %1532 = arith.mulf %26, %1514 : vector<16x128xf32>
    %cst_525 = arith.constant dense<0.000000e+00> : vector<128xf32>
    %1533 = vector.multi_reduction <add>, %1532, %cst_525 [0] : vector<16x128xf32> to vector<128xf32>
    %1534 = vector.shape_cast %1533 : vector<128xf32> to vector<1x128xf32>
    %1535 = arith.addf %1531, %1534 : vector<1x128xf32>
    %1536 = arith.mulf %12, %1511 : vector<8x128xf32>
    %cst_526 = arith.constant dense<0.000000e+00> : vector<128xf32>
    %1537 = vector.multi_reduction <add>, %1536, %cst_526 [0] : vector<8x128xf32> to vector<128xf32>
    %1538 = vector.shape_cast %1537 : vector<128xf32> to vector<1x128xf32>
    %1539 = arith.mulf %28, %1514 : vector<16x128xf32>
    %cst_527 = arith.constant dense<0.000000e+00> : vector<128xf32>
    %1540 = vector.multi_reduction <add>, %1539, %cst_527 [0] : vector<16x128xf32> to vector<128xf32>
    %1541 = vector.shape_cast %1540 : vector<128xf32> to vector<1x128xf32>
    %1542 = arith.addf %1538, %1541 : vector<1x128xf32>
    %1543 = arith.mulf %14, %1511 : vector<8x128xf32>
    %cst_528 = arith.constant dense<0.000000e+00> : vector<128xf32>
    %1544 = vector.multi_reduction <add>, %1543, %cst_528 [0] : vector<8x128xf32> to vector<128xf32>
    %1545 = vector.shape_cast %1544 : vector<128xf32> to vector<1x128xf32>
    %1546 = arith.mulf %30, %1514 : vector<16x128xf32>
    %cst_529 = arith.constant dense<0.000000e+00> : vector<128xf32>
    %1547 = vector.multi_reduction <add>, %1546, %cst_529 [0] : vector<16x128xf32> to vector<128xf32>
    %1548 = vector.shape_cast %1547 : vector<128xf32> to vector<1x128xf32>
    %1549 = arith.addf %1545, %1548 : vector<1x128xf32>
    %1550 = arith.mulf %16, %1511 : vector<8x128xf32>
    %cst_530 = arith.constant dense<0.000000e+00> : vector<128xf32>
    %1551 = vector.multi_reduction <add>, %1550, %cst_530 [0] : vector<8x128xf32> to vector<128xf32>
    %1552 = vector.shape_cast %1551 : vector<128xf32> to vector<1x128xf32>
    %1553 = arith.mulf %32, %1514 : vector<16x128xf32>
    %cst_531 = arith.constant dense<0.000000e+00> : vector<128xf32>
    %1554 = vector.multi_reduction <add>, %1553, %cst_531 [0] : vector<16x128xf32> to vector<128xf32>
    %1555 = vector.shape_cast %1554 : vector<128xf32> to vector<1x128xf32>
    %1556 = arith.addf %1552, %1555 : vector<1x128xf32>
    %1557 = arith.mulf %18, %1511 : vector<8x128xf32>
    %cst_532 = arith.constant dense<0.000000e+00> : vector<128xf32>
    %1558 = vector.multi_reduction <add>, %1557, %cst_532 [0] : vector<8x128xf32> to vector<128xf32>
    %1559 = vector.shape_cast %1558 : vector<128xf32> to vector<1x128xf32>
    %1560 = arith.mulf %34, %1514 : vector<16x128xf32>
    %cst_533 = arith.constant dense<0.000000e+00> : vector<128xf32>
    %1561 = vector.multi_reduction <add>, %1560, %cst_533 [0] : vector<16x128xf32> to vector<128xf32>
    %1562 = vector.shape_cast %1561 : vector<128xf32> to vector<1x128xf32>
    %1563 = arith.addf %1559, %1562 : vector<1x128xf32>
    %1564 = arith.mulf %20, %1511 : vector<8x128xf32>
    %cst_534 = arith.constant dense<0.000000e+00> : vector<128xf32>
    %1565 = vector.multi_reduction <add>, %1564, %cst_534 [0] : vector<8x128xf32> to vector<128xf32>
    %1566 = vector.shape_cast %1565 : vector<128xf32> to vector<1x128xf32>
    %1567 = arith.mulf %36, %1514 : vector<16x128xf32>
    %cst_535 = arith.constant dense<0.000000e+00> : vector<128xf32>
    %1568 = vector.multi_reduction <add>, %1567, %cst_535 [0] : vector<16x128xf32> to vector<128xf32>
    %1569 = vector.shape_cast %1568 : vector<128xf32> to vector<1x128xf32>
    %1570 = arith.addf %1566, %1569 : vector<1x128xf32>
    %1571 = tpu.concatenate %1521, %1528, %1535, %1542, %1549, %1556, %1563, %1570 in 0 : vector<1x128xf32>, vector<1x128xf32>, vector<1x128xf32>, vector<1x128xf32>, vector<1x128xf32>, vector<1x128xf32>, vector<1x128xf32>, vector<1x128xf32> -> vector<8x128xf32>
    %c1_536 = arith.constant 1 : index
    %c0_537 = arith.constant 0 : index
    %c0_538 = arith.constant 0 : index
    %1572 = vector.load %arg7[%c1_536, %c0_537, %c0_538] : memref<2x8x128xf32, #tpu.memory_space<vmem>>, vector<1x8x128xf32>
    %1573 = vector.shape_cast %1572 : vector<1x8x128xf32> to vector<8x128xf32>
    %1574 = vector.shape_cast %1571 : vector<8x128xf32> to vector<1x8x128xf32>
    tpu.vector_store %arg7[%c1_536, %c0_537, %c0_538], %1574 {strides = array<i32>} : memref<2x8x128xf32, #tpu.memory_space<vmem>>, vector<1x8x128xf32>,
    return
  }
  func.func @transform_0(%arg0: i32) -> (i32, i32, i32) {
    %c0_i32 = arith.constant 0 : i32
    %c0_i32_0 = arith.constant 0 : i32
    %c0_i32_1 = arith.constant 0 : i32
    return %c0_i32, %c0_i32_0, %arg0 : i32, i32, i32
  }
  func.func @transform_1(%arg0: i32) -> (i32, i32, i32) {
    %c0_i32 = arith.constant 0 : i32
    %c0_i32_0 = arith.constant 0 : i32
    %c0_i32_1 = arith.constant 0 : i32
    return %c0_i32, %c0_i32_0, %arg0 : i32, i32, i32
  }
  func.func @transform_2(%arg0: i32) -> (i32, i32, i32) {
    %c0_i32 = arith.constant 0 : i32
    %c0_i32_0 = arith.constant 0 : i32
    %c0_i32_1 = arith.constant 0 : i32
    return %c0_i32, %c0_i32_0, %arg0 : i32, i32, i32
  }
  func.func @transform_3(%arg0: i32) -> (i32, i32) {
    %c0_i32 = arith.constant 0 : i32
    %c0_i32_0 = arith.constant 0 : i32
    return %c0_i32, %arg0 : i32, i32
  }
  func.func @transform_4(%arg0: i32) -> (i32, i32) {
    %c0_i32 = arith.constant 0 : i32
    %c0_i32_0 = arith.constant 0 : i32
    %c0_i32_1 = arith.constant 0 : i32
    return %c0_i32, %c0_i32_0 : i32, i32
  }
  func.func @transform_5(%arg0: i32) -> (i32, i32) {
    %c0_i32 = arith.constant 0 : i32
    %c0_i32_0 = arith.constant 0 : i32
    %c0_i32_1 = arith.constant 0 : i32
    return %c0_i32, %c0_i32_0 : i32, i32
  }
  func.func @transform_6(%arg0: i32) -> (i32, i32, i32) {
    %c0_i32 = arith.constant 0 : i32
    %c0_i32_0 = arith.constant 0 : i32
    %c0_i32_1 = arith.constant 0 : i32
    return %c0_i32, %c0_i32_0, %arg0 : i32, i32, i32
  }
}

</mosaic_0001>

<llo_original>
// kernel: tpu_custom_call.1
$region0: #{tpu_custom_call.1}
  #allocation0 [shape = 'u32[]', space=smem, size = 0x4, offset = 0x4, fixed_abs, tag = 'smem constant byte address 0x4 - core index']
  #allocation1 [shape = 'u32[72,128]{1,0:T(1,128)}', space=vmem, size = 0x9000, scoped, tag = 'internal scratch']
  %s0 = inlined_call_operand.hbm [shape: f32[8,8,128], index: 0, kind: input, shape index: {}]
  %s1 = inlined_call_operand.hbm [shape: f32[8,16,128], index: 1, kind: input, shape index: {}]
  %s2 = inlined_call_operand.vmem [shape: f32[2,8,128], index: 2, kind: input, shape index: {}]
  %s3 = inlined_call_operand.hbm [shape: f32[16,128], index: 3, kind: input, shape index: {}]
  %s4 = inlined_call_operand.hbm [shape: f32[10,10], index: 4, kind: input, shape index: {}]
  %s5 = inlined_call_operand.vmem [shape: f32[22,2], index: 5, kind: input, shape index: {}]
  %s6 = inlined_call_operand.hbm [shape: f32[2,8,128], index: 6, kind: output, shape index: {}]
  %s7 = sld [smem:[#allocation0]]
  $region54: #{tpu_custom_call.1} parent=0
    _
  %s9 = ssub.s32 1, %s7
  %s10 = scalar_select 0, %s9, %s7
  $region1: #{tpu_custom_call.1} parent=0
    #allocation2 [shape = 'u8[32768]{0}', space=vmem, size = 0x8000, scoped, tag = 'input window, operand 0, single buffered']
    #allocation3 [shape = 's32[1]{0}', space=sflag, size = 0x4, scoped, tag = 'scoped memory for tpu_custom_call.1']
    #allocation4 [shape = 's32[1]{0}', space=sflag, size = 0x4, scoped, tag = 'scoped memory for tpu_custom_call.1']
    #allocation5 [shape = 's32[1]{0}', space=sflag, size = 0x4, scoped, tag = 'scoped memory for tpu_custom_call.1']
    #allocation6 [shape = 's32[1]{0}', space=sflag, size = 0x4, scoped, tag = 'scoped memory for tpu_custom_call.1']
    #allocation7 [shape = 'u8[65536]{0}', space=vmem, size = 0x10000, scoped, tag = 'input window, operand 1, single buffered']
    #allocation8 [shape = 's32[1]{0}', space=sflag, size = 0x4, scoped, tag = 'scoped memory for tpu_custom_call.1']
    #allocation9 [shape = 'u8[8192]{0}', space=vmem, size = 0x2000, scoped, tag = 'input window, operand 3, single buffered']
    #allocation10 [shape = 'u8[8192]{0}', space=smem, size = 0x2000, scoped, tag = 'input window, operand 4, single buffered']
    #allocation11 [shape = 'u8[12288]{0}', space=smem, size = 0x3000, scoped, tag = 'input window, operand 5, single buffered']
    #allocation12 [shape = 'u8[8192]{0}', space=vmem, size = 0x2000, scoped, tag = 'output window, operand 0, single buffered']
    %11 = vsyncpa [#allocation3], 0
    %12 = vsyncpa [#allocation8], 0
    %13 = vsyncpa [#allocation5], 0
    %14 = vsyncpa [#allocation6], 0
    %15 = vsyncpa [#allocation4], 0
    // Predicated region
    $region2: #{tpu_custom_call.1} parent=1 // pred_check
      _
    $region3: #{tpu_custom_call.1} parent=1 // pred_check_branch
      %17 = sbr.rel (0) target = $region5
    $region4: #{tpu_custom_call.1} parent=1 // pred_region
      %19 = vsyncadd [#allocation3], 0
      %s20 = sshll.u32 %s0, 4
      %s21 = int_to_ptr.hbm [resolvable:$true] %s20
      %s22 = sshll.u32 [#allocation2], 4
      %s23 = int_to_ptr.vmem [resolvable:$true] %s22
      %28 = dma.hbm_to_vmem [thread:$0]  %s21, 1024, %s23, [#allocation3], 128, 128, 8
    $region5: #{tpu_custom_call.1} parent=1 // pred_fallthru
      _
    // Predicated region
    $region6: #{tpu_custom_call.1} parent=1 // pred_check
      _
    $region7: #{tpu_custom_call.1} parent=1 // pred_check_branch
      %30 = sbr.rel (0) target = $region9
    $region8: #{tpu_custom_call.1} parent=1 // pred_region
      %32 = vsyncadd [#allocation8], 0
      %s33 = sshll.u32 %s1, 4
      %s34 = int_to_ptr.hbm [resolvable:$true] %s33
      %s35 = sshll.u32 [#allocation7], 4
      %s36 = int_to_ptr.vmem [resolvable:$true] %s35
      %41 = dma.hbm_to_vmem [thread:$0]  %s34, 2048, %s36, [#allocation8], 128, 128, 8
    $region9: #{tpu_custom_call.1} parent=1 // pred_fallthru
      _
    // Predicated region
    $region10: #{tpu_custom_call.1} parent=1 // pred_check
      _
    $region11: #{tpu_custom_call.1} parent=1 // pred_check_branch
      %43 = sbr.rel (0) target = $region13
    $region12: #{tpu_custom_call.1} parent=1 // pred_region
      _
    $region13: #{tpu_custom_call.1} parent=1 // pred_fallthru
      _
    // Predicated region
    $region14: #{tpu_custom_call.1} parent=1 // pred_check
      _
    $region15: #{tpu_custom_call.1} parent=1 // pred_check_branch
      %45 = sbr.rel (0) target = $region17
    $region16: #{tpu_custom_call.1} parent=1 // pred_region
      %47 = vsyncadd [#allocation8], 0
      %s48 = sshll.u32 %s3, 4
      %s49 = int_to_ptr.hbm [resolvable:$true] %s48
      %s50 = sshll.u32 [#allocation9], 4
      %s51 = int_to_ptr.vmem [resolvable:$true] %s50
      %56 = dma.hbm_to_vmem [thread:$0]  %s49, 256, %s51, [#allocation8], 128, 128, 8
    $region17: #{tpu_custom_call.1} parent=1 // pred_fallthru
      _
    // Predicated region
    $region18: #{tpu_custom_call.1} parent=1 // pred_check
      _
    $region19: #{tpu_custom_call.1} parent=1 // pred_check_branch
      %58 = sbr.rel (0) target = $region21
    $region20: #{tpu_custom_call.1} parent=1 // pred_region
      %60 = vsyncadd [#allocation5], 0
      %s61 = sshll.u32 %s4, 4
      %s62 = int_to_ptr.hbm [resolvable:$true] %s61
      %67 = dma.hbm_to_smem %s62, 256, [#allocation10], [#allocation5], 128, 128, 8
    $region21: #{tpu_custom_call.1} parent=1 // pred_fallthru
      _
    // Predicated region
    $region22: #{tpu_custom_call.1} parent=1 // pred_check
      _
    $region23: #{tpu_custom_call.1} parent=1 // pred_check_branch
      %69 = sbr.rel (0) target = $region25
    $region24: #{tpu_custom_call.1} parent=1 // pred_region
      %71 = vsyncadd [#allocation6], 0
      %s72 = sshll.u32 %s5, 4
      %s73 = int_to_ptr.vmem [resolvable:$true] %s72
      %78 = dma.vmem_to_smem %s73, 384, [#allocation11], [#allocation6], 128, 128, 8
    $region25: #{tpu_custom_call.1} parent=1 // pred_fallthru
      _
    // Predicated region
    $region26: #{tpu_custom_call.1} parent=1 // pred_check
      _
    $region27: #{tpu_custom_call.1} parent=1 // pred_check_branch
      %80 = sbr.rel (0) target = $region29
    $region28: #{tpu_custom_call.1} parent=1 // pred_region
      %82 = dma.done [#allocation3], 1024
    $region29: #{tpu_custom_call.1} parent=1 // pred_fallthru
      _
    // Predicated region
    $region30: #{tpu_custom_call.1} parent=1 // pred_check
      _
    $region31: #{tpu_custom_call.1} parent=1 // pred_check_branch
      %84 = sbr.rel (0) target = $region33
    $region32: #{tpu_custom_call.1} parent=1 // pred_region
      %86 = dma.done [#allocation8], 2048
    $region33: #{tpu_custom_call.1} parent=1 // pred_fallthru
      _
    // Predicated region
    $region34: #{tpu_custom_call.1} parent=1 // pred_check
      _
    $region35: #{tpu_custom_call.1} parent=1 // pred_check_branch
      %88 = sbr.rel (0) target = $region37
    $region36: #{tpu_custom_call.1} parent=1 // pred_region
      %90 = dma.done [#allocation8], 256
    $region37: #{tpu_custom_call.1} parent=1 // pred_fallthru
      _
    // Predicated region
    $region38: #{tpu_custom_call.1} parent=1 // pred_check
      _
    $region39: #{tpu_custom_call.1} parent=1 // pred_check_branch
      %92 = sbr.rel (0) target = $region41
    $region40: #{tpu_custom_call.1} parent=1 // pred_region
      %94 = dma.done [#allocation5], 256
    $region41: #{tpu_custom_call.1} parent=1 // pred_fallthru
      _
    // Predicated region
    $region42: #{tpu_custom_call.1} parent=1 // pred_check
      _
    $region43: #{tpu_custom_call.1} parent=1 // pred_check_branch
      %96 = sbr.rel (0) target = $region45
    $region44: #{tpu_custom_call.1} parent=1 // pred_region
      %98 = dma.done [#allocation6], 384
    $region45: #{tpu_custom_call.1} parent=1 // pred_fallthru
      _
    %99 = sfence
    %v100 = vld [vmem:[%s2] sm:$0xff]
    %s101 = scalar_lea.vmem %s2, 8
    %v102 = vld [vmem:[%s101] sm:$0xff]
    %v103 = vld [vmem:[#allocation9] sm:$0xff]
    %v104 = vld [vmem:[#allocation9 + $0x8] sm:$0xff]
    %v105 = vld [vmem:[#allocation2] sm:$0xff]
    %s106 = scalar_lea.vmem [#allocation2], 8
    %v107 = vld [vmem:[%s106] sm:$0xff]
    %s108 = scalar_lea.vmem [#allocation2], 16
    %v109 = vld [vmem:[%s108] sm:$0xff]
    %s110 = scalar_lea.vmem [#allocation2], 24
    %v111 = vld [vmem:[%s110] sm:$0xff]
    %s112 = scalar_lea.vmem [#allocation2], 32
    %v113 = vld [vmem:[%s112] sm:$0xff]
    %s114 = scalar_lea.vmem [#allocation2], 40
    %v115 = vld [vmem:[%s114] sm:$0xff]
    %s116 = scalar_lea.vmem [#allocation2], 48
    %v117 = vld [vmem:[%s116] sm:$0xff]
    %s118 = scalar_lea.vmem [#allocation2], 56
    %v119 = vld [vmem:[%s118] sm:$0xff]
    %v120 = vld [vmem:[#allocation7] sm:$0xff]
    %v121 = vld [vmem:[#allocation7 + $0x8] sm:$0xff]
    %s122 = scalar_lea.vmem [#allocation7], 16
    %v123 = vld [vmem:[%s122] sm:$0xff]
    %v124 = vld [vmem:[%s122 + $0x8] sm:$0xff]
    %s125 = scalar_lea.vmem [#allocation7], 32
    %v126 = vld [vmem:[%s125] sm:$0xff]
    %v127 = vld [vmem:[%s125 + $0x8] sm:$0xff]
    %s128 = scalar_lea.vmem [#allocation7], 48
    %v129 = vld [vmem:[%s128] sm:$0xff]
    %v130 = vld [vmem:[%s128 + $0x8] sm:$0xff]
    %s131 = scalar_lea.vmem [#allocation7], 64
    %v132 = vld [vmem:[%s131] sm:$0xff]
    %v133 = vld [vmem:[%s131 + $0x8] sm:$0xff]
    %s134 = scalar_lea.vmem [#allocation7], 80
    %v135 = vld [vmem:[%s134] sm:$0xff]
    %v136 = vld [vmem:[%s134 + $0x8] sm:$0xff]
    %s137 = scalar_lea.vmem [#allocation7], 96
    %v138 = vld [vmem:[%s137] sm:$0xff]
    %v139 = vld [vmem:[%s137 + $0x8] sm:$0xff]
    %s140 = scalar_lea.vmem [#allocation7], 112
    %v141 = vld [vmem:[%s140] sm:$0xff]
    %v142 = vld [vmem:[%s140 + $0x8] sm:$0xff]
    %s143 = sld [smem:[#allocation10]]
    %v144 = vstv %s143
    %v145 = vmul.f32 %v100, %v144
    %s146 = sld [smem:[#allocation10 + $0x80]]
    %v147 = vstv %s146
    %v148 = vmul.f32 %v102, %v147
    %v149 = vadd.f32 %v145, %v148
    %s150 = sld [smem:[#allocation10 + $0x100]]
    %v151 = vstv %s150
    %v152 = vadd.f32 %v149, %v151
    %s153 = sld [smem:[#allocation10 + $0x180]]
    %v154 = vstv %s153
    %v155 = vmul.f32 %v103, %v154
    %v156 = vmul.f32 %v104, %v154
    %s157 = sld [smem:[#allocation10 + $0x200]]
    %v158 = vstv %s157
    %v159 = vadd.f32 %v155, %v158
    %v160 = vadd.f32 %v156, %v158
    %v161 = vmul.f32 %v105, %v152
    %v162 = vrot.slane %v161, 4
    %v163 = vadd.f32 %v161, %v162
    %v164 = vrot.slane %v163, 2
    %v165 = vadd.f32 %v163, %v164
    %v166 = vrot.slane %v165, 1
    %v167 = vadd.f32 %v165, %v166
    %v168 = vmul.f32 %v120, %v159
    %v169 = vmul.f32 %v121, %v160
    %v170 = vadd.f32 %v168, %v169
    %v171 = vrot.slane %v170, 4
    %v172 = vadd.f32 %v170, %v171
    %v173 = vrot.slane %v172, 2
    %v174 = vadd.f32 %v172, %v173
    %v175 = vrot.slane %v174, 1
    %v176 = vadd.f32 %v174, %v175
    %v177 = vadd.f32 %v167, %v176
    %v178 = vmul.f32 %v107, %v152
    %v179 = vrot.slane %v178, 4
    %v180 = vadd.f32 %v178, %v179
    %v181 = vrot.slane %v180, 2
    %v182 = vadd.f32 %v180, %v181
    %v183 = vrot.slane %v182, 1
    %v184 = vadd.f32 %v182, %v183
    %v185 = vmul.f32 %v123, %v159
    %v186 = vmul.f32 %v124, %v160
    %v187 = vadd.f32 %v185, %v186
    %v188 = vrot.slane %v187, 4
    %v189 = vadd.f32 %v187, %v188
    %v190 = vrot.slane %v189, 2
    %v191 = vadd.f32 %v189, %v190
    %v192 = vrot.slane %v191, 1
    %v193 = vadd.f32 %v191, %v192
    %v194 = vadd.f32 %v184, %v193
    %v195 = vmul.f32 %v109, %v152
    %v196 = vrot.slane %v195, 4
    %v197 = vadd.f32 %v195, %v196
    %v198 = vrot.slane %v197, 2
    %v199 = vadd.f32 %v197, %v198
    %v200 = vrot.slane %v199, 1
    %v201 = vadd.f32 %v199, %v200
    %v202 = vmul.f32 %v126, %v159
    %v203 = vmul.f32 %v127, %v160
    %v204 = vadd.f32 %v202, %v203
    %v205 = vrot.slane %v204, 4
    %v206 = vadd.f32 %v204, %v205
    %v207 = vrot.slane %v206, 2
    %v208 = vadd.f32 %v206, %v207
    %v209 = vrot.slane %v208, 1
    %v210 = vadd.f32 %v208, %v209
    %v211 = vadd.f32 %v201, %v210
    %v212 = vmul.f32 %v111, %v152
    %v213 = vrot.slane %v212, 4
    %v214 = vadd.f32 %v212, %v213
    %v215 = vrot.slane %v214, 2
    %v216 = vadd.f32 %v214, %v215
    %v217 = vrot.slane %v216, 1
    %v218 = vadd.f32 %v216, %v217
    %v219 = vmul.f32 %v129, %v159
    %v220 = vmul.f32 %v130, %v160
    %v221 = vadd.f32 %v219, %v220
    %v222 = vrot.slane %v221, 4
    %v223 = vadd.f32 %v221, %v222
    %v224 = vrot.slane %v223, 2
    %v225 = vadd.f32 %v223, %v224
    %v226 = vrot.slane %v225, 1
    %v227 = vadd.f32 %v225, %v226
    %v228 = vadd.f32 %v218, %v227
    %v229 = vmul.f32 %v113, %v152
    %v230 = vrot.slane %v229, 4
    %v231 = vadd.f32 %v229, %v230
    %v232 = vrot.slane %v231, 2
    %v233 = vadd.f32 %v231, %v232
    %v234 = vrot.slane %v233, 1
    %v235 = vadd.f32 %v233, %v234
    %v236 = vmul.f32 %v132, %v159
    %v237 = vmul.f32 %v133, %v160
    %v238 = vadd.f32 %v236, %v237
    %v239 = vrot.slane %v238, 4
    %v240 = vadd.f32 %v238, %v239
    %v241 = vrot.slane %v240, 2
    %v242 = vadd.f32 %v240, %v241
    %v243 = vrot.slane %v242, 1
    %v244 = vadd.f32 %v242, %v243
    %v245 = vadd.f32 %v235, %v244
    %v246 = vmul.f32 %v115, %v152
    %v247 = vrot.slane %v246, 4
    %v248 = vadd.f32 %v246, %v247
    %v249 = vrot.slane %v248, 2
    %v250 = vadd.f32 %v248, %v249
    %v251 = vrot.slane %v250, 1
    %v252 = vadd.f32 %v250, %v251
    %v253 = vmul.f32 %v135, %v159
    %v254 = vmul.f32 %v136, %v160
    %v255 = vadd.f32 %v253, %v254
    %v256 = vrot.slane %v255, 4
    %v257 = vadd.f32 %v255, %v256
    %v258 = vrot.slane %v257, 2
    %v259 = vadd.f32 %v257, %v258
    %v260 = vrot.slane %v259, 1
    %v261 = vadd.f32 %v259, %v260
    %v262 = vadd.f32 %v252, %v261
    %v263 = vmul.f32 %v117, %v152
    %v264 = vrot.slane %v263, 4
    %v265 = vadd.f32 %v263, %v264
    %v266 = vrot.slane %v265, 2
    %v267 = vadd.f32 %v265, %v266
    %v268 = vrot.slane %v267, 1
    %v269 = vadd.f32 %v267, %v268
    %v270 = vmul.f32 %v138, %v159
    %v271 = vmul.f32 %v139, %v160
    %v272 = vadd.f32 %v270, %v271
    %v273 = vrot.slane %v272, 4
    %v274 = vadd.f32 %v272, %v273
    %v275 = vrot.slane %v274, 2
    %v276 = vadd.f32 %v274, %v275
    %v277 = vrot.slane %v276, 1
    %v278 = vadd.f32 %v276, %v277
    %v279 = vadd.f32 %v269, %v278
    %v280 = vmul.f32 %v119, %v152
    %v281 = vrot.slane %v280, 4
    %v282 = vadd.f32 %v280, %v281
    %v283 = vrot.slane %v282, 2
    %v284 = vadd.f32 %v282, %v283
    %v285 = vrot.slane %v284, 1
    %v286 = vadd.f32 %v284, %v285
    %v287 = vmul.f32 %v141, %v159
    %v288 = vmul.f32 %v142, %v160
    %v289 = vadd.f32 %v287, %v288
    %v290 = vrot.slane %v289, 4
    %v291 = vadd.f32 %v289, %v290
    %v292 = vrot.slane %v291, 2
    %v293 = vadd.f32 %v291, %v292
    %v294 = vrot.slane %v293, 1
    %v295 = vadd.f32 %v293, %v294
    %v296 = vadd.f32 %v286, %v295
    %vm297 = vcmask 1040384
    %v298 = vsel %vm297, %v177, %v194
    %vm299 = vcmask 1041408
    %v300 = vsel %vm299, %v298, %v211
    %vm301 = vcmask 1042432
    %v302 = vsel %vm301, %v300, %v228
    %vm303 = vcmask 1043456
    %v304 = vsel %vm303, %v302, %v245
    %vm305 = vcmask 1044480
    %v306 = vsel %vm305, %v304, %v262
    %vm307 = vcmask 1045504
    %v308 = vsel %vm307, %v306, %v279
    %vm309 = vcmask 1046528
    %v310 = vsel %vm309, %v308, %v296
    %v311 = vmax.f32 %v310, 0.0
    %s312 = sld [smem:[#allocation10 + $0x1]]
    %v313 = vstv %s312
    %v314 = vmul.f32 %v100, %v313
    %s315 = sld [smem:[#allocation10 + $0x81]]
    %v316 = vstv %s315
    %v317 = vmul.f32 %v102, %v316
    %v318 = vadd.f32 %v314, %v317
    %s319 = sld [smem:[#allocation10 + $0x101]]
    %v320 = vstv %s319
    %v321 = vadd.f32 %v318, %v320
    %s322 = sld [smem:[#allocation10 + $0x181]]
    %v323 = vstv %s322
    %v324 = vmul.f32 %v103, %v323
    %v325 = vmul.f32 %v104, %v323
    %s326 = sld [smem:[#allocation10 + $0x201]]
    %v327 = vstv %s326
    %v328 = vadd.f32 %v324, %v327
    %v329 = vadd.f32 %v325, %v327
    %v330 = vmul.f32 %v105, %v321
    %v331 = vrot.slane %v330, 4
    %v332 = vadd.f32 %v330, %v331
    %v333 = vrot.slane %v332, 2
    %v334 = vadd.f32 %v332, %v333
    %v335 = vrot.slane %v334, 1
    %v336 = vadd.f32 %v334, %v335
    %v337 = vmul.f32 %v120, %v328
    %v338 = vmul.f32 %v121, %v329
    %v339 = vadd.f32 %v337, %v338
    %v340 = vrot.slane %v339, 4
    %v341 = vadd.f32 %v339, %v340
    %v342 = vrot.slane %v341, 2
    %v343 = vadd.f32 %v341, %v342
    %v344 = vrot.slane %v343, 1
    %v345 = vadd.f32 %v343, %v344
    %v346 = vadd.f32 %v336, %v345
    %v347 = vmul.f32 %v107, %v321
    %v348 = vrot.slane %v347, 4
    %v349 = vadd.f32 %v347, %v348
    %v350 = vrot.slane %v349, 2
    %v351 = vadd.f32 %v349, %v350
    %v352 = vrot.slane %v351, 1
    %v353 = vadd.f32 %v351, %v352
    %v354 = vmul.f32 %v123, %v328
    %v355 = vmul.f32 %v124, %v329
    %v356 = vadd.f32 %v354, %v355
    %v357 = vrot.slane %v356, 4
    %v358 = vadd.f32 %v356, %v357
    %v359 = vrot.slane %v358, 2
    %v360 = vadd.f32 %v358, %v359
    %v361 = vrot.slane %v360, 1
    %v362 = vadd.f32 %v360, %v361
    %v363 = vadd.f32 %v353, %v362
    %v364 = vmul.f32 %v109, %v321
    %v365 = vrot.slane %v364, 4
    %v366 = vadd.f32 %v364, %v365
    %v367 = vrot.slane %v366, 2
    %v368 = vadd.f32 %v366, %v367
    %v369 = vrot.slane %v368, 1
    %v370 = vadd.f32 %v368, %v369
    %v371 = vmul.f32 %v126, %v328
    %v372 = vmul.f32 %v127, %v329
    %v373 = vadd.f32 %v371, %v372
    %v374 = vrot.slane %v373, 4
    %v375 = vadd.f32 %v373, %v374
    %v376 = vrot.slane %v375, 2
    %v377 = vadd.f32 %v375, %v376
    %v378 = vrot.slane %v377, 1
    %v379 = vadd.f32 %v377, %v378
    %v380 = vadd.f32 %v370, %v379
    %v381 = vmul.f32 %v111, %v321
    %v382 = vrot.slane %v381, 4
    %v383 = vadd.f32 %v381, %v382
    %v384 = vrot.slane %v383, 2
    %v385 = vadd.f32 %v383, %v384
    %v386 = vrot.slane %v385, 1
    %v387 = vadd.f32 %v385, %v386
    %v388 = vmul.f32 %v129, %v328
    %v389 = vmul.f32 %v130, %v329
    %v390 = vadd.f32 %v388, %v389
    %v391 = vrot.slane %v390, 4
    %v392 = vadd.f32 %v390, %v391
    %v393 = vrot.slane %v392, 2
    %v394 = vadd.f32 %v392, %v393
    %v395 = vrot.slane %v394, 1
    %v396 = vadd.f32 %v394, %v395
    %v397 = vadd.f32 %v387, %v396
    %v398 = vmul.f32 %v113, %v321
    %v399 = vrot.slane %v398, 4
    %v400 = vadd.f32 %v398, %v399
    %v401 = vrot.slane %v400, 2
    %v402 = vadd.f32 %v400, %v401
    %v403 = vrot.slane %v402, 1
    %v404 = vadd.f32 %v402, %v403
    %v405 = vmul.f32 %v132, %v328
    %v406 = vmul.f32 %v133, %v329
    %v407 = vadd.f32 %v405, %v406
    %v408 = vrot.slane %v407, 4
    %v409 = vadd.f32 %v407, %v408
    %v410 = vrot.slane %v409, 2
    %v411 = vadd.f32 %v409, %v410
    %v412 = vrot.slane %v411, 1
    %v413 = vadd.f32 %v411, %v412
    %v414 = vadd.f32 %v404, %v413
    %v415 = vmul.f32 %v115, %v321
    %v416 = vrot.slane %v415, 4
    %v417 = vadd.f32 %v415, %v416
    %v418 = vrot.slane %v417, 2
    %v419 = vadd.f32 %v417, %v418
    %v420 = vrot.slane %v419, 1
    %v421 = vadd.f32 %v419, %v420
    %v422 = vmul.f32 %v135, %v328
    %v423 = vmul.f32 %v136, %v329
    %v424 = vadd.f32 %v422, %v423
    %v425 = vrot.slane %v424, 4
    %v426 = vadd.f32 %v424, %v425
    %v427 = vrot.slane %v426, 2
    %v428 = vadd.f32 %v426, %v427
    %v429 = vrot.slane %v428, 1
    %v430 = vadd.f32 %v428, %v429
    %v431 = vadd.f32 %v421, %v430
    %v432 = vmul.f32 %v117, %v321
    %v433 = vrot.slane %v432, 4
    %v434 = vadd.f32 %v432, %v433
    %v435 = vrot.slane %v434, 2
    %v436 = vadd.f32 %v434, %v435
    %v437 = vrot.slane %v436, 1
    %v438 = vadd.f32 %v436, %v437
    %v439 = vmul.f32 %v138, %v328
    %v440 = vmul.f32 %v139, %v329
    %v441 = vadd.f32 %v439, %v440
    %v442 = vrot.slane %v441, 4
    %v443 = vadd.f32 %v441, %v442
    %v444 = vrot.slane %v443, 2
    %v445 = vadd.f32 %v443, %v444
    %v446 = vrot.slane %v445, 1
    %v447 = vadd.f32 %v445, %v446
    %v448 = vadd.f32 %v438, %v447
    %v449 = vmul.f32 %v119, %v321
    %v450 = vrot.slane %v449, 4
    %v451 = vadd.f32 %v449, %v450
    %v452 = vrot.slane %v451, 2
    %v453 = vadd.f32 %v451, %v452
    %v454 = vrot.slane %v453, 1
    %v455 = vadd.f32 %v453, %v454
    %v456 = vmul.f32 %v141, %v328
    %v457 = vmul.f32 %v142, %v329
    %v458 = vadd.f32 %v456, %v457
    %v459 = vrot.slane %v458, 4
    %v460 = vadd.f32 %v458, %v459
    %v461 = vrot.slane %v460, 2
    %v462 = vadd.f32 %v460, %v461
    %v463 = vrot.slane %v462, 1
    %v464 = vadd.f32 %v462, %v463
    %v465 = vadd.f32 %v455, %v464
    %v466 = vsel %vm297, %v346, %v363
    %v467 = vsel %vm299, %v466, %v380
    %v468 = vsel %vm301, %v467, %v397
    %v469 = vsel %vm303, %v468, %v414
    %v470 = vsel %vm305, %v469, %v431
    %v471 = vsel %vm307, %v470, %v448
    %v472 = vsel %vm309, %v471, %v465
    %v473 = vmax.f32 %v472, 0.0
    %s474 = sld [smem:[#allocation10 + $0x2]]
    %v475 = vstv %s474
    %v476 = vmul.f32 %v100, %v475
    %s477 = sld [smem:[#allocation10 + $0x82]]
    %v478 = vstv %s477
    %v479 = vmul.f32 %v102, %v478
    %v480 = vadd.f32 %v476, %v479
    %s481 = sld [smem:[#allocation10 + $0x102]]
    %v482 = vstv %s481
    %v483 = vadd.f32 %v480, %v482
    %s484 = sld [smem:[#allocation10 + $0x182]]
    %v485 = vstv %s484
    %v486 = vmul.f32 %v103, %v485
    %v487 = vmul.f32 %v104, %v485
    %s488 = sld [smem:[#allocation10 + $0x202]]
    %v489 = vstv %s488
    %v490 = vadd.f32 %v486, %v489
    %v491 = vadd.f32 %v487, %v489
    %v492 = vmul.f32 %v105, %v483
    %v493 = vrot.slane %v492, 4
    %v494 = vadd.f32 %v492, %v493
    %v495 = vrot.slane %v494, 2
    %v496 = vadd.f32 %v494, %v495
    %v497 = vrot.slane %v496, 1
    %v498 = vadd.f32 %v496, %v497
    %v499 = vmul.f32 %v120, %v490
    %v500 = vmul.f32 %v121, %v491
    %v501 = vadd.f32 %v499, %v500
    %v502 = vrot.slane %v501, 4
    %v503 = vadd.f32 %v501, %v502
    %v504 = vrot.slane %v503, 2
    %v505 = vadd.f32 %v503, %v504
    %v506 = vrot.slane %v505, 1
    %v507 = vadd.f32 %v505, %v506
    %v508 = vadd.f32 %v498, %v507
    %v509 = vmul.f32 %v107, %v483
    %v510 = vrot.slane %v509, 4
    %v511 = vadd.f32 %v509, %v510
    %v512 = vrot.slane %v511, 2
    %v513 = vadd.f32 %v511, %v512
    %v514 = vrot.slane %v513, 1
    %v515 = vadd.f32 %v513, %v514
    %v516 = vmul.f32 %v123, %v490
    %v517 = vmul.f32 %v124, %v491
    %v518 = vadd.f32 %v516, %v517
    %v519 = vrot.slane %v518, 4
    %v520 = vadd.f32 %v518, %v519
    %v521 = vrot.slane %v520, 2
    %v522 = vadd.f32 %v520, %v521
    %v523 = vrot.slane %v522, 1
    %v524 = vadd.f32 %v522, %v523
    %v525 = vadd.f32 %v515, %v524
    %v526 = vmul.f32 %v109, %v483
    %v527 = vrot.slane %v526, 4
    %v528 = vadd.f32 %v526, %v527
    %v529 = vrot.slane %v528, 2
    %v530 = vadd.f32 %v528, %v529
    %v531 = vrot.slane %v530, 1
    %v532 = vadd.f32 %v530, %v531
    %v533 = vmul.f32 %v126, %v490
    %v534 = vmul.f32 %v127, %v491
    %v535 = vadd.f32 %v533, %v534
    %v536 = vrot.slane %v535, 4
    %v537 = vadd.f32 %v535, %v536
    %v538 = vrot.slane %v537, 2
    %v539 = vadd.f32 %v537, %v538
    %v540 = vrot.slane %v539, 1
    %v541 = vadd.f32 %v539, %v540
    %v542 = vadd.f32 %v532, %v541
    %v543 = vmul.f32 %v111, %v483
    %v544 = vrot.slane %v543, 4
    %v545 = vadd.f32 %v543, %v544
    %v546 = vrot.slane %v545, 2
    %v547 = vadd.f32 %v545, %v546
    %v548 = vrot.slane %v547, 1
    %v549 = vadd.f32 %v547, %v548
    %v550 = vmul.f32 %v129, %v490
    %v551 = vmul.f32 %v130, %v491
    %v552 = vadd.f32 %v550, %v551
    %v553 = vrot.slane %v552, 4
    %v554 = vadd.f32 %v552, %v553
    %v555 = vrot.slane %v554, 2
    %v556 = vadd.f32 %v554, %v555
    %v557 = vrot.slane %v556, 1
    %v558 = vadd.f32 %v556, %v557
    %v559 = vadd.f32 %v549, %v558
    %v560 = vmul.f32 %v113, %v483
    %v561 = vrot.slane %v560, 4
    %v562 = vadd.f32 %v560, %v561
    %v563 = vrot.slane %v562, 2
    %v564 = vadd.f32 %v562, %v563
    %v565 = vrot.slane %v564, 1
    %v566 = vadd.f32 %v564, %v565
    %v567 = vmul.f32 %v132, %v490
    %v568 = vmul.f32 %v133, %v491
    %v569 = vadd.f32 %v567, %v568
    %v570 = vrot.slane %v569, 4
    %v571 = vadd.f32 %v569, %v570
    %v572 = vrot.slane %v571, 2
    %v573 = vadd.f32 %v571, %v572
    %v574 = vrot.slane %v573, 1
    %v575 = vadd.f32 %v573, %v574
    %v576 = vadd.f32 %v566, %v575
    %v577 = vmul.f32 %v115, %v483
    %v578 = vrot.slane %v577, 4
    %v579 = vadd.f32 %v577, %v578
    %v580 = vrot.slane %v579, 2
    %v581 = vadd.f32 %v579, %v580
    %v582 = vrot.slane %v581, 1
    %v583 = vadd.f32 %v581, %v582
    %v584 = vmul.f32 %v135, %v490
    %v585 = vmul.f32 %v136, %v491
    %v586 = vadd.f32 %v584, %v585
    %v587 = vrot.slane %v586, 4
    %v588 = vadd.f32 %v586, %v587
    %v589 = vrot.slane %v588, 2
    %v590 = vadd.f32 %v588, %v589
    %v591 = vrot.slane %v590, 1
    %v592 = vadd.f32 %v590, %v591
    %v593 = vadd.f32 %v583, %v592
    %v594 = vmul.f32 %v117, %v483
    %v595 = vrot.slane %v594, 4
    %v596 = vadd.f32 %v594, %v595
    %v597 = vrot.slane %v596, 2
    %v598 = vadd.f32 %v596, %v597
    %v599 = vrot.slane %v598, 1
    %v600 = vadd.f32 %v598, %v599
    %v601 = vmul.f32 %v138, %v490
    %v602 = vmul.f32 %v139, %v491
    %v603 = vadd.f32 %v601, %v602
    %v604 = vrot.slane %v603, 4
    %v605 = vadd.f32 %v603, %v604
    %v606 = vrot.slane %v605, 2
    %v607 = vadd.f32 %v605, %v606
    %v608 = vrot.slane %v607, 1
    %v609 = vadd.f32 %v607, %v608
    %v610 = vadd.f32 %v600, %v609
    %v611 = vmul.f32 %v119, %v483
    %v612 = vrot.slane %v611, 4
    %v613 = vadd.f32 %v611, %v612
    %v614 = vrot.slane %v613, 2
    %v615 = vadd.f32 %v613, %v614
    %v616 = vrot.slane %v615, 1
    %v617 = vadd.f32 %v615, %v616
    %v618 = vmul.f32 %v141, %v490
    %v619 = vmul.f32 %v142, %v491
    %v620 = vadd.f32 %v618, %v619
    %v621 = vrot.slane %v620, 4
    %v622 = vadd.f32 %v620, %v621
    %v623 = vrot.slane %v622, 2
    %v624 = vadd.f32 %v622, %v623
    %v625 = vrot.slane %v624, 1
    %v626 = vadd.f32 %v624, %v625
    %v627 = vadd.f32 %v617, %v626
    %v628 = vsel %vm297, %v508, %v525
    %v629 = vsel %vm299, %v628, %v542
    %v630 = vsel %vm301, %v629, %v559
    %v631 = vsel %vm303, %v630, %v576
    %v632 = vsel %vm305, %v631, %v593
    %v633 = vsel %vm307, %v632, %v610
    %v634 = vsel %vm309, %v633, %v627
    %v635 = vmax.f32 %v634, 0.0
    %s636 = sld [smem:[#allocation10 + $0x3]]
    %v637 = vstv %s636
    %v638 = vmul.f32 %v100, %v637
    %s639 = sld [smem:[#allocation10 + $0x83]]
    %v640 = vstv %s639
    %v641 = vmul.f32 %v102, %v640
    %v642 = vadd.f32 %v638, %v641
    %s643 = sld [smem:[#allocation10 + $0x103]]
    %v644 = vstv %s643
    %v645 = vadd.f32 %v642, %v644
    %s646 = sld [smem:[#allocation10 + $0x183]]
    %v647 = vstv %s646
    %v648 = vmul.f32 %v103, %v647
    %v649 = vmul.f32 %v104, %v647
    %s650 = sld [smem:[#allocation10 + $0x203]]
    %v651 = vstv %s650
    %v652 = vadd.f32 %v648, %v651
    %v653 = vadd.f32 %v649, %v651
    %v654 = vmul.f32 %v105, %v645
    %v655 = vrot.slane %v654, 4
    %v656 = vadd.f32 %v654, %v655
    %v657 = vrot.slane %v656, 2
    %v658 = vadd.f32 %v656, %v657
    %v659 = vrot.slane %v658, 1
    %v660 = vadd.f32 %v658, %v659
    %v661 = vmul.f32 %v120, %v652
    %v662 = vmul.f32 %v121, %v653
    %v663 = vadd.f32 %v661, %v662
    %v664 = vrot.slane %v663, 4
    %v665 = vadd.f32 %v663, %v664
    %v666 = vrot.slane %v665, 2
    %v667 = vadd.f32 %v665, %v666
    %v668 = vrot.slane %v667, 1
    %v669 = vadd.f32 %v667, %v668
    %v670 = vadd.f32 %v660, %v669
    %v671 = vmul.f32 %v107, %v645
    %v672 = vrot.slane %v671, 4
    %v673 = vadd.f32 %v671, %v672
    %v674 = vrot.slane %v673, 2
    %v675 = vadd.f32 %v673, %v674
    %v676 = vrot.slane %v675, 1
    %v677 = vadd.f32 %v675, %v676
    %v678 = vmul.f32 %v123, %v652
    %v679 = vmul.f32 %v124, %v653
    %v680 = vadd.f32 %v678, %v679
    %v681 = vrot.slane %v680, 4
    %v682 = vadd.f32 %v680, %v681
    %v683 = vrot.slane %v682, 2
    %v684 = vadd.f32 %v682, %v683
    %v685 = vrot.slane %v684, 1
    %v686 = vadd.f32 %v684, %v685
    %v687 = vadd.f32 %v677, %v686
    %v688 = vmul.f32 %v109, %v645
    %v689 = vrot.slane %v688, 4
    %v690 = vadd.f32 %v688, %v689
    %v691 = vrot.slane %v690, 2
    %v692 = vadd.f32 %v690, %v691
    %v693 = vrot.slane %v692, 1
    %v694 = vadd.f32 %v692, %v693
    %v695 = vmul.f32 %v126, %v652
    %v696 = vmul.f32 %v127, %v653
    %v697 = vadd.f32 %v695, %v696
    %v698 = vrot.slane %v697, 4
    %v699 = vadd.f32 %v697, %v698
    %v700 = vrot.slane %v699, 2
    %v701 = vadd.f32 %v699, %v700
    %v702 = vrot.slane %v701, 1
    %v703 = vadd.f32 %v701, %v702
    %v704 = vadd.f32 %v694, %v703
    %v705 = vmul.f32 %v111, %v645
    %v706 = vrot.slane %v705, 4
    %v707 = vadd.f32 %v705, %v706
    %v708 = vrot.slane %v707, 2
    %v709 = vadd.f32 %v707, %v708
    %v710 = vrot.slane %v709, 1
    %v711 = vadd.f32 %v709, %v710
    %v712 = vmul.f32 %v129, %v652
    %v713 = vmul.f32 %v130, %v653
    %v714 = vadd.f32 %v712, %v713
    %v715 = vrot.slane %v714, 4
    %v716 = vadd.f32 %v714, %v715
    %v717 = vrot.slane %v716, 2
    %v718 = vadd.f32 %v716, %v717
    %v719 = vrot.slane %v718, 1
    %v720 = vadd.f32 %v718, %v719
    %v721 = vadd.f32 %v711, %v720
    %v722 = vmul.f32 %v113, %v645
    %v723 = vrot.slane %v722, 4
    %v724 = vadd.f32 %v722, %v723
    %v725 = vrot.slane %v724, 2
    %v726 = vadd.f32 %v724, %v725
    %v727 = vrot.slane %v726, 1
    %v728 = vadd.f32 %v726, %v727
    %v729 = vmul.f32 %v132, %v652
    %v730 = vmul.f32 %v133, %v653
    %v731 = vadd.f32 %v729, %v730
    %v732 = vrot.slane %v731, 4
    %v733 = vadd.f32 %v731, %v732
    %v734 = vrot.slane %v733, 2
    %v735 = vadd.f32 %v733, %v734
    %v736 = vrot.slane %v735, 1
    %v737 = vadd.f32 %v735, %v736
    %v738 = vadd.f32 %v728, %v737
    %v739 = vmul.f32 %v115, %v645
    %v740 = vrot.slane %v739, 4
    %v741 = vadd.f32 %v739, %v740
    %v742 = vrot.slane %v741, 2
    %v743 = vadd.f32 %v741, %v742
    %v744 = vrot.slane %v743, 1
    %v745 = vadd.f32 %v743, %v744
    %v746 = vmul.f32 %v135, %v652
    %v747 = vmul.f32 %v136, %v653
    %v748 = vadd.f32 %v746, %v747
    %v749 = vrot.slane %v748, 4
    %v750 = vadd.f32 %v748, %v749
    %v751 = vrot.slane %v750, 2
    %v752 = vadd.f32 %v750, %v751
    %v753 = vrot.slane %v752, 1
    %v754 = vadd.f32 %v752, %v753
    %v755 = vadd.f32 %v745, %v754
    %v756 = vmul.f32 %v117, %v645
    %v757 = vrot.slane %v756, 4
    %v758 = vadd.f32 %v756, %v757
    %v759 = vrot.slane %v758, 2
    %v760 = vadd.f32 %v758, %v759
    %v761 = vrot.slane %v760, 1
    %v762 = vadd.f32 %v760, %v761
    %v763 = vmul.f32 %v138, %v652
    %v764 = vmul.f32 %v139, %v653
    %v765 = vadd.f32 %v763, %v764
    %v766 = vrot.slane %v765, 4
    %v767 = vadd.f32 %v765, %v766
    %v768 = vrot.slane %v767, 2
    %v769 = vadd.f32 %v767, %v768
    %v770 = vrot.slane %v769, 1
    %v771 = vadd.f32 %v769, %v770
    %v772 = vadd.f32 %v762, %v771
    %v773 = vmul.f32 %v119, %v645
    %v774 = vrot.slane %v773, 4
    %v775 = vadd.f32 %v773, %v774
    %v776 = vrot.slane %v775, 2
    %v777 = vadd.f32 %v775, %v776
    %v778 = vrot.slane %v777, 1
    %v779 = vadd.f32 %v777, %v778
    %v780 = vmul.f32 %v141, %v652
    %v781 = vmul.f32 %v142, %v653
    %v782 = vadd.f32 %v780, %v781
    %v783 = vrot.slane %v782, 4
    %v784 = vadd.f32 %v782, %v783
    %v785 = vrot.slane %v784, 2
    %v786 = vadd.f32 %v784, %v785
    %v787 = vrot.slane %v786, 1
    %v788 = vadd.f32 %v786, %v787
    %v789 = vadd.f32 %v779, %v788
    %v790 = vsel %vm297, %v670, %v687
    %v791 = vsel %vm299, %v790, %v704
    %v792 = vsel %vm301, %v791, %v721
    %v793 = vsel %vm303, %v792, %v738
    %v794 = vsel %vm305, %v793, %v755
    %v795 = vsel %vm307, %v794, %v772
    %v796 = vsel %vm309, %v795, %v789
    %v797 = vmax.f32 %v796, 0.0
    %s798 = sld [smem:[#allocation10 + $0x4]]
    %v799 = vstv %s798
    %v800 = vmul.f32 %v100, %v799
    %s801 = sld [smem:[#allocation10 + $0x84]]
    %v802 = vstv %s801
    %v803 = vmul.f32 %v102, %v802
    %v804 = vadd.f32 %v800, %v803
    %s805 = sld [smem:[#allocation10 + $0x104]]
    %v806 = vstv %s805
    %v807 = vadd.f32 %v804, %v806
    %s808 = sld [smem:[#allocation10 + $0x184]]
    %v809 = vstv %s808
    %v810 = vmul.f32 %v103, %v809
    %v811 = vmul.f32 %v104, %v809
    %s812 = sld [smem:[#allocation10 + $0x204]]
    %v813 = vstv %s812
    %v814 = vadd.f32 %v810, %v813
    %v815 = vadd.f32 %v811, %v813
    %v816 = vmul.f32 %v105, %v807
    %v817 = vrot.slane %v816, 4
    %v818 = vadd.f32 %v816, %v817
    %v819 = vrot.slane %v818, 2
    %v820 = vadd.f32 %v818, %v819
    %v821 = vrot.slane %v820, 1
    %v822 = vadd.f32 %v820, %v821
    %v823 = vmul.f32 %v120, %v814
    %v824 = vmul.f32 %v121, %v815
    %v825 = vadd.f32 %v823, %v824
    %v826 = vrot.slane %v825, 4
    %v827 = vadd.f32 %v825, %v826
    %v828 = vrot.slane %v827, 2
    %v829 = vadd.f32 %v827, %v828
    %v830 = vrot.slane %v829, 1
    %v831 = vadd.f32 %v829, %v830
    %v832 = vadd.f32 %v822, %v831
    %v833 = vmul.f32 %v107, %v807
    %v834 = vrot.slane %v833, 4
    %v835 = vadd.f32 %v833, %v834
    %v836 = vrot.slane %v835, 2
    %v837 = vadd.f32 %v835, %v836
    %v838 = vrot.slane %v837, 1
    %v839 = vadd.f32 %v837, %v838
    %v840 = vmul.f32 %v123, %v814
    %v841 = vmul.f32 %v124, %v815
    %v842 = vadd.f32 %v840, %v841
    %v843 = vrot.slane %v842, 4
    %v844 = vadd.f32 %v842, %v843
    %v845 = vrot.slane %v844, 2
    %v846 = vadd.f32 %v844, %v845
    %v847 = vrot.slane %v846, 1
    %v848 = vadd.f32 %v846, %v847
    %v849 = vadd.f32 %v839, %v848
    %v850 = vmul.f32 %v109, %v807
    %v851 = vrot.slane %v850, 4
    %v852 = vadd.f32 %v850, %v851
    %v853 = vrot.slane %v852, 2
    %v854 = vadd.f32 %v852, %v853
    %v855 = vrot.slane %v854, 1
    %v856 = vadd.f32 %v854, %v855
    %v857 = vmul.f32 %v126, %v814
    %v858 = vmul.f32 %v127, %v815
    %v859 = vadd.f32 %v857, %v858
    %v860 = vrot.slane %v859, 4
    %v861 = vadd.f32 %v859, %v860
    %v862 = vrot.slane %v861, 2
    %v863 = vadd.f32 %v861, %v862
    %v864 = vrot.slane %v863, 1
    %v865 = vadd.f32 %v863, %v864
    %v866 = vadd.f32 %v856, %v865
    %v867 = vmul.f32 %v111, %v807
    %v868 = vrot.slane %v867, 4
    %v869 = vadd.f32 %v867, %v868
    %v870 = vrot.slane %v869, 2
    %v871 = vadd.f32 %v869, %v870
    %v872 = vrot.slane %v871, 1
    %v873 = vadd.f32 %v871, %v872
    %v874 = vmul.f32 %v129, %v814
    %v875 = vmul.f32 %v130, %v815
    %v876 = vadd.f32 %v874, %v875
    %v877 = vrot.slane %v876, 4
    %v878 = vadd.f32 %v876, %v877
    %v879 = vrot.slane %v878, 2
    %v880 = vadd.f32 %v878, %v879
    %v881 = vrot.slane %v880, 1
    %v882 = vadd.f32 %v880, %v881
    %v883 = vadd.f32 %v873, %v882
    %v884 = vmul.f32 %v113, %v807
    %v885 = vrot.slane %v884, 4
    %v886 = vadd.f32 %v884, %v885
    %v887 = vrot.slane %v886, 2
    %v888 = vadd.f32 %v886, %v887
    %v889 = vrot.slane %v888, 1
    %v890 = vadd.f32 %v888, %v889
    %v891 = vmul.f32 %v132, %v814
    %v892 = vmul.f32 %v133, %v815
    %v893 = vadd.f32 %v891, %v892
    %v894 = vrot.slane %v893, 4
    %v895 = vadd.f32 %v893, %v894
    %v896 = vrot.slane %v895, 2
    %v897 = vadd.f32 %v895, %v896
    %v898 = vrot.slane %v897, 1
    %v899 = vadd.f32 %v897, %v898
    %v900 = vadd.f32 %v890, %v899
    %v901 = vmul.f32 %v115, %v807
    %v902 = vrot.slane %v901, 4
    %v903 = vadd.f32 %v901, %v902
    %v904 = vrot.slane %v903, 2
    %v905 = vadd.f32 %v903, %v904
    %v906 = vrot.slane %v905, 1
    %v907 = vadd.f32 %v905, %v906
    %v908 = vmul.f32 %v135, %v814
    %v909 = vmul.f32 %v136, %v815
    %v910 = vadd.f32 %v908, %v909
    %v911 = vrot.slane %v910, 4
    %v912 = vadd.f32 %v910, %v911
    %v913 = vrot.slane %v912, 2
    %v914 = vadd.f32 %v912, %v913
    %v915 = vrot.slane %v914, 1
    %v916 = vadd.f32 %v914, %v915
    %v917 = vadd.f32 %v907, %v916
    %v918 = vmul.f32 %v117, %v807
    %v919 = vrot.slane %v918, 4
    %v920 = vadd.f32 %v918, %v919
    %v921 = vrot.slane %v920, 2
    %v922 = vadd.f32 %v920, %v921
    %v923 = vrot.slane %v922, 1
    %v924 = vadd.f32 %v922, %v923
    %v925 = vmul.f32 %v138, %v814
    %v926 = vmul.f32 %v139, %v815
    %v927 = vadd.f32 %v925, %v926
    %v928 = vrot.slane %v927, 4
    %v929 = vadd.f32 %v927, %v928
    %v930 = vrot.slane %v929, 2
    %v931 = vadd.f32 %v929, %v930
    %v932 = vrot.slane %v931, 1
    %v933 = vadd.f32 %v931, %v932
    %v934 = vadd.f32 %v924, %v933
    %v935 = vmul.f32 %v119, %v807
    %v936 = vrot.slane %v935, 4
    %v937 = vadd.f32 %v935, %v936
    %v938 = vrot.slane %v937, 2
    %v939 = vadd.f32 %v937, %v938
    %v940 = vrot.slane %v939, 1
    %v941 = vadd.f32 %v939, %v940
    %v942 = vmul.f32 %v141, %v814
    %v943 = vmul.f32 %v142, %v815
    %v944 = vadd.f32 %v942, %v943
    %v945 = vrot.slane %v944, 4
    %v946 = vadd.f32 %v944, %v945
    %v947 = vrot.slane %v946, 2
    %v948 = vadd.f32 %v946, %v947
    %v949 = vrot.slane %v948, 1
    %v950 = vadd.f32 %v948, %v949
    %v951 = vadd.f32 %v941, %v950
    %v952 = vsel %vm297, %v832, %v849
    %v953 = vsel %vm299, %v952, %v866
    %v954 = vsel %vm301, %v953, %v883
    %v955 = vsel %vm303, %v954, %v900
    %v956 = vsel %vm305, %v955, %v917
    %v957 = vsel %vm307, %v956, %v934
    %v958 = vsel %vm309, %v957, %v951
    %v959 = vmax.f32 %v958, 0.0
    %s960 = sld [smem:[#allocation10 + $0x5]]
    %v961 = vstv %s960
    %v962 = vmul.f32 %v100, %v961
    %s963 = sld [smem:[#allocation10 + $0x85]]
    %v964 = vstv %s963
    %v965 = vmul.f32 %v102, %v964
    %v966 = vadd.f32 %v962, %v965
    %s967 = sld [smem:[#allocation10 + $0x105]]
    %v968 = vstv %s967
    %v969 = vadd.f32 %v966, %v968
    %s970 = sld [smem:[#allocation10 + $0x185]]
    %v971 = vstv %s970
    %v972 = vmul.f32 %v103, %v971
    %v973 = vmul.f32 %v104, %v971
    %s974 = sld [smem:[#allocation10 + $0x205]]
    %v975 = vstv %s974
    %v976 = vadd.f32 %v972, %v975
    %v977 = vadd.f32 %v973, %v975
    %v978 = vmul.f32 %v105, %v969
    %v979 = vrot.slane %v978, 4
    %v980 = vadd.f32 %v978, %v979
    %v981 = vrot.slane %v980, 2
    %v982 = vadd.f32 %v980, %v981
    %v983 = vrot.slane %v982, 1
    %v984 = vadd.f32 %v982, %v983
    %v985 = vmul.f32 %v120, %v976
    %v986 = vmul.f32 %v121, %v977
    %v987 = vadd.f32 %v985, %v986
    %v988 = vrot.slane %v987, 4
    %v989 = vadd.f32 %v987, %v988
    %v990 = vrot.slane %v989, 2
    %v991 = vadd.f32 %v989, %v990
    %v992 = vrot.slane %v991, 1
    %v993 = vadd.f32 %v991, %v992
    %v994 = vadd.f32 %v984, %v993
    %v995 = vmul.f32 %v107, %v969
    %v996 = vrot.slane %v995, 4
    %v997 = vadd.f32 %v995, %v996
    %v998 = vrot.slane %v997, 2
    %v999 = vadd.f32 %v997, %v998
    %v1000 = vrot.slane %v999, 1
    %v1001 = vadd.f32 %v999, %v1000
    %v1002 = vmul.f32 %v123, %v976
    %v1003 = vmul.f32 %v124, %v977
    %v1004 = vadd.f32 %v1002, %v1003
    %v1005 = vrot.slane %v1004, 4
    %v1006 = vadd.f32 %v1004, %v1005
    %v1007 = vrot.slane %v1006, 2
    %v1008 = vadd.f32 %v1006, %v1007
    %v1009 = vrot.slane %v1008, 1
    %v1010 = vadd.f32 %v1008, %v1009
    %v1011 = vadd.f32 %v1001, %v1010
    %v1012 = vmul.f32 %v109, %v969
    %v1013 = vrot.slane %v1012, 4
    %v1014 = vadd.f32 %v1012, %v1013
    %v1015 = vrot.slane %v1014, 2
    %v1016 = vadd.f32 %v1014, %v1015
    %v1017 = vrot.slane %v1016, 1
    %v1018 = vadd.f32 %v1016, %v1017
    %v1019 = vmul.f32 %v126, %v976
    %v1020 = vmul.f32 %v127, %v977
    %v1021 = vadd.f32 %v1019, %v1020
    %v1022 = vrot.slane %v1021, 4
    %v1023 = vadd.f32 %v1021, %v1022
    %v1024 = vrot.slane %v1023, 2
    %v1025 = vadd.f32 %v1023, %v1024
    %v1026 = vrot.slane %v1025, 1
    %v1027 = vadd.f32 %v1025, %v1026
    %v1028 = vadd.f32 %v1018, %v1027
    %v1029 = vmul.f32 %v111, %v969
    %v1030 = vrot.slane %v1029, 4
    %v1031 = vadd.f32 %v1029, %v1030
    %v1032 = vrot.slane %v1031, 2
    %v1033 = vadd.f32 %v1031, %v1032
    %v1034 = vrot.slane %v1033, 1
    %v1035 = vadd.f32 %v1033, %v1034
    %v1036 = vmul.f32 %v129, %v976
    %v1037 = vmul.f32 %v130, %v977
    %v1038 = vadd.f32 %v1036, %v1037
    %v1039 = vrot.slane %v1038, 4
    %v1040 = vadd.f32 %v1038, %v1039
    %v1041 = vrot.slane %v1040, 2
    %v1042 = vadd.f32 %v1040, %v1041
    %v1043 = vrot.slane %v1042, 1
    %v1044 = vadd.f32 %v1042, %v1043
    %v1045 = vadd.f32 %v1035, %v1044
    %v1046 = vmul.f32 %v113, %v969
    %v1047 = vrot.slane %v1046, 4
    %v1048 = vadd.f32 %v1046, %v1047
    %v1049 = vrot.slane %v1048, 2
    %v1050 = vadd.f32 %v1048, %v1049
    %v1051 = vrot.slane %v1050, 1
    %v1052 = vadd.f32 %v1050, %v1051
    %v1053 = vmul.f32 %v132, %v976
    %v1054 = vmul.f32 %v133, %v977
    %v1055 = vadd.f32 %v1053, %v1054
    %v1056 = vrot.slane %v1055, 4
    %v1057 = vadd.f32 %v1055, %v1056
    %v1058 = vrot.slane %v1057, 2
    %v1059 = vadd.f32 %v1057, %v1058
    %v1060 = vrot.slane %v1059, 1
    %v1061 = vadd.f32 %v1059, %v1060
    %v1062 = vadd.f32 %v1052, %v1061
    %v1063 = vmul.f32 %v115, %v969
    %v1064 = vrot.slane %v1063, 4
    %v1065 = vadd.f32 %v1063, %v1064
    %v1066 = vrot.slane %v1065, 2
    %v1067 = vadd.f32 %v1065, %v1066
    %v1068 = vrot.slane %v1067, 1
    %v1069 = vadd.f32 %v1067, %v1068
    %v1070 = vmul.f32 %v135, %v976
    %v1071 = vmul.f32 %v136, %v977
    %v1072 = vadd.f32 %v1070, %v1071
    %v1073 = vrot.slane %v1072, 4
    %v1074 = vadd.f32 %v1072, %v1073
    %v1075 = vrot.slane %v1074, 2
    %v1076 = vadd.f32 %v1074, %v1075
    %v1077 = vrot.slane %v1076, 1
    %v1078 = vadd.f32 %v1076, %v1077
    %v1079 = vadd.f32 %v1069, %v1078
    %v1080 = vmul.f32 %v117, %v969
    %v1081 = vrot.slane %v1080, 4
    %v1082 = vadd.f32 %v1080, %v1081
    %v1083 = vrot.slane %v1082, 2
    %v1084 = vadd.f32 %v1082, %v1083
    %v1085 = vrot.slane %v1084, 1
    %v1086 = vadd.f32 %v1084, %v1085
    %v1087 = vmul.f32 %v138, %v976
    %v1088 = vmul.f32 %v139, %v977
    %v1089 = vadd.f32 %v1087, %v1088
    %v1090 = vrot.slane %v1089, 4
    %v1091 = vadd.f32 %v1089, %v1090
    %v1092 = vrot.slane %v1091, 2
    %v1093 = vadd.f32 %v1091, %v1092
    %v1094 = vrot.slane %v1093, 1
    %v1095 = vadd.f32 %v1093, %v1094
    %v1096 = vadd.f32 %v1086, %v1095
    %v1097 = vmul.f32 %v119, %v969
    %v1098 = vrot.slane %v1097, 4
    %v1099 = vadd.f32 %v1097, %v1098
    %v1100 = vrot.slane %v1099, 2
    %v1101 = vadd.f32 %v1099, %v1100
    %v1102 = vrot.slane %v1101, 1
    %v1103 = vadd.f32 %v1101, %v1102
    %v1104 = vmul.f32 %v141, %v976
    %v1105 = vmul.f32 %v142, %v977
    %v1106 = vadd.f32 %v1104, %v1105
    %v1107 = vrot.slane %v1106, 4
    %v1108 = vadd.f32 %v1106, %v1107
    %v1109 = vrot.slane %v1108, 2
    %v1110 = vadd.f32 %v1108, %v1109
    %v1111 = vrot.slane %v1110, 1
    %v1112 = vadd.f32 %v1110, %v1111
    %v1113 = vadd.f32 %v1103, %v1112
    %v1114 = vsel %vm297, %v994, %v1011
    %v1115 = vsel %vm299, %v1114, %v1028
    %v1116 = vsel %vm301, %v1115, %v1045
    %v1117 = vsel %vm303, %v1116, %v1062
    %v1118 = vsel %vm305, %v1117, %v1079
    %v1119 = vsel %vm307, %v1118, %v1096
    %v1120 = vsel %vm309, %v1119, %v1113
    %v1121 = vmax.f32 %v1120, 0.0
    %s1122 = sld [smem:[#allocation10 + $0x6]]
    %v1123 = vstv %s1122
    %v1124 = vmul.f32 %v100, %v1123
    %s1125 = sld [smem:[#allocation10 + $0x86]]
    %v1126 = vstv %s1125
    %v1127 = vmul.f32 %v102, %v1126
    %v1128 = vadd.f32 %v1124, %v1127
    %s1129 = sld [smem:[#allocation10 + $0x106]]
    %v1130 = vstv %s1129
    %v1131 = vadd.f32 %v1128, %v1130
    %s1132 = sld [smem:[#allocation10 + $0x186]]
    %v1133 = vstv %s1132
    %v1134 = vmul.f32 %v103, %v1133
    %v1135 = vmul.f32 %v104, %v1133
    %s1136 = sld [smem:[#allocation10 + $0x206]]
    %v1137 = vstv %s1136
    %v1138 = vadd.f32 %v1134, %v1137
    %v1139 = vadd.f32 %v1135, %v1137
    %v1140 = vmul.f32 %v105, %v1131
    %v1141 = vrot.slane %v1140, 4
    %v1142 = vadd.f32 %v1140, %v1141
    %v1143 = vrot.slane %v1142, 2
    %v1144 = vadd.f32 %v1142, %v1143
    %v1145 = vrot.slane %v1144, 1
    %v1146 = vadd.f32 %v1144, %v1145
    %v1147 = vmul.f32 %v120, %v1138
    %v1148 = vmul.f32 %v121, %v1139
    %v1149 = vadd.f32 %v1147, %v1148
    %v1150 = vrot.slane %v1149, 4
    %v1151 = vadd.f32 %v1149, %v1150
    %v1152 = vrot.slane %v1151, 2
    %v1153 = vadd.f32 %v1151, %v1152
    %v1154 = vrot.slane %v1153, 1
    %v1155 = vadd.f32 %v1153, %v1154
    %v1156 = vadd.f32 %v1146, %v1155
    %v1157 = vmul.f32 %v107, %v1131
    %v1158 = vrot.slane %v1157, 4
    %v1159 = vadd.f32 %v1157, %v1158
    %v1160 = vrot.slane %v1159, 2
    %v1161 = vadd.f32 %v1159, %v1160
    %v1162 = vrot.slane %v1161, 1
    %v1163 = vadd.f32 %v1161, %v1162
    %v1164 = vmul.f32 %v123, %v1138
    %v1165 = vmul.f32 %v124, %v1139
    %v1166 = vadd.f32 %v1164, %v1165
    %v1167 = vrot.slane %v1166, 4
    %v1168 = vadd.f32 %v1166, %v1167
    %v1169 = vrot.slane %v1168, 2
    %v1170 = vadd.f32 %v1168, %v1169
    %v1171 = vrot.slane %v1170, 1
    %v1172 = vadd.f32 %v1170, %v1171
    %v1173 = vadd.f32 %v1163, %v1172
    %v1174 = vmul.f32 %v109, %v1131
    %v1175 = vrot.slane %v1174, 4
    %v1176 = vadd.f32 %v1174, %v1175
    %v1177 = vrot.slane %v1176, 2
    %v1178 = vadd.f32 %v1176, %v1177
    %v1179 = vrot.slane %v1178, 1
    %v1180 = vadd.f32 %v1178, %v1179
    %v1181 = vmul.f32 %v126, %v1138
    %v1182 = vmul.f32 %v127, %v1139
    %v1183 = vadd.f32 %v1181, %v1182
    %v1184 = vrot.slane %v1183, 4
    %v1185 = vadd.f32 %v1183, %v1184
    %v1186 = vrot.slane %v1185, 2
    %v1187 = vadd.f32 %v1185, %v1186
    %v1188 = vrot.slane %v1187, 1
    %v1189 = vadd.f32 %v1187, %v1188
    %v1190 = vadd.f32 %v1180, %v1189
    %v1191 = vmul.f32 %v111, %v1131
    %v1192 = vrot.slane %v1191, 4
    %v1193 = vadd.f32 %v1191, %v1192
    %v1194 = vrot.slane %v1193, 2
    %v1195 = vadd.f32 %v1193, %v1194
    %v1196 = vrot.slane %v1195, 1
    %v1197 = vadd.f32 %v1195, %v1196
    %v1198 = vmul.f32 %v129, %v1138
    %v1199 = vmul.f32 %v130, %v1139
    %v1200 = vadd.f32 %v1198, %v1199
    %v1201 = vrot.slane %v1200, 4
    %v1202 = vadd.f32 %v1200, %v1201
    %v1203 = vrot.slane %v1202, 2
    %v1204 = vadd.f32 %v1202, %v1203
    %v1205 = vrot.slane %v1204, 1
    %v1206 = vadd.f32 %v1204, %v1205
    %v1207 = vadd.f32 %v1197, %v1206
    %v1208 = vmul.f32 %v113, %v1131
    %v1209 = vrot.slane %v1208, 4
    %v1210 = vadd.f32 %v1208, %v1209
    %v1211 = vrot.slane %v1210, 2
    %v1212 = vadd.f32 %v1210, %v1211
    %v1213 = vrot.slane %v1212, 1
    %v1214 = vadd.f32 %v1212, %v1213
    %v1215 = vmul.f32 %v132, %v1138
    %v1216 = vmul.f32 %v133, %v1139
    %v1217 = vadd.f32 %v1215, %v1216
    %v1218 = vrot.slane %v1217, 4
    %v1219 = vadd.f32 %v1217, %v1218
    %v1220 = vrot.slane %v1219, 2
    %v1221 = vadd.f32 %v1219, %v1220
    %v1222 = vrot.slane %v1221, 1
    %v1223 = vadd.f32 %v1221, %v1222
    %v1224 = vadd.f32 %v1214, %v1223
    %v1225 = vmul.f32 %v115, %v1131
    %v1226 = vrot.slane %v1225, 4
    %v1227 = vadd.f32 %v1225, %v1226
    %v1228 = vrot.slane %v1227, 2
    %v1229 = vadd.f32 %v1227, %v1228
    %v1230 = vrot.slane %v1229, 1
    %v1231 = vadd.f32 %v1229, %v1230
    %v1232 = vmul.f32 %v135, %v1138
    %v1233 = vmul.f32 %v136, %v1139
    %v1234 = vadd.f32 %v1232, %v1233
    %v1235 = vrot.slane %v1234, 4
    %v1236 = vadd.f32 %v1234, %v1235
    %v1237 = vrot.slane %v1236, 2
    %v1238 = vadd.f32 %v1236, %v1237
    %v1239 = vrot.slane %v1238, 1
    %v1240 = vadd.f32 %v1238, %v1239
    %v1241 = vadd.f32 %v1231, %v1240
    %v1242 = vmul.f32 %v117, %v1131
    %v1243 = vrot.slane %v1242, 4
    %v1244 = vadd.f32 %v1242, %v1243
    %v1245 = vrot.slane %v1244, 2
    %v1246 = vadd.f32 %v1244, %v1245
    %v1247 = vrot.slane %v1246, 1
    %v1248 = vadd.f32 %v1246, %v1247
    %v1249 = vmul.f32 %v138, %v1138
    %v1250 = vmul.f32 %v139, %v1139
    %v1251 = vadd.f32 %v1249, %v1250
    %v1252 = vrot.slane %v1251, 4
    %v1253 = vadd.f32 %v1251, %v1252
    %v1254 = vrot.slane %v1253, 2
    %v1255 = vadd.f32 %v1253, %v1254
    %v1256 = vrot.slane %v1255, 1
    %v1257 = vadd.f32 %v1255, %v1256
    %v1258 = vadd.f32 %v1248, %v1257
    %v1259 = vmul.f32 %v119, %v1131
    %v1260 = vrot.slane %v1259, 4
    %v1261 = vadd.f32 %v1259, %v1260
    %v1262 = vrot.slane %v1261, 2
    %v1263 = vadd.f32 %v1261, %v1262
    %v1264 = vrot.slane %v1263, 1
    %v1265 = vadd.f32 %v1263, %v1264
    %v1266 = vmul.f32 %v141, %v1138
    %v1267 = vmul.f32 %v142, %v1139
    %v1268 = vadd.f32 %v1266, %v1267
    %v1269 = vrot.slane %v1268, 4
    %v1270 = vadd.f32 %v1268, %v1269
    %v1271 = vrot.slane %v1270, 2
    %v1272 = vadd.f32 %v1270, %v1271
    %v1273 = vrot.slane %v1272, 1
    %v1274 = vadd.f32 %v1272, %v1273
    %v1275 = vadd.f32 %v1265, %v1274
    %v1276 = vsel %vm297, %v1156, %v1173
    %v1277 = vsel %vm299, %v1276, %v1190
    %v1278 = vsel %vm301, %v1277, %v1207
    %v1279 = vsel %vm303, %v1278, %v1224
    %v1280 = vsel %vm305, %v1279, %v1241
    %v1281 = vsel %vm307, %v1280, %v1258
    %v1282 = vsel %vm309, %v1281, %v1275
    %v1283 = vmax.f32 %v1282, 0.0
    %s1284 = sld [smem:[#allocation10 + $0x7]]
    %v1285 = vstv %s1284
    %v1286 = vmul.f32 %v100, %v1285
    %s1287 = sld [smem:[#allocation10 + $0x87]]
    %v1288 = vstv %s1287
    %v1289 = vmul.f32 %v102, %v1288
    %v1290 = vadd.f32 %v1286, %v1289
    %s1291 = sld [smem:[#allocation10 + $0x107]]
    %v1292 = vstv %s1291
    %v1293 = vadd.f32 %v1290, %v1292
    %s1294 = sld [smem:[#allocation10 + $0x187]]
    %v1295 = vstv %s1294
    %v1296 = vmul.f32 %v103, %v1295
    %v1297 = vmul.f32 %v104, %v1295
    %s1298 = sld [smem:[#allocation10 + $0x207]]
    %v1299 = vstv %s1298
    %v1300 = vadd.f32 %v1296, %v1299
    %v1301 = vadd.f32 %v1297, %v1299
    %v1302 = vmul.f32 %v105, %v1293
    %v1303 = vrot.slane %v1302, 4
    %v1304 = vadd.f32 %v1302, %v1303
    %v1305 = vrot.slane %v1304, 2
    %v1306 = vadd.f32 %v1304, %v1305
    %v1307 = vrot.slane %v1306, 1
    %v1308 = vadd.f32 %v1306, %v1307
    %v1309 = vmul.f32 %v120, %v1300
    %v1310 = vmul.f32 %v121, %v1301
    %v1311 = vadd.f32 %v1309, %v1310
    %v1312 = vrot.slane %v1311, 4
    %v1313 = vadd.f32 %v1311, %v1312
    %v1314 = vrot.slane %v1313, 2
    %v1315 = vadd.f32 %v1313, %v1314
    %v1316 = vrot.slane %v1315, 1
    %v1317 = vadd.f32 %v1315, %v1316
    %v1318 = vadd.f32 %v1308, %v1317
    %v1319 = vmul.f32 %v107, %v1293
    %v1320 = vrot.slane %v1319, 4
    %v1321 = vadd.f32 %v1319, %v1320
    %v1322 = vrot.slane %v1321, 2
    %v1323 = vadd.f32 %v1321, %v1322
    %v1324 = vrot.slane %v1323, 1
    %v1325 = vadd.f32 %v1323, %v1324
    %v1326 = vmul.f32 %v123, %v1300
    %v1327 = vmul.f32 %v124, %v1301
    %v1328 = vadd.f32 %v1326, %v1327
    %v1329 = vrot.slane %v1328, 4
    %v1330 = vadd.f32 %v1328, %v1329
    %v1331 = vrot.slane %v1330, 2
    %v1332 = vadd.f32 %v1330, %v1331
    %v1333 = vrot.slane %v1332, 1
    %v1334 = vadd.f32 %v1332, %v1333
    %v1335 = vadd.f32 %v1325, %v1334
    %v1336 = vmul.f32 %v109, %v1293
    %v1337 = vrot.slane %v1336, 4
    %v1338 = vadd.f32 %v1336, %v1337
    %v1339 = vrot.slane %v1338, 2
    %v1340 = vadd.f32 %v1338, %v1339
    %v1341 = vrot.slane %v1340, 1
    %v1342 = vadd.f32 %v1340, %v1341
    %v1343 = vmul.f32 %v126, %v1300
    %v1344 = vmul.f32 %v127, %v1301
    %v1345 = vadd.f32 %v1343, %v1344
    %v1346 = vrot.slane %v1345, 4
    %v1347 = vadd.f32 %v1345, %v1346
    %v1348 = vrot.slane %v1347, 2
    %v1349 = vadd.f32 %v1347, %v1348
    %v1350 = vrot.slane %v1349, 1
    %v1351 = vadd.f32 %v1349, %v1350
    %v1352 = vadd.f32 %v1342, %v1351
    %v1353 = vmul.f32 %v111, %v1293
    %v1354 = vrot.slane %v1353, 4
    %v1355 = vadd.f32 %v1353, %v1354
    %v1356 = vrot.slane %v1355, 2
    %v1357 = vadd.f32 %v1355, %v1356
    %v1358 = vrot.slane %v1357, 1
    %v1359 = vadd.f32 %v1357, %v1358
    %v1360 = vmul.f32 %v129, %v1300
    %v1361 = vmul.f32 %v130, %v1301
    %v1362 = vadd.f32 %v1360, %v1361
    %v1363 = vrot.slane %v1362, 4
    %v1364 = vadd.f32 %v1362, %v1363
    %v1365 = vrot.slane %v1364, 2
    %v1366 = vadd.f32 %v1364, %v1365
    %v1367 = vrot.slane %v1366, 1
    %v1368 = vadd.f32 %v1366, %v1367
    %v1369 = vadd.f32 %v1359, %v1368
    %v1370 = vmul.f32 %v113, %v1293
    %v1371 = vrot.slane %v1370, 4
    %v1372 = vadd.f32 %v1370, %v1371
    %v1373 = vrot.slane %v1372, 2
    %v1374 = vadd.f32 %v1372, %v1373
    %v1375 = vrot.slane %v1374, 1
    %v1376 = vadd.f32 %v1374, %v1375
    %v1377 = vmul.f32 %v132, %v1300
    %v1378 = vmul.f32 %v133, %v1301
    %v1379 = vadd.f32 %v1377, %v1378
    %v1380 = vrot.slane %v1379, 4
    %v1381 = vadd.f32 %v1379, %v1380
    %v1382 = vrot.slane %v1381, 2
    %v1383 = vadd.f32 %v1381, %v1382
    %v1384 = vrot.slane %v1383, 1
    %v1385 = vadd.f32 %v1383, %v1384
    %v1386 = vadd.f32 %v1376, %v1385
    %v1387 = vmul.f32 %v115, %v1293
    %v1388 = vrot.slane %v1387, 4
    %v1389 = vadd.f32 %v1387, %v1388
    %v1390 = vrot.slane %v1389, 2
    %v1391 = vadd.f32 %v1389, %v1390
    %v1392 = vrot.slane %v1391, 1
    %v1393 = vadd.f32 %v1391, %v1392
    %v1394 = vmul.f32 %v135, %v1300
    %v1395 = vmul.f32 %v136, %v1301
    %v1396 = vadd.f32 %v1394, %v1395
    %v1397 = vrot.slane %v1396, 4
    %v1398 = vadd.f32 %v1396, %v1397
    %v1399 = vrot.slane %v1398, 2
    %v1400 = vadd.f32 %v1398, %v1399
    %v1401 = vrot.slane %v1400, 1
    %v1402 = vadd.f32 %v1400, %v1401
    %v1403 = vadd.f32 %v1393, %v1402
    %v1404 = vmul.f32 %v117, %v1293
    %v1405 = vrot.slane %v1404, 4
    %v1406 = vadd.f32 %v1404, %v1405
    %v1407 = vrot.slane %v1406, 2
    %v1408 = vadd.f32 %v1406, %v1407
    %v1409 = vrot.slane %v1408, 1
    %v1410 = vadd.f32 %v1408, %v1409
    %v1411 = vmul.f32 %v138, %v1300
    %v1412 = vmul.f32 %v139, %v1301
    %v1413 = vadd.f32 %v1411, %v1412
    %v1414 = vrot.slane %v1413, 4
    %v1415 = vadd.f32 %v1413, %v1414
    %v1416 = vrot.slane %v1415, 2
    %v1417 = vadd.f32 %v1415, %v1416
    %v1418 = vrot.slane %v1417, 1
    %v1419 = vadd.f32 %v1417, %v1418
    %v1420 = vadd.f32 %v1410, %v1419
    %v1421 = vmul.f32 %v119, %v1293
    %v1422 = vrot.slane %v1421, 4
    %v1423 = vadd.f32 %v1421, %v1422
    %v1424 = vrot.slane %v1423, 2
    %v1425 = vadd.f32 %v1423, %v1424
    %v1426 = vrot.slane %v1425, 1
    %v1427 = vadd.f32 %v1425, %v1426
    %v1428 = vmul.f32 %v141, %v1300
    %v1429 = vmul.f32 %v142, %v1301
    %v1430 = vadd.f32 %v1428, %v1429
    %v1431 = vrot.slane %v1430, 4
    %v1432 = vadd.f32 %v1430, %v1431
    %v1433 = vrot.slane %v1432, 2
    %v1434 = vadd.f32 %v1432, %v1433
    %v1435 = vrot.slane %v1434, 1
    %v1436 = vadd.f32 %v1434, %v1435
    %v1437 = vadd.f32 %v1427, %v1436
    %v1438 = vsel %vm297, %v1318, %v1335
    %v1439 = vsel %vm299, %v1438, %v1352
    %v1440 = vsel %vm301, %v1439, %v1369
    %v1441 = vsel %vm303, %v1440, %v1386
    %v1442 = vsel %vm305, %v1441, %v1403
    %v1443 = vsel %vm307, %v1442, %v1420
    %v1444 = vsel %vm309, %v1443, %v1437
    %v1445 = vmax.f32 %v1444, 0.0
    %s1446 = sld [smem:[#allocation10 + $0x8]]
    %v1447 = vstv %s1446
    %v1448 = vmul.f32 %v100, %v1447
    %s1449 = sld [smem:[#allocation10 + $0x88]]
    %v1450 = vstv %s1449
    %v1451 = vmul.f32 %v102, %v1450
    %v1452 = vadd.f32 %v1448, %v1451
    %s1453 = sld [smem:[#allocation10 + $0x108]]
    %v1454 = vstv %s1453
    %v1455 = vadd.f32 %v1452, %v1454
    %s1456 = sld [smem:[#allocation10 + $0x188]]
    %v1457 = vstv %s1456
    %v1458 = vmul.f32 %v103, %v1457
    %v1459 = vmul.f32 %v104, %v1457
    %s1460 = sld [smem:[#allocation10 + $0x208]]
    %v1461 = vstv %s1460
    %v1462 = vadd.f32 %v1458, %v1461
    %v1463 = vadd.f32 %v1459, %v1461
    %v1464 = vmul.f32 %v105, %v1455
    %v1465 = vrot.slane %v1464, 4
    %v1466 = vadd.f32 %v1464, %v1465
    %v1467 = vrot.slane %v1466, 2
    %v1468 = vadd.f32 %v1466, %v1467
    %v1469 = vrot.slane %v1468, 1
    %v1470 = vadd.f32 %v1468, %v1469
    %v1471 = vmul.f32 %v120, %v1462
    %v1472 = vmul.f32 %v121, %v1463
    %v1473 = vadd.f32 %v1471, %v1472
    %v1474 = vrot.slane %v1473, 4
    %v1475 = vadd.f32 %v1473, %v1474
    %v1476 = vrot.slane %v1475, 2
    %v1477 = vadd.f32 %v1475, %v1476
    %v1478 = vrot.slane %v1477, 1
    %v1479 = vadd.f32 %v1477, %v1478
    %v1480 = vadd.f32 %v1470, %v1479
    %v1481 = vmul.f32 %v107, %v1455
    %v1482 = vrot.slane %v1481, 4
    %v1483 = vadd.f32 %v1481, %v1482
    %v1484 = vrot.slane %v1483, 2
    %v1485 = vadd.f32 %v1483, %v1484
    %v1486 = vrot.slane %v1485, 1
    %v1487 = vadd.f32 %v1485, %v1486
    %v1488 = vmul.f32 %v123, %v1462
    %v1489 = vmul.f32 %v124, %v1463
    %v1490 = vadd.f32 %v1488, %v1489
    %v1491 = vrot.slane %v1490, 4
    %v1492 = vadd.f32 %v1490, %v1491
    %v1493 = vrot.slane %v1492, 2
    %v1494 = vadd.f32 %v1492, %v1493
    %v1495 = vrot.slane %v1494, 1
    %v1496 = vadd.f32 %v1494, %v1495
    %v1497 = vadd.f32 %v1487, %v1496
    %v1498 = vmul.f32 %v109, %v1455
    %v1499 = vrot.slane %v1498, 4
    %v1500 = vadd.f32 %v1498, %v1499
    %v1501 = vrot.slane %v1500, 2
    %v1502 = vadd.f32 %v1500, %v1501
    %v1503 = vrot.slane %v1502, 1
    %v1504 = vadd.f32 %v1502, %v1503
    %v1505 = vmul.f32 %v126, %v1462
    %v1506 = vmul.f32 %v127, %v1463
    %v1507 = vadd.f32 %v1505, %v1506
    %v1508 = vrot.slane %v1507, 4
    %v1509 = vadd.f32 %v1507, %v1508
    %v1510 = vrot.slane %v1509, 2
    %v1511 = vadd.f32 %v1509, %v1510
    %v1512 = vrot.slane %v1511, 1
    %v1513 = vadd.f32 %v1511, %v1512
    %v1514 = vadd.f32 %v1504, %v1513
    %v1515 = vmul.f32 %v111, %v1455
    %v1516 = vrot.slane %v1515, 4
    %v1517 = vadd.f32 %v1515, %v1516
    %v1518 = vrot.slane %v1517, 2
    %v1519 = vadd.f32 %v1517, %v1518
    %v1520 = vrot.slane %v1519, 1
    %v1521 = vadd.f32 %v1519, %v1520
    %v1522 = vmul.f32 %v129, %v1462
    %v1523 = vmul.f32 %v130, %v1463
    %v1524 = vadd.f32 %v1522, %v1523
    %v1525 = vrot.slane %v1524, 4
    %v1526 = vadd.f32 %v1524, %v1525
    %v1527 = vrot.slane %v1526, 2
    %v1528 = vadd.f32 %v1526, %v1527
    %v1529 = vrot.slane %v1528, 1
    %v1530 = vadd.f32 %v1528, %v1529
    %v1531 = vadd.f32 %v1521, %v1530
    %v1532 = vmul.f32 %v113, %v1455
    %v1533 = vrot.slane %v1532, 4
    %v1534 = vadd.f32 %v1532, %v1533
    %v1535 = vrot.slane %v1534, 2
    %v1536 = vadd.f32 %v1534, %v1535
    %v1537 = vrot.slane %v1536, 1
    %v1538 = vadd.f32 %v1536, %v1537
    %v1539 = vmul.f32 %v132, %v1462
    %v1540 = vmul.f32 %v133, %v1463
    %v1541 = vadd.f32 %v1539, %v1540
    %v1542 = vrot.slane %v1541, 4
    %v1543 = vadd.f32 %v1541, %v1542
    %v1544 = vrot.slane %v1543, 2
    %v1545 = vadd.f32 %v1543, %v1544
    %v1546 = vrot.slane %v1545, 1
    %v1547 = vadd.f32 %v1545, %v1546
    %v1548 = vadd.f32 %v1538, %v1547
    %v1549 = vmul.f32 %v115, %v1455
    %v1550 = vrot.slane %v1549, 4
    %v1551 = vadd.f32 %v1549, %v1550
    %v1552 = vrot.slane %v1551, 2
    %v1553 = vadd.f32 %v1551, %v1552
    %v1554 = vrot.slane %v1553, 1
    %v1555 = vadd.f32 %v1553, %v1554
    %v1556 = vmul.f32 %v135, %v1462
    %v1557 = vmul.f32 %v136, %v1463
    %v1558 = vadd.f32 %v1556, %v1557
    %v1559 = vrot.slane %v1558, 4
    %v1560 = vadd.f32 %v1558, %v1559
    %v1561 = vrot.slane %v1560, 2
    %v1562 = vadd.f32 %v1560, %v1561
    %v1563 = vrot.slane %v1562, 1
    %v1564 = vadd.f32 %v1562, %v1563
    %v1565 = vadd.f32 %v1555, %v1564
    %v1566 = vmul.f32 %v117, %v1455
    %v1567 = vrot.slane %v1566, 4
    %v1568 = vadd.f32 %v1566, %v1567
    %v1569 = vrot.slane %v1568, 2
    %v1570 = vadd.f32 %v1568, %v1569
    %v1571 = vrot.slane %v1570, 1
    %v1572 = vadd.f32 %v1570, %v1571
    %v1573 = vmul.f32 %v138, %v1462
    %v1574 = vmul.f32 %v139, %v1463
    %v1575 = vadd.f32 %v1573, %v1574
    %v1576 = vrot.slane %v1575, 4
    %v1577 = vadd.f32 %v1575, %v1576
    %v1578 = vrot.slane %v1577, 2
    %v1579 = vadd.f32 %v1577, %v1578
    %v1580 = vrot.slane %v1579, 1
    %v1581 = vadd.f32 %v1579, %v1580
    %v1582 = vadd.f32 %v1572, %v1581
    %v1583 = vmul.f32 %v119, %v1455
    %v1584 = vrot.slane %v1583, 4
    %v1585 = vadd.f32 %v1583, %v1584
    %v1586 = vrot.slane %v1585, 2
    %v1587 = vadd.f32 %v1585, %v1586
    %v1588 = vrot.slane %v1587, 1
    %v1589 = vadd.f32 %v1587, %v1588
    %v1590 = vmul.f32 %v141, %v1462
    %v1591 = vmul.f32 %v142, %v1463
    %v1592 = vadd.f32 %v1590, %v1591
    %v1593 = vrot.slane %v1592, 4
    %v1594 = vadd.f32 %v1592, %v1593
    %v1595 = vrot.slane %v1594, 2
    %v1596 = vadd.f32 %v1594, %v1595
    %v1597 = vrot.slane %v1596, 1
    %v1598 = vadd.f32 %v1596, %v1597
    %v1599 = vadd.f32 %v1589, %v1598
    %v1600 = vsel %vm297, %v1480, %v1497
    %v1601 = vsel %vm299, %v1600, %v1514
    %v1602 = vsel %vm301, %v1601, %v1531
    %v1603 = vsel %vm303, %v1602, %v1548
    %v1604 = vsel %vm305, %v1603, %v1565
    %v1605 = vsel %vm307, %v1604, %v1582
    %v1606 = vsel %vm309, %v1605, %v1599
    %v1607 = vmax.f32 %v1606, 0.0
    %s1608 = sld [smem:[#allocation10 + $0x9]]
    %v1609 = vstv %s1608
    %v1610 = vmul.f32 %v100, %v1609
    %s1611 = sld [smem:[#allocation10 + $0x89]]
    %v1612 = vstv %s1611
    %v1613 = vmul.f32 %v102, %v1612
    %v1614 = vadd.f32 %v1610, %v1613
    %s1615 = sld [smem:[#allocation10 + $0x109]]
    %v1616 = vstv %s1615
    %v1617 = vadd.f32 %v1614, %v1616
    %s1618 = sld [smem:[#allocation10 + $0x189]]
    %v1619 = vstv %s1618
    %v1620 = vmul.f32 %v103, %v1619
    %v1621 = vmul.f32 %v104, %v1619
    %s1622 = sld [smem:[#allocation10 + $0x209]]
    %v1623 = vstv %s1622
    %v1624 = vadd.f32 %v1620, %v1623
    %v1625 = vadd.f32 %v1621, %v1623
    %v1626 = vmul.f32 %v105, %v1617
    %v1627 = vrot.slane %v1626, 4
    %v1628 = vadd.f32 %v1626, %v1627
    %v1629 = vrot.slane %v1628, 2
    %v1630 = vadd.f32 %v1628, %v1629
    %v1631 = vrot.slane %v1630, 1
    %v1632 = vadd.f32 %v1630, %v1631
    %v1633 = vmul.f32 %v120, %v1624
    %v1634 = vmul.f32 %v121, %v1625
    %v1635 = vadd.f32 %v1633, %v1634
    %v1636 = vrot.slane %v1635, 4
    %v1637 = vadd.f32 %v1635, %v1636
    %v1638 = vrot.slane %v1637, 2
    %v1639 = vadd.f32 %v1637, %v1638
    %v1640 = vrot.slane %v1639, 1
    %v1641 = vadd.f32 %v1639, %v1640
    %v1642 = vadd.f32 %v1632, %v1641
    %v1643 = vmul.f32 %v107, %v1617
    %v1644 = vrot.slane %v1643, 4
    %v1645 = vadd.f32 %v1643, %v1644
    %v1646 = vrot.slane %v1645, 2
    %v1647 = vadd.f32 %v1645, %v1646
    %v1648 = vrot.slane %v1647, 1
    %v1649 = vadd.f32 %v1647, %v1648
    %v1650 = vmul.f32 %v123, %v1624
    %v1651 = vmul.f32 %v124, %v1625
    %v1652 = vadd.f32 %v1650, %v1651
    %v1653 = vrot.slane %v1652, 4
    %v1654 = vadd.f32 %v1652, %v1653
    %v1655 = vrot.slane %v1654, 2
    %v1656 = vadd.f32 %v1654, %v1655
    %v1657 = vrot.slane %v1656, 1
    %v1658 = vadd.f32 %v1656, %v1657
    %v1659 = vadd.f32 %v1649, %v1658
    %v1660 = vmul.f32 %v109, %v1617
    %v1661 = vrot.slane %v1660, 4
    %v1662 = vadd.f32 %v1660, %v1661
    %v1663 = vrot.slane %v1662, 2
    %v1664 = vadd.f32 %v1662, %v1663
    %v1665 = vrot.slane %v1664, 1
    %v1666 = vadd.f32 %v1664, %v1665
    %v1667 = vmul.f32 %v126, %v1624
    %v1668 = vmul.f32 %v127, %v1625
    %v1669 = vadd.f32 %v1667, %v1668
    %v1670 = vrot.slane %v1669, 4
    %v1671 = vadd.f32 %v1669, %v1670
    %v1672 = vrot.slane %v1671, 2
    %v1673 = vadd.f32 %v1671, %v1672
    %v1674 = vrot.slane %v1673, 1
    %v1675 = vadd.f32 %v1673, %v1674
    %v1676 = vadd.f32 %v1666, %v1675
    %v1677 = vmul.f32 %v111, %v1617
    %v1678 = vrot.slane %v1677, 4
    %v1679 = vadd.f32 %v1677, %v1678
    %v1680 = vrot.slane %v1679, 2
    %v1681 = vadd.f32 %v1679, %v1680
    %v1682 = vrot.slane %v1681, 1
    %v1683 = vadd.f32 %v1681, %v1682
    %v1684 = vmul.f32 %v129, %v1624
    %v1685 = vmul.f32 %v130, %v1625
    %v1686 = vadd.f32 %v1684, %v1685
    %v1687 = vrot.slane %v1686, 4
    %v1688 = vadd.f32 %v1686, %v1687
    %v1689 = vrot.slane %v1688, 2
    %v1690 = vadd.f32 %v1688, %v1689
    %v1691 = vrot.slane %v1690, 1
    %v1692 = vadd.f32 %v1690, %v1691
    %v1693 = vadd.f32 %v1683, %v1692
    %v1694 = vmul.f32 %v113, %v1617
    %v1695 = vrot.slane %v1694, 4
    %v1696 = vadd.f32 %v1694, %v1695
    %v1697 = vrot.slane %v1696, 2
    %v1698 = vadd.f32 %v1696, %v1697
    %v1699 = vrot.slane %v1698, 1
    %v1700 = vadd.f32 %v1698, %v1699
    %v1701 = vmul.f32 %v132, %v1624
    %v1702 = vmul.f32 %v133, %v1625
    %v1703 = vadd.f32 %v1701, %v1702
    %v1704 = vrot.slane %v1703, 4
    %v1705 = vadd.f32 %v1703, %v1704
    %v1706 = vrot.slane %v1705, 2
    %v1707 = vadd.f32 %v1705, %v1706
    %v1708 = vrot.slane %v1707, 1
    %v1709 = vadd.f32 %v1707, %v1708
    %v1710 = vadd.f32 %v1700, %v1709
    %v1711 = vmul.f32 %v115, %v1617
    %v1712 = vrot.slane %v1711, 4
    %v1713 = vadd.f32 %v1711, %v1712
    %v1714 = vrot.slane %v1713, 2
    %v1715 = vadd.f32 %v1713, %v1714
    %v1716 = vrot.slane %v1715, 1
    %v1717 = vadd.f32 %v1715, %v1716
    %v1718 = vmul.f32 %v135, %v1624
    %v1719 = vmul.f32 %v136, %v1625
    %v1720 = vadd.f32 %v1718, %v1719
    %v1721 = vrot.slane %v1720, 4
    %v1722 = vadd.f32 %v1720, %v1721
    %v1723 = vrot.slane %v1722, 2
    %v1724 = vadd.f32 %v1722, %v1723
    %v1725 = vrot.slane %v1724, 1
    %v1726 = vadd.f32 %v1724, %v1725
    %v1727 = vadd.f32 %v1717, %v1726
    %v1728 = vmul.f32 %v117, %v1617
    %v1729 = vrot.slane %v1728, 4
    %v1730 = vadd.f32 %v1728, %v1729
    %v1731 = vrot.slane %v1730, 2
    %v1732 = vadd.f32 %v1730, %v1731
    %v1733 = vrot.slane %v1732, 1
    %v1734 = vadd.f32 %v1732, %v1733
    %v1735 = vmul.f32 %v138, %v1624
    %v1736 = vmul.f32 %v139, %v1625
    %v1737 = vadd.f32 %v1735, %v1736
    %v1738 = vrot.slane %v1737, 4
    %v1739 = vadd.f32 %v1737, %v1738
    %v1740 = vrot.slane %v1739, 2
    %v1741 = vadd.f32 %v1739, %v1740
    %v1742 = vrot.slane %v1741, 1
    %v1743 = vadd.f32 %v1741, %v1742
    %v1744 = vadd.f32 %v1734, %v1743
    %v1745 = vmul.f32 %v119, %v1617
    %v1746 = vrot.slane %v1745, 4
    %v1747 = vadd.f32 %v1745, %v1746
    %v1748 = vrot.slane %v1747, 2
    %v1749 = vadd.f32 %v1747, %v1748
    %v1750 = vrot.slane %v1749, 1
    %v1751 = vadd.f32 %v1749, %v1750
    %v1752 = vmul.f32 %v141, %v1624
    %v1753 = vmul.f32 %v142, %v1625
    %v1754 = vadd.f32 %v1752, %v1753
    %v1755 = vrot.slane %v1754, 4
    %v1756 = vadd.f32 %v1754, %v1755
    %v1757 = vrot.slane %v1756, 2
    %v1758 = vadd.f32 %v1756, %v1757
    %v1759 = vrot.slane %v1758, 1
    %v1760 = vadd.f32 %v1758, %v1759
    %v1761 = vadd.f32 %v1751, %v1760
    %v1762 = vsel %vm297, %v1642, %v1659
    %v1763 = vsel %vm299, %v1762, %v1676
    %v1764 = vsel %vm301, %v1763, %v1693
    %v1765 = vsel %vm303, %v1764, %v1710
    %v1766 = vsel %vm305, %v1765, %v1727
    %v1767 = vsel %vm307, %v1766, %v1744
    %v1768 = vsel %vm309, %v1767, %v1761
    %v1769 = vmax.f32 %v1768, 0.0
    %s1770 = sld [smem:[#allocation10 + $0x280]]
    %v1771 = vstv %s1770
    %v1772 = vmul.f32 %v100, %v1771
    %s1773 = sld [smem:[#allocation10 + $0x300]]
    %v1774 = vstv %s1773
    %v1775 = vmul.f32 %v102, %v1774
    %v1776 = vadd.f32 %v1772, %v1775
    %s1777 = sld [smem:[#allocation10 + $0x380]]
    %v1778 = vstv %s1777
    %v1779 = vadd.f32 %v1776, %v1778
    %s1780 = sld [smem:[#allocation10 + $0x400]]
    %v1781 = vstv %s1780
    %v1782 = vmul.f32 %v103, %v1781
    %v1783 = vmul.f32 %v104, %v1781
    %s1784 = sld [smem:[#allocation10 + $0x480]]
    %v1785 = vstv %s1784
    %v1786 = vadd.f32 %v1782, %v1785
    %v1787 = vadd.f32 %v1783, %v1785
    %v1788 = vperm.slane %v1779, 0
    %v1789 = vmul.f32 %v120, %v1788
    %v1790 = vmul.f32 %v121, %v1788
    %v1791 = vadd.f32 %v1786, %v1789
    %v1792 = vadd.f32 %v1787, %v1790
    %v1793 = vperm.slane %v1779, 1
    %v1794 = vmul.f32 %v123, %v1793
    %v1795 = vmul.f32 %v124, %v1793
    %v1796 = vadd.f32 %v1791, %v1794
    %v1797 = vadd.f32 %v1792, %v1795
    %v1798 = vperm.slane %v1779, 2
    %v1799 = vmul.f32 %v126, %v1798
    %v1800 = vmul.f32 %v127, %v1798
    %v1801 = vadd.f32 %v1796, %v1799
    %v1802 = vadd.f32 %v1797, %v1800
    %v1803 = vperm.slane %v1779, 3
    %v1804 = vmul.f32 %v129, %v1803
    %v1805 = vmul.f32 %v130, %v1803
    %v1806 = vadd.f32 %v1801, %v1804
    %v1807 = vadd.f32 %v1802, %v1805
    %v1808 = vperm.slane %v1779, 4
    %v1809 = vmul.f32 %v132, %v1808
    %v1810 = vmul.f32 %v133, %v1808
    %v1811 = vadd.f32 %v1806, %v1809
    %v1812 = vadd.f32 %v1807, %v1810
    %v1813 = vperm.slane %v1779, 5
    %v1814 = vmul.f32 %v135, %v1813
    %v1815 = vmul.f32 %v136, %v1813
    %v1816 = vadd.f32 %v1811, %v1814
    %v1817 = vadd.f32 %v1812, %v1815
    %v1818 = vperm.slane %v1779, 6
    %v1819 = vmul.f32 %v138, %v1818
    %v1820 = vmul.f32 %v139, %v1818
    %v1821 = vadd.f32 %v1816, %v1819
    %v1822 = vadd.f32 %v1817, %v1820
    %v1823 = vperm.slane %v1779, 7
    %v1824 = vmul.f32 %v141, %v1823
    %v1825 = vmul.f32 %v142, %v1823
    %v1826 = vadd.f32 %v1821, %v1824
    %v1827 = vadd.f32 %v1822, %v1825
    %v1828 = vmax.f32 %v1826, 0.0
    %v1829 = vmax.f32 %v1827, 0.0
    %s1830 = sld [smem:[#allocation10 + $0x281]]
    %v1831 = vstv %s1830
    %v1832 = vmul.f32 %v100, %v1831
    %s1833 = sld [smem:[#allocation10 + $0x301]]
    %v1834 = vstv %s1833
    %v1835 = vmul.f32 %v102, %v1834
    %v1836 = vadd.f32 %v1832, %v1835
    %s1837 = sld [smem:[#allocation10 + $0x381]]
    %v1838 = vstv %s1837
    %v1839 = vadd.f32 %v1836, %v1838
    %s1840 = sld [smem:[#allocation10 + $0x401]]
    %v1841 = vstv %s1840
    %v1842 = vmul.f32 %v103, %v1841
    %v1843 = vmul.f32 %v104, %v1841
    %s1844 = sld [smem:[#allocation10 + $0x481]]
    %v1845 = vstv %s1844
    %v1846 = vadd.f32 %v1842, %v1845
    %v1847 = vadd.f32 %v1843, %v1845
    %v1848 = vperm.slane %v1839, 0
    %v1849 = vmul.f32 %v120, %v1848
    %v1850 = vmul.f32 %v121, %v1848
    %v1851 = vadd.f32 %v1846, %v1849
    %v1852 = vadd.f32 %v1847, %v1850
    %v1853 = vperm.slane %v1839, 1
    %v1854 = vmul.f32 %v123, %v1853
    %v1855 = vmul.f32 %v124, %v1853
    %v1856 = vadd.f32 %v1851, %v1854
    %v1857 = vadd.f32 %v1852, %v1855
    %v1858 = vperm.slane %v1839, 2
    %v1859 = vmul.f32 %v126, %v1858
    %v1860 = vmul.f32 %v127, %v1858
    %v1861 = vadd.f32 %v1856, %v1859
    %v1862 = vadd.f32 %v1857, %v1860
    %v1863 = vperm.slane %v1839, 3
    %v1864 = vmul.f32 %v129, %v1863
    %v1865 = vmul.f32 %v130, %v1863
    %v1866 = vadd.f32 %v1861, %v1864
    %v1867 = vadd.f32 %v1862, %v1865
    %v1868 = vperm.slane %v1839, 4
    %v1869 = vmul.f32 %v132, %v1868
    %v1870 = vmul.f32 %v133, %v1868
    %v1871 = vadd.f32 %v1866, %v1869
    %v1872 = vadd.f32 %v1867, %v1870
    %v1873 = vperm.slane %v1839, 5
    %v1874 = vmul.f32 %v135, %v1873
    %v1875 = vmul.f32 %v136, %v1873
    %v1876 = vadd.f32 %v1871, %v1874
    %v1877 = vadd.f32 %v1872, %v1875
    %v1878 = vperm.slane %v1839, 6
    %v1879 = vmul.f32 %v138, %v1878
    %v1880 = vmul.f32 %v139, %v1878
    %v1881 = vadd.f32 %v1876, %v1879
    %v1882 = vadd.f32 %v1877, %v1880
    %v1883 = vperm.slane %v1839, 7
    %v1884 = vmul.f32 %v141, %v1883
    %v1885 = vmul.f32 %v142, %v1883
    %v1886 = vadd.f32 %v1881, %v1884
    %v1887 = vadd.f32 %v1882, %v1885
    %v1888 = vmax.f32 %v1886, 0.0
    %v1889 = vmax.f32 %v1887, 0.0
    %s1890 = sld [smem:[#allocation10 + $0x282]]
    %v1891 = vstv %s1890
    %v1892 = vmul.f32 %v100, %v1891
    %s1893 = sld [smem:[#allocation10 + $0x302]]
    %v1894 = vstv %s1893
    %v1895 = vmul.f32 %v102, %v1894
    %v1896 = vadd.f32 %v1892, %v1895
    %s1897 = sld [smem:[#allocation10 + $0x382]]
    %v1898 = vstv %s1897
    %v1899 = vadd.f32 %v1896, %v1898
    %s1900 = sld [smem:[#allocation10 + $0x402]]
    %v1901 = vstv %s1900
    %v1902 = vmul.f32 %v103, %v1901
    %v1903 = vmul.f32 %v104, %v1901
    %s1904 = sld [smem:[#allocation10 + $0x482]]
    %v1905 = vstv %s1904
    %v1906 = vadd.f32 %v1902, %v1905
    %v1907 = vadd.f32 %v1903, %v1905
    %v1908 = vperm.slane %v1899, 0
    %v1909 = vmul.f32 %v120, %v1908
    %v1910 = vmul.f32 %v121, %v1908
    %v1911 = vadd.f32 %v1906, %v1909
    %v1912 = vadd.f32 %v1907, %v1910
    %v1913 = vperm.slane %v1899, 1
    %v1914 = vmul.f32 %v123, %v1913
    %v1915 = vmul.f32 %v124, %v1913
    %v1916 = vadd.f32 %v1911, %v1914
    %v1917 = vadd.f32 %v1912, %v1915
    %v1918 = vperm.slane %v1899, 2
    %v1919 = vmul.f32 %v126, %v1918
    %v1920 = vmul.f32 %v127, %v1918
    %v1921 = vadd.f32 %v1916, %v1919
    %v1922 = vadd.f32 %v1917, %v1920
    %v1923 = vperm.slane %v1899, 3
    %v1924 = vmul.f32 %v129, %v1923
    %v1925 = vmul.f32 %v130, %v1923
    %v1926 = vadd.f32 %v1921, %v1924
    %v1927 = vadd.f32 %v1922, %v1925
    %v1928 = vperm.slane %v1899, 4
    %v1929 = vmul.f32 %v132, %v1928
    %v1930 = vmul.f32 %v133, %v1928
    %v1931 = vadd.f32 %v1926, %v1929
    %v1932 = vadd.f32 %v1927, %v1930
    %v1933 = vperm.slane %v1899, 5
    %v1934 = vmul.f32 %v135, %v1933
    %v1935 = vmul.f32 %v136, %v1933
    %v1936 = vadd.f32 %v1931, %v1934
    %v1937 = vadd.f32 %v1932, %v1935
    %v1938 = vperm.slane %v1899, 6
    %v1939 = vmul.f32 %v138, %v1938
    %v1940 = vmul.f32 %v139, %v1938
    %v1941 = vadd.f32 %v1936, %v1939
    %v1942 = vadd.f32 %v1937, %v1940
    %v1943 = vperm.slane %v1899, 7
    %v1944 = vmul.f32 %v141, %v1943
    %v1945 = vmul.f32 %v142, %v1943
    %v1946 = vadd.f32 %v1941, %v1944
    %v1947 = vadd.f32 %v1942, %v1945
    %v1948 = vmax.f32 %v1946, 0.0
    %v1949 = vmax.f32 %v1947, 0.0
    %s1950 = sld [smem:[#allocation10 + $0x283]]
    %v1951 = vstv %s1950
    %v1952 = vmul.f32 %v100, %v1951
    %s1953 = sld [smem:[#allocation10 + $0x303]]
    %v1954 = vstv %s1953
    %v1955 = vmul.f32 %v102, %v1954
    %v1956 = vadd.f32 %v1952, %v1955
    %s1957 = sld [smem:[#allocation10 + $0x383]]
    %v1958 = vstv %s1957
    %v1959 = vadd.f32 %v1956, %v1958
    %s1960 = sld [smem:[#allocation10 + $0x403]]
    %v1961 = vstv %s1960
    %v1962 = vmul.f32 %v103, %v1961
    %v1963 = vmul.f32 %v104, %v1961
    %s1964 = sld [smem:[#allocation10 + $0x483]]
    %v1965 = vstv %s1964
    %v1966 = vadd.f32 %v1962, %v1965
    %v1967 = vadd.f32 %v1963, %v1965
    %v1968 = vperm.slane %v1959, 0
    %v1969 = vmul.f32 %v120, %v1968
    %v1970 = vmul.f32 %v121, %v1968
    %v1971 = vadd.f32 %v1966, %v1969
    %v1972 = vadd.f32 %v1967, %v1970
    %v1973 = vperm.slane %v1959, 1
    %v1974 = vmul.f32 %v123, %v1973
    %v1975 = vmul.f32 %v124, %v1973
    %v1976 = vadd.f32 %v1971, %v1974
    %v1977 = vadd.f32 %v1972, %v1975
    %v1978 = vperm.slane %v1959, 2
    %v1979 = vmul.f32 %v126, %v1978
    %v1980 = vmul.f32 %v127, %v1978
    %v1981 = vadd.f32 %v1976, %v1979
    %v1982 = vadd.f32 %v1977, %v1980
    %v1983 = vperm.slane %v1959, 3
    %v1984 = vmul.f32 %v129, %v1983
    %v1985 = vmul.f32 %v130, %v1983
    %v1986 = vadd.f32 %v1981, %v1984
    %v1987 = vadd.f32 %v1982, %v1985
    %v1988 = vperm.slane %v1959, 4
    %v1989 = vmul.f32 %v132, %v1988
    %v1990 = vmul.f32 %v133, %v1988
    %v1991 = vadd.f32 %v1986, %v1989
    %v1992 = vadd.f32 %v1987, %v1990
    %v1993 = vperm.slane %v1959, 5
    %v1994 = vmul.f32 %v135, %v1993
    %v1995 = vmul.f32 %v136, %v1993
    %v1996 = vadd.f32 %v1991, %v1994
    %v1997 = vadd.f32 %v1992, %v1995
    %v1998 = vperm.slane %v1959, 6
    %v1999 = vmul.f32 %v138, %v1998
    %v2000 = vmul.f32 %v139, %v1998
    %v2001 = vadd.f32 %v1996, %v1999
    %v2002 = vadd.f32 %v1997, %v2000
    %v2003 = vperm.slane %v1959, 7
    %v2004 = vmul.f32 %v141, %v2003
    %v2005 = vmul.f32 %v142, %v2003
    %v2006 = vadd.f32 %v2001, %v2004
    %v2007 = vadd.f32 %v2002, %v2005
    %v2008 = vmax.f32 %v2006, 0.0
    %v2009 = vmax.f32 %v2007, 0.0
    %s2010 = sld [smem:[#allocation10 + $0x284]]
    %v2011 = vstv %s2010
    %v2012 = vmul.f32 %v100, %v2011
    %s2013 = sld [smem:[#allocation10 + $0x304]]
    %v2014 = vstv %s2013
    %v2015 = vmul.f32 %v102, %v2014
    %v2016 = vadd.f32 %v2012, %v2015
    %s2017 = sld [smem:[#allocation10 + $0x384]]
    %v2018 = vstv %s2017
    %v2019 = vadd.f32 %v2016, %v2018
    %s2020 = sld [smem:[#allocation10 + $0x404]]
    %v2021 = vstv %s2020
    %v2022 = vmul.f32 %v103, %v2021
    %v2023 = vmul.f32 %v104, %v2021
    %s2024 = sld [smem:[#allocation10 + $0x484]]
    %v2025 = vstv %s2024
    %v2026 = vadd.f32 %v2022, %v2025
    %v2027 = vadd.f32 %v2023, %v2025
    %v2028 = vperm.slane %v2019, 0
    %v2029 = vmul.f32 %v120, %v2028
    %v2030 = vmul.f32 %v121, %v2028
    %v2031 = vadd.f32 %v2026, %v2029
    %v2032 = vadd.f32 %v2027, %v2030
    %v2033 = vperm.slane %v2019, 1
    %v2034 = vmul.f32 %v123, %v2033
    %v2035 = vmul.f32 %v124, %v2033
    %v2036 = vadd.f32 %v2031, %v2034
    %v2037 = vadd.f32 %v2032, %v2035
    %v2038 = vperm.slane %v2019, 2
    %v2039 = vmul.f32 %v126, %v2038
    %v2040 = vmul.f32 %v127, %v2038
    %v2041 = vadd.f32 %v2036, %v2039
    %v2042 = vadd.f32 %v2037, %v2040
    %v2043 = vperm.slane %v2019, 3
    %v2044 = vmul.f32 %v129, %v2043
    %v2045 = vmul.f32 %v130, %v2043
    %v2046 = vadd.f32 %v2041, %v2044
    %v2047 = vadd.f32 %v2042, %v2045
    %v2048 = vperm.slane %v2019, 4
    %v2049 = vmul.f32 %v132, %v2048
    %v2050 = vmul.f32 %v133, %v2048
    %v2051 = vadd.f32 %v2046, %v2049
    %v2052 = vadd.f32 %v2047, %v2050
    %v2053 = vperm.slane %v2019, 5
    %v2054 = vmul.f32 %v135, %v2053
    %v2055 = vmul.f32 %v136, %v2053
    %v2056 = vadd.f32 %v2051, %v2054
    %v2057 = vadd.f32 %v2052, %v2055
    %v2058 = vperm.slane %v2019, 6
    %v2059 = vmul.f32 %v138, %v2058
    %v2060 = vmul.f32 %v139, %v2058
    %v2061 = vadd.f32 %v2056, %v2059
    %v2062 = vadd.f32 %v2057, %v2060
    %v2063 = vperm.slane %v2019, 7
    %v2064 = vmul.f32 %v141, %v2063
    %v2065 = vmul.f32 %v142, %v2063
    %v2066 = vadd.f32 %v2061, %v2064
    %v2067 = vadd.f32 %v2062, %v2065
    %v2068 = vmax.f32 %v2066, 0.0
    %v2069 = vmax.f32 %v2067, 0.0
    %s2070 = sld [smem:[#allocation10 + $0x285]]
    %v2071 = vstv %s2070
    %v2072 = vmul.f32 %v100, %v2071
    %s2073 = sld [smem:[#allocation10 + $0x305]]
    %v2074 = vstv %s2073
    %v2075 = vmul.f32 %v102, %v2074
    %v2076 = vadd.f32 %v2072, %v2075
    %s2077 = sld [smem:[#allocation10 + $0x385]]
    %v2078 = vstv %s2077
    %v2079 = vadd.f32 %v2076, %v2078
    %s2080 = sld [smem:[#allocation10 + $0x405]]
    %v2081 = vstv %s2080
    %v2082 = vmul.f32 %v103, %v2081
    %v2083 = vmul.f32 %v104, %v2081
    %s2084 = sld [smem:[#allocation10 + $0x485]]
    %v2085 = vstv %s2084
    %v2086 = vadd.f32 %v2082, %v2085
    %v2087 = vadd.f32 %v2083, %v2085
    %v2088 = vperm.slane %v2079, 0
    %v2089 = vmul.f32 %v120, %v2088
    %v2090 = vmul.f32 %v121, %v2088
    %v2091 = vadd.f32 %v2086, %v2089
    %v2092 = vadd.f32 %v2087, %v2090
    %v2093 = vperm.slane %v2079, 1
    %v2094 = vmul.f32 %v123, %v2093
    %v2095 = vmul.f32 %v124, %v2093
    %v2096 = vadd.f32 %v2091, %v2094
    %v2097 = vadd.f32 %v2092, %v2095
    %v2098 = vperm.slane %v2079, 2
    %v2099 = vmul.f32 %v126, %v2098
    %v2100 = vmul.f32 %v127, %v2098
    %v2101 = vadd.f32 %v2096, %v2099
    %v2102 = vadd.f32 %v2097, %v2100
    %v2103 = vperm.slane %v2079, 3
    %v2104 = vmul.f32 %v129, %v2103
    %v2105 = vmul.f32 %v130, %v2103
    %v2106 = vadd.f32 %v2101, %v2104
    %v2107 = vadd.f32 %v2102, %v2105
    %v2108 = vperm.slane %v2079, 4
    %v2109 = vmul.f32 %v132, %v2108
    %v2110 = vmul.f32 %v133, %v2108
    %v2111 = vadd.f32 %v2106, %v2109
    %v2112 = vadd.f32 %v2107, %v2110
    %v2113 = vperm.slane %v2079, 5
    %v2114 = vmul.f32 %v135, %v2113
    %v2115 = vmul.f32 %v136, %v2113
    %v2116 = vadd.f32 %v2111, %v2114
    %v2117 = vadd.f32 %v2112, %v2115
    %v2118 = vperm.slane %v2079, 6
    %v2119 = vmul.f32 %v138, %v2118
    %v2120 = vmul.f32 %v139, %v2118
    %v2121 = vadd.f32 %v2116, %v2119
    %v2122 = vadd.f32 %v2117, %v2120
    %v2123 = vperm.slane %v2079, 7
    %v2124 = vmul.f32 %v141, %v2123
    %v2125 = vmul.f32 %v142, %v2123
    %v2126 = vadd.f32 %v2121, %v2124
    %v2127 = vadd.f32 %v2122, %v2125
    %v2128 = vmax.f32 %v2126, 0.0
    %v2129 = vmax.f32 %v2127, 0.0
    %s2130 = sld [smem:[#allocation10 + $0x286]]
    %v2131 = vstv %s2130
    %v2132 = vmul.f32 %v100, %v2131
    %s2133 = sld [smem:[#allocation10 + $0x306]]
    %v2134 = vstv %s2133
    %v2135 = vmul.f32 %v102, %v2134
    %v2136 = vadd.f32 %v2132, %v2135
    %s2137 = sld [smem:[#allocation10 + $0x386]]
    %v2138 = vstv %s2137
    %v2139 = vadd.f32 %v2136, %v2138
    %s2140 = sld [smem:[#allocation10 + $0x406]]
    %v2141 = vstv %s2140
    %v2142 = vmul.f32 %v103, %v2141
    %v2143 = vmul.f32 %v104, %v2141
    %s2144 = sld [smem:[#allocation10 + $0x486]]
    %v2145 = vstv %s2144
    %v2146 = vadd.f32 %v2142, %v2145
    %v2147 = vadd.f32 %v2143, %v2145
    %v2148 = vperm.slane %v2139, 0
    %v2149 = vmul.f32 %v120, %v2148
    %v2150 = vmul.f32 %v121, %v2148
    %v2151 = vadd.f32 %v2146, %v2149
    %v2152 = vadd.f32 %v2147, %v2150
    %v2153 = vperm.slane %v2139, 1
    %v2154 = vmul.f32 %v123, %v2153
    %v2155 = vmul.f32 %v124, %v2153
    %v2156 = vadd.f32 %v2151, %v2154
    %v2157 = vadd.f32 %v2152, %v2155
    %v2158 = vperm.slane %v2139, 2
    %v2159 = vmul.f32 %v126, %v2158
    %v2160 = vmul.f32 %v127, %v2158
    %v2161 = vadd.f32 %v2156, %v2159
    %v2162 = vadd.f32 %v2157, %v2160
    %v2163 = vperm.slane %v2139, 3
    %v2164 = vmul.f32 %v129, %v2163
    %v2165 = vmul.f32 %v130, %v2163
    %v2166 = vadd.f32 %v2161, %v2164
    %v2167 = vadd.f32 %v2162, %v2165
    %v2168 = vperm.slane %v2139, 4
    %v2169 = vmul.f32 %v132, %v2168
    %v2170 = vmul.f32 %v133, %v2168
    %v2171 = vadd.f32 %v2166, %v2169
    %v2172 = vadd.f32 %v2167, %v2170
    %v2173 = vperm.slane %v2139, 5
    %v2174 = vmul.f32 %v135, %v2173
    %v2175 = vmul.f32 %v136, %v2173
    %v2176 = vadd.f32 %v2171, %v2174
    %v2177 = vadd.f32 %v2172, %v2175
    %v2178 = vperm.slane %v2139, 6
    %v2179 = vmul.f32 %v138, %v2178
    %v2180 = vmul.f32 %v139, %v2178
    %v2181 = vadd.f32 %v2176, %v2179
    %v2182 = vadd.f32 %v2177, %v2180
    %v2183 = vperm.slane %v2139, 7
    %v2184 = vmul.f32 %v141, %v2183
    %v2185 = vmul.f32 %v142, %v2183
    %v2186 = vadd.f32 %v2181, %v2184
    %v2187 = vadd.f32 %v2182, %v2185
    %v2188 = vmax.f32 %v2186, 0.0
    %v2189 = vmax.f32 %v2187, 0.0
    %s2190 = sld [smem:[#allocation10 + $0x287]]
    %v2191 = vstv %s2190
    %v2192 = vmul.f32 %v100, %v2191
    %s2193 = sld [smem:[#allocation10 + $0x307]]
    %v2194 = vstv %s2193
    %v2195 = vmul.f32 %v102, %v2194
    %v2196 = vadd.f32 %v2192, %v2195
    %s2197 = sld [smem:[#allocation10 + $0x387]]
    %v2198 = vstv %s2197
    %v2199 = vadd.f32 %v2196, %v2198
    %s2200 = sld [smem:[#allocation10 + $0x407]]
    %v2201 = vstv %s2200
    %v2202 = vmul.f32 %v103, %v2201
    %v2203 = vmul.f32 %v104, %v2201
    %s2204 = sld [smem:[#allocation10 + $0x487]]
    %v2205 = vstv %s2204
    %v2206 = vadd.f32 %v2202, %v2205
    %v2207 = vadd.f32 %v2203, %v2205
    %v2208 = vperm.slane %v2199, 0
    %v2209 = vmul.f32 %v120, %v2208
    %v2210 = vmul.f32 %v121, %v2208
    %v2211 = vadd.f32 %v2206, %v2209
    %v2212 = vadd.f32 %v2207, %v2210
    %v2213 = vperm.slane %v2199, 1
    %v2214 = vmul.f32 %v123, %v2213
    %v2215 = vmul.f32 %v124, %v2213
    %v2216 = vadd.f32 %v2211, %v2214
    %v2217 = vadd.f32 %v2212, %v2215
    %v2218 = vperm.slane %v2199, 2
    %v2219 = vmul.f32 %v126, %v2218
    %v2220 = vmul.f32 %v127, %v2218
    %v2221 = vadd.f32 %v2216, %v2219
    %v2222 = vadd.f32 %v2217, %v2220
    %v2223 = vperm.slane %v2199, 3
    %v2224 = vmul.f32 %v129, %v2223
    %v2225 = vmul.f32 %v130, %v2223
    %v2226 = vadd.f32 %v2221, %v2224
    %v2227 = vadd.f32 %v2222, %v2225
    %v2228 = vperm.slane %v2199, 4
    %v2229 = vmul.f32 %v132, %v2228
    %v2230 = vmul.f32 %v133, %v2228
    %v2231 = vadd.f32 %v2226, %v2229
    %v2232 = vadd.f32 %v2227, %v2230
    %v2233 = vperm.slane %v2199, 5
    %v2234 = vmul.f32 %v135, %v2233
    %v2235 = vmul.f32 %v136, %v2233
    %v2236 = vadd.f32 %v2231, %v2234
    %v2237 = vadd.f32 %v2232, %v2235
    %v2238 = vperm.slane %v2199, 6
    %v2239 = vmul.f32 %v138, %v2238
    %v2240 = vmul.f32 %v139, %v2238
    %v2241 = vadd.f32 %v2236, %v2239
    %v2242 = vadd.f32 %v2237, %v2240
    %v2243 = vperm.slane %v2199, 7
    %v2244 = vmul.f32 %v141, %v2243
    %v2245 = vmul.f32 %v142, %v2243
    %v2246 = vadd.f32 %v2241, %v2244
    %v2247 = vadd.f32 %v2242, %v2245
    %v2248 = vmax.f32 %v2246, 0.0
    %v2249 = vmax.f32 %v2247, 0.0
    %s2250 = sld [smem:[#allocation10 + $0x288]]
    %v2251 = vstv %s2250
    %v2252 = vmul.f32 %v100, %v2251
    %s2253 = sld [smem:[#allocation10 + $0x308]]
    %v2254 = vstv %s2253
    %v2255 = vmul.f32 %v102, %v2254
    %v2256 = vadd.f32 %v2252, %v2255
    %s2257 = sld [smem:[#allocation10 + $0x388]]
    %v2258 = vstv %s2257
    %v2259 = vadd.f32 %v2256, %v2258
    %s2260 = sld [smem:[#allocation10 + $0x408]]
    %v2261 = vstv %s2260
    %v2262 = vmul.f32 %v103, %v2261
    %v2263 = vmul.f32 %v104, %v2261
    %s2264 = sld [smem:[#allocation10 + $0x488]]
    %v2265 = vstv %s2264
    %v2266 = vadd.f32 %v2262, %v2265
    %v2267 = vadd.f32 %v2263, %v2265
    %v2268 = vperm.slane %v2259, 0
    %v2269 = vmul.f32 %v120, %v2268
    %v2270 = vmul.f32 %v121, %v2268
    %v2271 = vadd.f32 %v2266, %v2269
    %v2272 = vadd.f32 %v2267, %v2270
    %v2273 = vperm.slane %v2259, 1
    %v2274 = vmul.f32 %v123, %v2273
    %v2275 = vmul.f32 %v124, %v2273
    %v2276 = vadd.f32 %v2271, %v2274
    %v2277 = vadd.f32 %v2272, %v2275
    %v2278 = vperm.slane %v2259, 2
    %v2279 = vmul.f32 %v126, %v2278
    %v2280 = vmul.f32 %v127, %v2278
    %v2281 = vadd.f32 %v2276, %v2279
    %v2282 = vadd.f32 %v2277, %v2280
    %v2283 = vperm.slane %v2259, 3
    %v2284 = vmul.f32 %v129, %v2283
    %v2285 = vmul.f32 %v130, %v2283
    %v2286 = vadd.f32 %v2281, %v2284
    %v2287 = vadd.f32 %v2282, %v2285
    %v2288 = vperm.slane %v2259, 4
    %v2289 = vmul.f32 %v132, %v2288
    %v2290 = vmul.f32 %v133, %v2288
    %v2291 = vadd.f32 %v2286, %v2289
    %v2292 = vadd.f32 %v2287, %v2290
    %v2293 = vperm.slane %v2259, 5
    %v2294 = vmul.f32 %v135, %v2293
    %v2295 = vmul.f32 %v136, %v2293
    %v2296 = vadd.f32 %v2291, %v2294
    %v2297 = vadd.f32 %v2292, %v2295
    %v2298 = vperm.slane %v2259, 6
    %v2299 = vmul.f32 %v138, %v2298
    %v2300 = vmul.f32 %v139, %v2298
    %v2301 = vadd.f32 %v2296, %v2299
    %v2302 = vadd.f32 %v2297, %v2300
    %v2303 = vperm.slane %v2259, 7
    %v2304 = vmul.f32 %v141, %v2303
    %v2305 = vmul.f32 %v142, %v2303
    %v2306 = vadd.f32 %v2301, %v2304
    %v2307 = vadd.f32 %v2302, %v2305
    %v2308 = vmax.f32 %v2306, 0.0
    %v2309 = vmax.f32 %v2307, 0.0
    %s2310 = sld [smem:[#allocation10 + $0x289]]
    %v2311 = vstv %s2310
    %v2312 = vmul.f32 %v100, %v2311
    %s2313 = sld [smem:[#allocation10 + $0x309]]
    %v2314 = vstv %s2313
    %v2315 = vmul.f32 %v102, %v2314
    %v2316 = vadd.f32 %v2312, %v2315
    %s2317 = sld [smem:[#allocation10 + $0x389]]
    %v2318 = vstv %s2317
    %v2319 = vadd.f32 %v2316, %v2318
    %s2320 = sld [smem:[#allocation10 + $0x409]]
    %v2321 = vstv %s2320
    %v2322 = vmul.f32 %v103, %v2321
    %v2323 = vmul.f32 %v104, %v2321
    %s2324 = sld [smem:[#allocation10 + $0x489]]
    %v2325 = vstv %s2324
    %v2326 = vadd.f32 %v2322, %v2325
    %v2327 = vadd.f32 %v2323, %v2325
    %v2328 = vperm.slane %v2319, 0
    %v2329 = vmul.f32 %v120, %v2328
    %v2330 = vmul.f32 %v121, %v2328
    %v2331 = vadd.f32 %v2326, %v2329
    %v2332 = vadd.f32 %v2327, %v2330
    %v2333 = vperm.slane %v2319, 1
    %v2334 = vmul.f32 %v123, %v2333
    %v2335 = vmul.f32 %v124, %v2333
    %v2336 = vadd.f32 %v2331, %v2334
    %v2337 = vadd.f32 %v2332, %v2335
    %v2338 = vperm.slane %v2319, 2
    %v2339 = vmul.f32 %v126, %v2338
    %v2340 = vmul.f32 %v127, %v2338
    %v2341 = vadd.f32 %v2336, %v2339
    %v2342 = vadd.f32 %v2337, %v2340
    %v2343 = vperm.slane %v2319, 3
    %v2344 = vmul.f32 %v129, %v2343
    %v2345 = vmul.f32 %v130, %v2343
    %v2346 = vadd.f32 %v2341, %v2344
    %v2347 = vadd.f32 %v2342, %v2345
    %v2348 = vperm.slane %v2319, 4
    %v2349 = vmul.f32 %v132, %v2348
    %v2350 = vmul.f32 %v133, %v2348
    %v2351 = vadd.f32 %v2346, %v2349
    %v2352 = vadd.f32 %v2347, %v2350
    %v2353 = vperm.slane %v2319, 5
    %v2354 = vmul.f32 %v135, %v2353
    %v2355 = vmul.f32 %v136, %v2353
    %v2356 = vadd.f32 %v2351, %v2354
    %v2357 = vadd.f32 %v2352, %v2355
    %v2358 = vperm.slane %v2319, 6
    %v2359 = vmul.f32 %v138, %v2358
    %v2360 = vmul.f32 %v139, %v2358
    %v2361 = vadd.f32 %v2356, %v2359
    %v2362 = vadd.f32 %v2357, %v2360
    %v2363 = vperm.slane %v2319, 7
    %v2364 = vmul.f32 %v141, %v2363
    %v2365 = vmul.f32 %v142, %v2363
    %v2366 = vadd.f32 %v2361, %v2364
    %v2367 = vadd.f32 %v2362, %v2365
    %v2368 = vmax.f32 %v2366, 0.0
    %v2369 = vmax.f32 %v2367, 0.0
    %s2370 = sld [smem:[#allocation11]]
    %v2371 = vstv %s2370
    %v2372 = vmul.f32 %v311, %v2371
    %s2373 = sld [smem:[#allocation11 + $0x580]]
    %v2374 = vstv %s2373
    %v2375 = vmul.f32 %v1828, %v2374
    %v2376 = vmul.f32 %v1829, %v2374
    %s2377 = sld [smem:[#allocation11 + $0x80]]
    %v2378 = vstv %s2377
    %v2379 = vmul.f32 %v473, %v2378
    %v2380 = vadd.f32 %v2372, %v2379
    %s2381 = sld [smem:[#allocation11 + $0x600]]
    %v2382 = vstv %s2381
    %v2383 = vmul.f32 %v1888, %v2382
    %v2384 = vmul.f32 %v1889, %v2382
    %v2385 = vadd.f32 %v2375, %v2383
    %v2386 = vadd.f32 %v2376, %v2384
    %s2387 = sld [smem:[#allocation11 + $0x100]]
    %v2388 = vstv %s2387
    %v2389 = vmul.f32 %v635, %v2388
    %v2390 = vadd.f32 %v2380, %v2389
    %s2391 = sld [smem:[#allocation11 + $0x680]]
    %v2392 = vstv %s2391
    %v2393 = vmul.f32 %v1948, %v2392
    %v2394 = vmul.f32 %v1949, %v2392
    %v2395 = vadd.f32 %v2385, %v2393
    %v2396 = vadd.f32 %v2386, %v2394
    %s2397 = sld [smem:[#allocation11 + $0x180]]
    %v2398 = vstv %s2397
    %v2399 = vmul.f32 %v797, %v2398
    %v2400 = vadd.f32 %v2390, %v2399
    %s2401 = sld [smem:[#allocation11 + $0x700]]
    %v2402 = vstv %s2401
    %v2403 = vmul.f32 %v2008, %v2402
    %v2404 = vmul.f32 %v2009, %v2402
    %v2405 = vadd.f32 %v2395, %v2403
    %v2406 = vadd.f32 %v2396, %v2404
    %s2407 = sld [smem:[#allocation11 + $0x200]]
    %v2408 = vstv %s2407
    %v2409 = vmul.f32 %v959, %v2408
    %v2410 = vadd.f32 %v2400, %v2409
    %s2411 = sld [smem:[#allocation11 + $0x780]]
    %v2412 = vstv %s2411
    %v2413 = vmul.f32 %v2068, %v2412
    %v2414 = vmul.f32 %v2069, %v2412
    %v2415 = vadd.f32 %v2405, %v2413
    %v2416 = vadd.f32 %v2406, %v2414
    %s2417 = sld [smem:[#allocation11 + $0x280]]
    %v2418 = vstv %s2417
    %v2419 = vmul.f32 %v1121, %v2418
    %v2420 = vadd.f32 %v2410, %v2419
    %s2421 = sld [smem:[#allocation11 + $0x800]]
    %v2422 = vstv %s2421
    %v2423 = vmul.f32 %v2128, %v2422
    %v2424 = vmul.f32 %v2129, %v2422
    %v2425 = vadd.f32 %v2415, %v2423
    %v2426 = vadd.f32 %v2416, %v2424
    %s2427 = sld [smem:[#allocation11 + $0x300]]
    %v2428 = vstv %s2427
    %v2429 = vmul.f32 %v1283, %v2428
    %v2430 = vadd.f32 %v2420, %v2429
    %s2431 = sld [smem:[#allocation11 + $0x880]]
    %v2432 = vstv %s2431
    %v2433 = vmul.f32 %v2188, %v2432
    %v2434 = vmul.f32 %v2189, %v2432
    %v2435 = vadd.f32 %v2425, %v2433
    %v2436 = vadd.f32 %v2426, %v2434
    %s2437 = sld [smem:[#allocation11 + $0x380]]
    %v2438 = vstv %s2437
    %v2439 = vmul.f32 %v1445, %v2438
    %v2440 = vadd.f32 %v2430, %v2439
    %s2441 = sld [smem:[#allocation11 + $0x900]]
    %v2442 = vstv %s2441
    %v2443 = vmul.f32 %v2248, %v2442
    %v2444 = vmul.f32 %v2249, %v2442
    %v2445 = vadd.f32 %v2435, %v2443
    %v2446 = vadd.f32 %v2436, %v2444
    %s2447 = sld [smem:[#allocation11 + $0x400]]
    %v2448 = vstv %s2447
    %v2449 = vmul.f32 %v1607, %v2448
    %v2450 = vadd.f32 %v2440, %v2449
    %s2451 = sld [smem:[#allocation11 + $0x980]]
    %v2452 = vstv %s2451
    %v2453 = vmul.f32 %v2308, %v2452
    %v2454 = vmul.f32 %v2309, %v2452
    %v2455 = vadd.f32 %v2445, %v2453
    %v2456 = vadd.f32 %v2446, %v2454
    %s2457 = sld [smem:[#allocation11 + $0x480]]
    %v2458 = vstv %s2457
    %v2459 = vmul.f32 %v1769, %v2458
    %v2460 = vadd.f32 %v2450, %v2459
    %s2461 = sld [smem:[#allocation11 + $0xa00]]
    %v2462 = vstv %s2461
    %v2463 = vmul.f32 %v2368, %v2462
    %v2464 = vmul.f32 %v2369, %v2462
    %v2465 = vadd.f32 %v2455, %v2463
    %v2466 = vadd.f32 %v2456, %v2464
    %s2467 = sld [smem:[#allocation11 + $0x500]]
    %v2468 = vstv %s2467
    %v2469 = vadd.f32 %v2460, %v2468
    %s2470 = sld [smem:[#allocation11 + $0xa80]]
    %v2471 = vstv %s2470
    %v2472 = vadd.f32 %v2465, %v2471
    %v2473 = vadd.f32 %v2466, %v2471
    %v2474 = vmul.f32 %v105, %v2469
    %v2475 = vrot.slane %v2474, 4
    %v2476 = vadd.f32 %v2474, %v2475
    %v2477 = vrot.slane %v2476, 2
    %v2478 = vadd.f32 %v2476, %v2477
    %v2479 = vrot.slane %v2478, 1
    %v2480 = vadd.f32 %v2478, %v2479
    %v2481 = vmul.f32 %v120, %v2472
    %v2482 = vmul.f32 %v121, %v2473
    %v2483 = vadd.f32 %v2481, %v2482
    %v2484 = vrot.slane %v2483, 4
    %v2485 = vadd.f32 %v2483, %v2484
    %v2486 = vrot.slane %v2485, 2
    %v2487 = vadd.f32 %v2485, %v2486
    %v2488 = vrot.slane %v2487, 1
    %v2489 = vadd.f32 %v2487, %v2488
    %v2490 = vadd.f32 %v2480, %v2489
    %v2491 = vmul.f32 %v107, %v2469
    %v2492 = vrot.slane %v2491, 4
    %v2493 = vadd.f32 %v2491, %v2492
    %v2494 = vrot.slane %v2493, 2
    %v2495 = vadd.f32 %v2493, %v2494
    %v2496 = vrot.slane %v2495, 1
    %v2497 = vadd.f32 %v2495, %v2496
    %v2498 = vmul.f32 %v123, %v2472
    %v2499 = vmul.f32 %v124, %v2473
    %v2500 = vadd.f32 %v2498, %v2499
    %v2501 = vrot.slane %v2500, 4
    %v2502 = vadd.f32 %v2500, %v2501
    %v2503 = vrot.slane %v2502, 2
    %v2504 = vadd.f32 %v2502, %v2503
    %v2505 = vrot.slane %v2504, 1
    %v2506 = vadd.f32 %v2504, %v2505
    %v2507 = vadd.f32 %v2497, %v2506
    %v2508 = vmul.f32 %v109, %v2469
    %v2509 = vrot.slane %v2508, 4
    %v2510 = vadd.f32 %v2508, %v2509
    %v2511 = vrot.slane %v2510, 2
    %v2512 = vadd.f32 %v2510, %v2511
    %v2513 = vrot.slane %v2512, 1
    %v2514 = vadd.f32 %v2512, %v2513
    %v2515 = vmul.f32 %v126, %v2472
    %v2516 = vmul.f32 %v127, %v2473
    %v2517 = vadd.f32 %v2515, %v2516
    %v2518 = vrot.slane %v2517, 4
    %v2519 = vadd.f32 %v2517, %v2518
    %v2520 = vrot.slane %v2519, 2
    %v2521 = vadd.f32 %v2519, %v2520
    %v2522 = vrot.slane %v2521, 1
    %v2523 = vadd.f32 %v2521, %v2522
    %v2524 = vadd.f32 %v2514, %v2523
    %v2525 = vmul.f32 %v111, %v2469
    %v2526 = vrot.slane %v2525, 4
    %v2527 = vadd.f32 %v2525, %v2526
    %v2528 = vrot.slane %v2527, 2
    %v2529 = vadd.f32 %v2527, %v2528
    %v2530 = vrot.slane %v2529, 1
    %v2531 = vadd.f32 %v2529, %v2530
    %v2532 = vmul.f32 %v129, %v2472
    %v2533 = vmul.f32 %v130, %v2473
    %v2534 = vadd.f32 %v2532, %v2533
    %v2535 = vrot.slane %v2534, 4
    %v2536 = vadd.f32 %v2534, %v2535
    %v2537 = vrot.slane %v2536, 2
    %v2538 = vadd.f32 %v2536, %v2537
    %v2539 = vrot.slane %v2538, 1
    %v2540 = vadd.f32 %v2538, %v2539
    %v2541 = vadd.f32 %v2531, %v2540
    %v2542 = vmul.f32 %v113, %v2469
    %v2543 = vrot.slane %v2542, 4
    %v2544 = vadd.f32 %v2542, %v2543
    %v2545 = vrot.slane %v2544, 2
    %v2546 = vadd.f32 %v2544, %v2545
    %v2547 = vrot.slane %v2546, 1
    %v2548 = vadd.f32 %v2546, %v2547
    %v2549 = vmul.f32 %v132, %v2472
    %v2550 = vmul.f32 %v133, %v2473
    %v2551 = vadd.f32 %v2549, %v2550
    %v2552 = vrot.slane %v2551, 4
    %v2553 = vadd.f32 %v2551, %v2552
    %v2554 = vrot.slane %v2553, 2
    %v2555 = vadd.f32 %v2553, %v2554
    %v2556 = vrot.slane %v2555, 1
    %v2557 = vadd.f32 %v2555, %v2556
    %v2558 = vadd.f32 %v2548, %v2557
    %v2559 = vmul.f32 %v115, %v2469
    %v2560 = vrot.slane %v2559, 4
    %v2561 = vadd.f32 %v2559, %v2560
    %v2562 = vrot.slane %v2561, 2
    %v2563 = vadd.f32 %v2561, %v2562
    %v2564 = vrot.slane %v2563, 1
    %v2565 = vadd.f32 %v2563, %v2564
    %v2566 = vmul.f32 %v135, %v2472
    %v2567 = vmul.f32 %v136, %v2473
    %v2568 = vadd.f32 %v2566, %v2567
    %v2569 = vrot.slane %v2568, 4
    %v2570 = vadd.f32 %v2568, %v2569
    %v2571 = vrot.slane %v2570, 2
    %v2572 = vadd.f32 %v2570, %v2571
    %v2573 = vrot.slane %v2572, 1
    %v2574 = vadd.f32 %v2572, %v2573
    %v2575 = vadd.f32 %v2565, %v2574
    %v2576 = vmul.f32 %v117, %v2469
    %v2577 = vrot.slane %v2576, 4
    %v2578 = vadd.f32 %v2576, %v2577
    %v2579 = vrot.slane %v2578, 2
    %v2580 = vadd.f32 %v2578, %v2579
    %v2581 = vrot.slane %v2580, 1
    %v2582 = vadd.f32 %v2580, %v2581
    %v2583 = vmul.f32 %v138, %v2472
    %v2584 = vmul.f32 %v139, %v2473
    %v2585 = vadd.f32 %v2583, %v2584
    %v2586 = vrot.slane %v2585, 4
    %v2587 = vadd.f32 %v2585, %v2586
    %v2588 = vrot.slane %v2587, 2
    %v2589 = vadd.f32 %v2587, %v2588
    %v2590 = vrot.slane %v2589, 1
    %v2591 = vadd.f32 %v2589, %v2590
    %v2592 = vadd.f32 %v2582, %v2591
    %v2593 = vmul.f32 %v119, %v2469
    %v2594 = vrot.slane %v2593, 4
    %v2595 = vadd.f32 %v2593, %v2594
    %v2596 = vrot.slane %v2595, 2
    %v2597 = vadd.f32 %v2595, %v2596
    %v2598 = vrot.slane %v2597, 1
    %v2599 = vadd.f32 %v2597, %v2598
    %v2600 = vmul.f32 %v141, %v2472
    %v2601 = vmul.f32 %v142, %v2473
    %v2602 = vadd.f32 %v2600, %v2601
    %v2603 = vrot.slane %v2602, 4
    %v2604 = vadd.f32 %v2602, %v2603
    %v2605 = vrot.slane %v2604, 2
    %v2606 = vadd.f32 %v2604, %v2605
    %v2607 = vrot.slane %v2606, 1
    %v2608 = vadd.f32 %v2606, %v2607
    %v2609 = vadd.f32 %v2599, %v2608
    %v2610 = vsel %vm297, %v2490, %v2507
    %v2611 = vsel %vm299, %v2610, %v2524
    %v2612 = vsel %vm301, %v2611, %v2541
    %v2613 = vsel %vm303, %v2612, %v2558
    %v2614 = vsel %vm305, %v2613, %v2575
    %v2615 = vsel %vm307, %v2614, %v2592
    %v2616 = vsel %vm309, %v2615, %v2609
    %2617 = vst [vmem:[#allocation12] sm:$0xff] %v2616
    %s2618 = sld [smem:[#allocation11 + $0x1]]
    %v2619 = vstv %s2618
    %v2620 = vmul.f32 %v311, %v2619
    %s2621 = sld [smem:[#allocation11 + $0x581]]
    %v2622 = vstv %s2621
    %v2623 = vmul.f32 %v1828, %v2622
    %v2624 = vmul.f32 %v1829, %v2622
    %s2625 = sld [smem:[#allocation11 + $0x81]]
    %v2626 = vstv %s2625
    %v2627 = vmul.f32 %v473, %v2626
    %v2628 = vadd.f32 %v2620, %v2627
    %s2629 = sld [smem:[#allocation11 + $0x601]]
    %v2630 = vstv %s2629
    %v2631 = vmul.f32 %v1888, %v2630
    %v2632 = vmul.f32 %v1889, %v2630
    %v2633 = vadd.f32 %v2623, %v2631
    %v2634 = vadd.f32 %v2624, %v2632
    %s2635 = sld [smem:[#allocation11 + $0x101]]
    %v2636 = vstv %s2635
    %v2637 = vmul.f32 %v635, %v2636
    %v2638 = vadd.f32 %v2628, %v2637
    %s2639 = sld [smem:[#allocation11 + $0x681]]
    %v2640 = vstv %s2639
    %v2641 = vmul.f32 %v1948, %v2640
    %v2642 = vmul.f32 %v1949, %v2640
    %v2643 = vadd.f32 %v2633, %v2641
    %v2644 = vadd.f32 %v2634, %v2642
    %s2645 = sld [smem:[#allocation11 + $0x181]]
    %v2646 = vstv %s2645
    %v2647 = vmul.f32 %v797, %v2646
    %v2648 = vadd.f32 %v2638, %v2647
    %s2649 = sld [smem:[#allocation11 + $0x701]]
    %v2650 = vstv %s2649
    %v2651 = vmul.f32 %v2008, %v2650
    %v2652 = vmul.f32 %v2009, %v2650
    %v2653 = vadd.f32 %v2643, %v2651
    %v2654 = vadd.f32 %v2644, %v2652
    %s2655 = sld [smem:[#allocation11 + $0x201]]
    %v2656 = vstv %s2655
    %v2657 = vmul.f32 %v959, %v2656
    %v2658 = vadd.f32 %v2648, %v2657
    %s2659 = sld [smem:[#allocation11 + $0x781]]
    %v2660 = vstv %s2659
    %v2661 = vmul.f32 %v2068, %v2660
    %v2662 = vmul.f32 %v2069, %v2660
    %v2663 = vadd.f32 %v2653, %v2661
    %v2664 = vadd.f32 %v2654, %v2662
    %s2665 = sld [smem:[#allocation11 + $0x281]]
    %v2666 = vstv %s2665
    %v2667 = vmul.f32 %v1121, %v2666
    %v2668 = vadd.f32 %v2658, %v2667
    %s2669 = sld [smem:[#allocation11 + $0x801]]
    %v2670 = vstv %s2669
    %v2671 = vmul.f32 %v2128, %v2670
    %v2672 = vmul.f32 %v2129, %v2670
    %v2673 = vadd.f32 %v2663, %v2671
    %v2674 = vadd.f32 %v2664, %v2672
    %s2675 = sld [smem:[#allocation11 + $0x301]]
    %v2676 = vstv %s2675
    %v2677 = vmul.f32 %v1283, %v2676
    %v2678 = vadd.f32 %v2668, %v2677
    %s2679 = sld [smem:[#allocation11 + $0x881]]
    %v2680 = vstv %s2679
    %v2681 = vmul.f32 %v2188, %v2680
    %v2682 = vmul.f32 %v2189, %v2680
    %v2683 = vadd.f32 %v2673, %v2681
    %v2684 = vadd.f32 %v2674, %v2682
    %s2685 = sld [smem:[#allocation11 + $0x381]]
    %v2686 = vstv %s2685
    %v2687 = vmul.f32 %v1445, %v2686
    %v2688 = vadd.f32 %v2678, %v2687
    %s2689 = sld [smem:[#allocation11 + $0x901]]
    %v2690 = vstv %s2689
    %v2691 = vmul.f32 %v2248, %v2690
    %v2692 = vmul.f32 %v2249, %v2690
    %v2693 = vadd.f32 %v2683, %v2691
    %v2694 = vadd.f32 %v2684, %v2692
    %s2695 = sld [smem:[#allocation11 + $0x401]]
    %v2696 = vstv %s2695
    %v2697 = vmul.f32 %v1607, %v2696
    %v2698 = vadd.f32 %v2688, %v2697
    %s2699 = sld [smem:[#allocation11 + $0x981]]
    %v2700 = vstv %s2699
    %v2701 = vmul.f32 %v2308, %v2700
    %v2702 = vmul.f32 %v2309, %v2700
    %v2703 = vadd.f32 %v2693, %v2701
    %v2704 = vadd.f32 %v2694, %v2702
    %s2705 = sld [smem:[#allocation11 + $0x481]]
    %v2706 = vstv %s2705
    %v2707 = vmul.f32 %v1769, %v2706
    %v2708 = vadd.f32 %v2698, %v2707
    %s2709 = sld [smem:[#allocation11 + $0xa01]]
    %v2710 = vstv %s2709
    %v2711 = vmul.f32 %v2368, %v2710
    %v2712 = vmul.f32 %v2369, %v2710
    %v2713 = vadd.f32 %v2703, %v2711
    %v2714 = vadd.f32 %v2704, %v2712
    %s2715 = sld [smem:[#allocation11 + $0x501]]
    %v2716 = vstv %s2715
    %v2717 = vadd.f32 %v2708, %v2716
    %s2718 = sld [smem:[#allocation11 + $0xa81]]
    %v2719 = vstv %s2718
    %v2720 = vadd.f32 %v2713, %v2719
    %v2721 = vadd.f32 %v2714, %v2719
    %v2722 = vmul.f32 %v105, %v2717
    %v2723 = vrot.slane %v2722, 4
    %v2724 = vadd.f32 %v2722, %v2723
    %v2725 = vrot.slane %v2724, 2
    %v2726 = vadd.f32 %v2724, %v2725
    %v2727 = vrot.slane %v2726, 1
    %v2728 = vadd.f32 %v2726, %v2727
    %v2729 = vmul.f32 %v120, %v2720
    %v2730 = vmul.f32 %v121, %v2721
    %v2731 = vadd.f32 %v2729, %v2730
    %v2732 = vrot.slane %v2731, 4
    %v2733 = vadd.f32 %v2731, %v2732
    %v2734 = vrot.slane %v2733, 2
    %v2735 = vadd.f32 %v2733, %v2734
    %v2736 = vrot.slane %v2735, 1
    %v2737 = vadd.f32 %v2735, %v2736
    %v2738 = vadd.f32 %v2728, %v2737
    %v2739 = vmul.f32 %v107, %v2717
    %v2740 = vrot.slane %v2739, 4
    %v2741 = vadd.f32 %v2739, %v2740
    %v2742 = vrot.slane %v2741, 2
    %v2743 = vadd.f32 %v2741, %v2742
    %v2744 = vrot.slane %v2743, 1
    %v2745 = vadd.f32 %v2743, %v2744
    %v2746 = vmul.f32 %v123, %v2720
    %v2747 = vmul.f32 %v124, %v2721
    %v2748 = vadd.f32 %v2746, %v2747
    %v2749 = vrot.slane %v2748, 4
    %v2750 = vadd.f32 %v2748, %v2749
    %v2751 = vrot.slane %v2750, 2
    %v2752 = vadd.f32 %v2750, %v2751
    %v2753 = vrot.slane %v2752, 1
    %v2754 = vadd.f32 %v2752, %v2753
    %v2755 = vadd.f32 %v2745, %v2754
    %v2756 = vmul.f32 %v109, %v2717
    %v2757 = vrot.slane %v2756, 4
    %v2758 = vadd.f32 %v2756, %v2757
    %v2759 = vrot.slane %v2758, 2
    %v2760 = vadd.f32 %v2758, %v2759
    %v2761 = vrot.slane %v2760, 1
    %v2762 = vadd.f32 %v2760, %v2761
    %v2763 = vmul.f32 %v126, %v2720
    %v2764 = vmul.f32 %v127, %v2721
    %v2765 = vadd.f32 %v2763, %v2764
    %v2766 = vrot.slane %v2765, 4
    %v2767 = vadd.f32 %v2765, %v2766
    %v2768 = vrot.slane %v2767, 2
    %v2769 = vadd.f32 %v2767, %v2768
    %v2770 = vrot.slane %v2769, 1
    %v2771 = vadd.f32 %v2769, %v2770
    %v2772 = vadd.f32 %v2762, %v2771
    %v2773 = vmul.f32 %v111, %v2717
    %v2774 = vrot.slane %v2773, 4
    %v2775 = vadd.f32 %v2773, %v2774
    %v2776 = vrot.slane %v2775, 2
    %v2777 = vadd.f32 %v2775, %v2776
    %v2778 = vrot.slane %v2777, 1
    %v2779 = vadd.f32 %v2777, %v2778
    %v2780 = vmul.f32 %v129, %v2720
    %v2781 = vmul.f32 %v130, %v2721
    %v2782 = vadd.f32 %v2780, %v2781
    %v2783 = vrot.slane %v2782, 4
    %v2784 = vadd.f32 %v2782, %v2783
    %v2785 = vrot.slane %v2784, 2
    %v2786 = vadd.f32 %v2784, %v2785
    %v2787 = vrot.slane %v2786, 1
    %v2788 = vadd.f32 %v2786, %v2787
    %v2789 = vadd.f32 %v2779, %v2788
    %v2790 = vmul.f32 %v113, %v2717
    %v2791 = vrot.slane %v2790, 4
    %v2792 = vadd.f32 %v2790, %v2791
    %v2793 = vrot.slane %v2792, 2
    %v2794 = vadd.f32 %v2792, %v2793
    %v2795 = vrot.slane %v2794, 1
    %v2796 = vadd.f32 %v2794, %v2795
    %v2797 = vmul.f32 %v132, %v2720
    %v2798 = vmul.f32 %v133, %v2721
    %v2799 = vadd.f32 %v2797, %v2798
    %v2800 = vrot.slane %v2799, 4
    %v2801 = vadd.f32 %v2799, %v2800
    %v2802 = vrot.slane %v2801, 2
    %v2803 = vadd.f32 %v2801, %v2802
    %v2804 = vrot.slane %v2803, 1
    %v2805 = vadd.f32 %v2803, %v2804
    %v2806 = vadd.f32 %v2796, %v2805
    %v2807 = vmul.f32 %v115, %v2717
    %v2808 = vrot.slane %v2807, 4
    %v2809 = vadd.f32 %v2807, %v2808
    %v2810 = vrot.slane %v2809, 2
    %v2811 = vadd.f32 %v2809, %v2810
    %v2812 = vrot.slane %v2811, 1
    %v2813 = vadd.f32 %v2811, %v2812
    %v2814 = vmul.f32 %v135, %v2720
    %v2815 = vmul.f32 %v136, %v2721
    %v2816 = vadd.f32 %v2814, %v2815
    %v2817 = vrot.slane %v2816, 4
    %v2818 = vadd.f32 %v2816, %v2817
    %v2819 = vrot.slane %v2818, 2
    %v2820 = vadd.f32 %v2818, %v2819
    %v2821 = vrot.slane %v2820, 1
    %v2822 = vadd.f32 %v2820, %v2821
    %v2823 = vadd.f32 %v2813, %v2822
    %v2824 = vmul.f32 %v117, %v2717
    %v2825 = vrot.slane %v2824, 4
    %v2826 = vadd.f32 %v2824, %v2825
    %v2827 = vrot.slane %v2826, 2
    %v2828 = vadd.f32 %v2826, %v2827
    %v2829 = vrot.slane %v2828, 1
    %v2830 = vadd.f32 %v2828, %v2829
    %v2831 = vmul.f32 %v138, %v2720
    %v2832 = vmul.f32 %v139, %v2721
    %v2833 = vadd.f32 %v2831, %v2832
    %v2834 = vrot.slane %v2833, 4
    %v2835 = vadd.f32 %v2833, %v2834
    %v2836 = vrot.slane %v2835, 2
    %v2837 = vadd.f32 %v2835, %v2836
    %v2838 = vrot.slane %v2837, 1
    %v2839 = vadd.f32 %v2837, %v2838
    %v2840 = vadd.f32 %v2830, %v2839
    %v2841 = vmul.f32 %v119, %v2717
    %v2842 = vrot.slane %v2841, 4
    %v2843 = vadd.f32 %v2841, %v2842
    %v2844 = vrot.slane %v2843, 2
    %v2845 = vadd.f32 %v2843, %v2844
    %v2846 = vrot.slane %v2845, 1
    %v2847 = vadd.f32 %v2845, %v2846
    %v2848 = vmul.f32 %v141, %v2720
    %v2849 = vmul.f32 %v142, %v2721
    %v2850 = vadd.f32 %v2848, %v2849
    %v2851 = vrot.slane %v2850, 4
    %v2852 = vadd.f32 %v2850, %v2851
    %v2853 = vrot.slane %v2852, 2
    %v2854 = vadd.f32 %v2852, %v2853
    %v2855 = vrot.slane %v2854, 1
    %v2856 = vadd.f32 %v2854, %v2855
    %v2857 = vadd.f32 %v2847, %v2856
    %v2858 = vsel %vm297, %v2738, %v2755
    %v2859 = vsel %vm299, %v2858, %v2772
    %v2860 = vsel %vm301, %v2859, %v2789
    %v2861 = vsel %vm303, %v2860, %v2806
    %v2862 = vsel %vm305, %v2861, %v2823
    %v2863 = vsel %vm307, %v2862, %v2840
    %v2864 = vsel %vm309, %v2863, %v2857
    %s2865 = scalar_lea.vmem [#allocation12], 8
    %2866 = vst [vmem:[%s2865] sm:$0xff] %v2864
    // Predicated region
    $region46: #{tpu_custom_call.1} parent=1 // pred_check
      _
    $region47: #{tpu_custom_call.1} parent=1 // pred_check_branch
      %2868 = sbr.rel (0) target = $region49
    $region48: #{tpu_custom_call.1} parent=1 // pred_region
      %2870 = vsyncadd [#allocation4], 0
      %s2871 = sshll.u32 [#allocation12], 4
      %s2872 = int_to_ptr.vmem [resolvable:$true] %s2871
      %s2873 = sshll.u32 %s6, 4
      %s2874 = int_to_ptr.hbm [resolvable:$true] %s2873
      %2879 = dma.vmem_to_hbm [thread:$0]  %s2872, 256, %s2874, [#allocation4], 128, 128, 8
    $region49: #{tpu_custom_call.1} parent=1 // pred_fallthru
      _
    // Predicated region
    $region50: #{tpu_custom_call.1} parent=1 // pred_check
      _
    $region51: #{tpu_custom_call.1} parent=1 // pred_check_branch
      %2881 = sbr.rel (0) target = $region53
    $region52: #{tpu_custom_call.1} parent=1 // pred_region
      %2883 = dma.done [#allocation4], 256
    $region53: #{tpu_custom_call.1} parent=1 // pred_fallthru
      _
    %2884 = vsyncpa [#allocation3], 1
    %2885 = vsyncpa [#allocation8], 1
    %2886 = vsyncpa [#allocation4], 1
    %2887 = vsyncpa [#allocation5], 1
    %2888 = vsyncpa [#allocation6], 1

</llo_original>
